<compile_context>
chip_gen: v7x
topology: tpu7x:2x2x1
jax: 0.10.0
libtpu: 0.0.40
codegen_flags: <defaults>
</compile_context>

<pallas_src>
import math
import functools

import jax
import jax.numpy as jnp
from jax.experimental import pallas as pl
from jax.experimental.pallas import tpu as pltpu

EPS = 1e-6                          # LayerNorm eps (added to std, like torch ref)
VMEM_LIMIT = 64 * 1024 * 1024       # raise the 16/32 MiB scoped defaults


# ----------------------------------------------------------------------------
# In-kernel helpers (f32 elementwise; bf16 only at MXU operand boundaries)
# ----------------------------------------------------------------------------
def _layernorm(x, a, b):
    # torch.std(dim=-1) is unbiased (divides by D-1); eps is added to std.
    d = x.shape[-1]
    mean = jnp.mean(x, axis=-1, keepdims=True)
    diff = x - mean
    var = jnp.sum(diff * diff, axis=-1, keepdims=True) * (1.0 / (d - 1))
    std = jnp.sqrt(var)
    return a * diff / (std + EPS) + b          # exact divide (off hot path)


def _attn_heads_into_wo(q, k, v, masked, wo_bf16, n_heads):
    # q: (tq, D) f32 (already scaled by 1/sqrt(dk)); k, v: (Sk, D) f32;
    # masked: bool, broadcastable to (tq, Sk); wo_bf16: (D, D) bf16.
    # Returns (tq, D) f32 == concat_h(softmax(q_h k_h^T) v_h) @ Wo.
    tq, D = q.shape
    dk = D // n_heads
    q_b = q.astype(jnp.bfloat16)
    k_b = k.astype(jnp.bfloat16)
    v_b = v.astype(jnp.bfloat16)
    neg = jnp.float32(-1e9)
    y = jnp.zeros((tq, D), jnp.float32)
    for h in range(n_heads):
        sl = slice(h * dk, (h + 1) * dk)
        s = jax.lax.dot_general(q_b[:, sl], k_b[:, sl], (((1,), (1,)), ((), ())),
                                preferred_element_type=jnp.float32)
        s = jnp.where(masked, neg, s)
        s = s - jnp.max(s, axis=-1, keepdims=True)
        p = jnp.exp(s)
        p = p * pl.reciprocal(jnp.sum(p, axis=-1, keepdims=True), approx=True)
        head = jnp.dot(p.astype(jnp.bfloat16), v_b[:, sl],
                       preferred_element_type=jnp.float32)
        # Fuse the head output straight into the Wo projection (row slice of
        # Wo is sublane-sliced -> cheap); no lane-axis concat needed.
        y = y + jnp.dot(head.astype(jnp.bfloat16), wo_bf16[sl, :],
                        preferred_element_type=jnp.float32)
    return y


# ----------------------------------------------------------------------------
# Fused sublayer kernels
# ----------------------------------------------------------------------------
def _self_attn_kernel(*refs, n_heads, tiled_q):
    # LN -> fused QKV matmul -> per-head softmax attention (fused into Wo)
    # -> +bias +residual.  Query/residual is a (tq, D) tile; K/V come from the
    # full sequence (same array, second input only when tiled).
    if tiled_q:
        (xq_ref, xkv_ref, mask_ref, ln_a_ref, ln_b_ref,
         wqkv_ref, bqkv_ref, wo_ref, bo_ref, o_ref) = refs
    else:
        (xq_ref, mask_ref, ln_a_ref, ln_b_ref,
         wqkv_ref, bqkv_ref, wo_ref, bo_ref, o_ref) = refs

    xq = xq_ref[...].astype(jnp.float32)                    # (tq, D) residual
    D = xq.shape[-1]
    scale = 1.0 / math.sqrt(D // n_heads)
    ln_a = ln_a_ref[...]
    ln_b = ln_b_ref[...]
    xq_n = _layernorm(xq, ln_a, ln_b).astype(jnp.bfloat16)

    wqkv = wqkv_ref[...]                                     # (D, 3D) bf16
    bqkv = bqkv_ref[...]                                     # (1, 3D) f32
    if tiled_q:
        xkv_n = _layernorm(xkv_ref[...].astype(jnp.float32),
                           ln_a, ln_b).astype(jnp.bfloat16)
        q = jnp.dot(xq_n, wqkv[:, :D],
                    preferred_element_type=jnp.float32) + bqkv[:, :D]
        kv = jnp.dot(xkv_n, wqkv[:, D:],
                     preferred_element_type=jnp.float32) + bqkv[:, D:]
    else:
        qkv = jnp.dot(xq_n, wqkv, preferred_element_type=jnp.float32) + bqkv
        q, kv = qkv[:, :D], qkv[:, D:]
    q = q * scale                                            # scale once, not per head

    masked = mask_ref[...].astype(jnp.int32) == 0            # (tq, Sk) int8 mask
    y = _attn_heads_into_wo(q, kv[:, :D], kv[:, D:], masked, wo_ref[...], n_heads)
    o_ref[...] = (y + bo_ref[...] + xq).astype(o_ref.dtype)


def _cross_attn_kernel(xq_ref, mem_ref, mask_ref, ln_a_ref, ln_b_ref,
                       wqkv_ref, bqkv_ref, wo_ref, bo_ref, o_ref, *, n_heads):
    # Query side gets the pre-LN; encoder memory (K/V source) does not.
    xq = xq_ref[...].astype(jnp.float32)                     # (tq, D)
    D = xq.shape[-1]
    scale = 1.0 / math.sqrt(D // n_heads)
    xn = _layernorm(xq, ln_a_ref[...], ln_b_ref[...]).astype(jnp.bfloat16)

    wqkv = wqkv_ref[...]                                     # (D, 3D) = [Wq | Wk | Wv]
    bqkv = bqkv_ref[...]                                     # (1, 3D)
    q = (jnp.dot(xn, wqkv[:, :D],
                 preferred_element_type=jnp.float32) + bqkv[:, :D]) * scale
    mem_b = mem_ref[...].astype(jnp.bfloat16)                # (Sk, D)
    kv = jnp.dot(mem_b, wqkv[:, D:],
                 preferred_element_type=jnp.float32) + bqkv[:, D:]

    masked = mask_ref[...].astype(jnp.int32) == 0            # (1, Sk) -> broadcast
    y = _attn_heads_into_wo(q, kv[:, :D], kv[:, D:], masked, wo_ref[...], n_heads)
    o_ref[...] = (y + bo_ref[...] + xq).astype(o_ref.dtype)


def _ffn_kernel(x_ref, ln_a_ref, ln_b_ref, w1_ref, b1_ref, w2_ref, b2_ref,
                *rest, apply_final_ln):
    # LN -> W1 + ReLU -> W2 -> +residual [-> final LN]; hidden (tm, d_ff) and
    # all weights stay in VMEM.
    if apply_final_ln:
        fa_ref, fb_ref, o_ref = rest
    else:
        (o_ref,) = rest
    x = x_ref[...].astype(jnp.float32)
    xn = _layernorm(x, ln_a_ref[...], ln_b_ref[...]).astype(jnp.bfloat16)
    h = jnp.dot(xn, w1_ref[...], preferred_element_type=jnp.float32) + b1_ref[...]
    h = jnp.maximum(h, 0.0).astype(jnp.bfloat16)
    y = jnp.dot(h, w2_ref[...], preferred_element_type=jnp.float32) + b2_ref[...] + x
    if apply_final_ln:
        y = _layernorm(y, fa_ref[...], fb_ref[...])
    o_ref[...] = y.astype(o_ref.dtype)


# ----------------------------------------------------------------------------
# pallas_call wrappers
# ----------------------------------------------------------------------------
def _const2(shape):
    return pl.BlockSpec(shape, lambda b, qi: (0, 0))         # grid-invariant, 2-D grid


def _const1(shape):
    return pl.BlockSpec(shape, lambda i: (0, 0))              # grid-invariant, 1-D grid


def _pick_tile(m, target):
    # Full extent if it already fits the target, else a multiple-of-8 tile
    # <= target; ragged last blocks are handled by a pl.cdiv grid (no
    # full-array fallback -> bounded VMEM for any size).
    return m if m <= target else max(8, (target // 8) * 8)


def self_attn_sublayer(x, tgt_mask, ln_a, ln_b, wqkv, bqkv, wo, bo,
                       *, n_heads, q_tile=256):
    B, Sq, D = x.shape
    tq = _pick_tile(Sq, q_tile)
    nq = pl.cdiv(Sq, tq)
    tiled_q = nq > 1

    xq_spec = pl.BlockSpec((pl.Squeezed(), tq, D), lambda b, qi: (b, qi, 0))
    in_specs = [xq_spec]
    args = [x]
    if tiled_q:
        # Full sequence (K/V source) per batch; constant over the q-tile axis.
        in_specs.append(pl.BlockSpec((pl.Squeezed(), Sq, D), lambda b, qi: (b, 0, 0)))
        args.append(x)
    in_specs += [pl.BlockSpec((pl.Squeezed(), tq, Sq), lambda b, qi: (b, qi, 0)),
                 _const2((1, D)), _const2((1, D)),
                 _const2((D, 3 * D)), _const2((1, 3 * D)),
                 _const2((D, D)), _const2((1, D))]
    args += [tgt_mask, ln_a, ln_b, wqkv, bqkv, wo, bo]

    return pl.pallas_call(
        functools.partial(_self_attn_kernel, n_heads=n_heads, tiled_q=tiled_q),
        out_shape=jax.ShapeDtypeStruct((B, Sq, D), jnp.float32),
        grid=(B, nq),
        in_specs=in_specs,
        out_specs=xq_spec,
        compiler_params=pltpu.CompilerParams(
            dimension_semantics=("parallel", "parallel"),
            vmem_limit_bytes=VMEM_LIMIT),
        # Residual aliasing only when the full x is not also read as K/V
        # elsewhere in the pipeline (otherwise stale-read hazard).
        input_output_aliases={} if tiled_q else {0: 0},
    )(*args)


def cross_attn_sublayer(x, memory, src_mask, ln_a, ln_b, wqkv, bqkv, wo, bo,
                        *, n_heads, q_tile=256):
    B, Sq, D = x.shape
    Sk = memory.shape[1]
    tq = _pick_tile(Sq, q_tile)
    nq = pl.cdiv(Sq, tq)

    xq_spec = pl.BlockSpec((pl.Squeezed(), tq, D), lambda b, qi: (b, qi, 0))
    mem_spec = pl.BlockSpec((pl.Squeezed(), Sk, D), lambda b, qi: (b, 0, 0))
    mask_spec = pl.BlockSpec((pl.Squeezed(), 1, Sk), lambda b, qi: (b, 0, 0))

    return pl.pallas_call(
        functools.partial(_cross_attn_kernel, n_heads=n_heads),
        out_shape=jax.ShapeDtypeStruct((B, Sq, D), jnp.float32),
        grid=(B, nq),
        in_specs=[xq_spec, mem_spec, mask_spec,
                  _const2((1, D)), _const2((1, D)),
                  _const2((D, 3 * D)), _const2((1, 3 * D)),
                  _const2((D, D)), _const2((1, D))],
        out_specs=xq_spec,
        compiler_params=pltpu.CompilerParams(
            dimension_semantics=("parallel", "parallel"),
            vmem_limit_bytes=VMEM_LIMIT),
        input_output_aliases={0: 0},
    )(x, memory, src_mask, ln_a, ln_b, wqkv, bqkv, wo, bo)


def ffn_sublayer(x, ln_a, ln_b, w1, b1, w2, b2, final_ln=None, *, row_tile=512):
    B, S, D = x.shape
    M = B * S
    dff = w1.shape[1]
    tm = _pick_tile(M, row_tile)
    xf = x.reshape(M, D)
    row = pl.BlockSpec((tm, D), lambda i: (i, 0))

    in_specs = [row,
                _const1((1, D)), _const1((1, D)),
                _const1((D, dff)), _const1((1, dff)),
                _const1((dff, D)), _const1((1, D))]
    args = [xf, ln_a, ln_b, w1, b1, w2, b2]
    apply_final_ln = final_ln is not None
    if apply_final_ln:
        in_specs += [_const1((1, D)), _const1((1, D))]
        args += [final_ln[0], final_ln[1]]

    out = pl.pallas_call(
        functools.partial(_ffn_kernel, apply_final_ln=apply_final_ln),
        out_shape=jax.ShapeDtypeStruct((M, D), jnp.float32),
        grid=(pl.cdiv(M, tm),),
        in_specs=in_specs,
        out_specs=row,
        compiler_params=pltpu.CompilerParams(
            dimension_semantics=("parallel",),
            vmem_limit_bytes=VMEM_LIMIT),
        input_output_aliases={0: 0},
    )(*args)
    return out.reshape(B, S, D)


# ----------------------------------------------------------------------------
# Model glue (plain JAX; everything heavy lives in the fused kernels above)
# ----------------------------------------------------------------------------
def decoder_forward(params, x, memory, src_mask, tgt_mask, n_heads):
    # NOTE: dropout is identity (eval-mode forward).
    B, S, D = x.shape
    Sk = memory.shape[1]
    # Compact int8 masks, hoisted out of the per-layer path.  src_mask stays
    # (B, 1, Sk) -- never broadcast over Sq.
    tgt_mask_b = jnp.broadcast_to(tgt_mask, (B, S, S)).astype(jnp.int8)
    src_mask_b = jnp.broadcast_to(src_mask, (B, 1, Sk)).astype(jnp.int8)

    n_layers = len(params["layers"])
    for li, p in enumerate(params["layers"]):
        sa = p["self_attn"]
        x = self_attn_sublayer(x, tgt_mask_b, p["ln0_a"], p["ln0_b"],
                               sa["wqkv"], sa["bqkv"], sa["wo"], sa["bo"],
                               n_heads=n_heads)
        ca = p["src_attn"]
        x = cross_attn_sublayer(x, memory, src_mask_b, p["ln1_a"], p["ln1_b"],
                                ca["wqkv"], ca["bqkv"], ca["wo"], ca["bo"],
                                n_heads=n_heads)
        # Fuse the decoder's final LayerNorm into the last layer's FFN kernel.
        final_ln = (params["norm_a"], params["norm_b"]) if li == n_layers - 1 else None
        x = ffn_sublayer(x, p["ln2_a"], p["ln2_b"],
                         p["ff_w1"], p["ff_b1"], p["ff_w2"], p["ff_b2"],
                         final_ln=final_ln)
    return x


# ----------------------------------------------------------------------------
# Deterministic parameter initialization (mirrors the PyTorch module shapes)
# Weights stored bf16 (MXU operands); biases / LN params stay f32.
# ----------------------------------------------------------------------------
def init_linear(key, in_f, out_f):
    kw, kb = jax.random.split(key)
    bound = 1.0 / math.sqrt(in_f)
    w = jax.random.uniform(kw, (in_f, out_f), jnp.float32, -bound, bound)  # torch W.T
    b = jax.random.uniform(kb, (1, out_f), jnp.float32, -bound, bound)
    return w, b


def init_mha(key, d_model):
    ks = jax.random.split(key, 4)
    wq, bq = init_linear(ks[0], d_model, d_model)
    wk, bk = init_linear(ks[1], d_model, d_model)
    wv, bv = init_linear(ks[2], d_model, d_model)
    wo, bo = init_linear(ks[3], d_model, d_model)
    return dict(wqkv=jnp.concatenate([wq, wk, wv], axis=1).astype(jnp.bfloat16),
                bqkv=jnp.concatenate([bq, bk, bv], axis=1),          # (1, 3D) f32
                wo=wo.astype(jnp.bfloat16), bo=bo)


def init_decoder(key, N, d_model, d_ff):
    layers = []
    keys = jax.random.split(key, N)
    ones = jnp.ones((1, d_model), jnp.float32)
    zeros = jnp.zeros((1, d_model), jnp.float32)
    for lk in keys:
        k1, k2, k3, k4 = jax.random.split(lk, 4)
        w1, b1 = init_linear(k3, d_model, d_ff)
        w2, b2 = init_linear(k4, d_ff, d_model)
        layers.append(dict(
            self_attn=init_mha(k1, d_model),
            src_attn=init_mha(k2, d_model),
            ff_w1=w1.astype(jnp.bfloat16), ff_b1=b1,
            ff_w2=w2.astype(jnp.bfloat16), ff_b2=b2,
            ln0_a=ones, ln0_b=zeros,
            ln1_a=ones, ln1_b=zeros,
            ln2_a=ones, ln2_b=zeros,
        ))
    return dict(layers=layers, norm_a=ones, norm_b=zeros)


# ----------------------------------------------------------------------------
if __name__ == "__main__":
    B, S_TGT, S_SRC = 2, 8, 8
    D_MODEL, N_HEADS, D_FF, N_LAYERS = 32, 4, 64, 2

    root = jax.random.PRNGKey(0)
    k_params, k_x, k_mem = jax.random.split(root, 3)

    params = init_decoder(k_params, N_LAYERS, D_MODEL, D_FF)

    x = jax.random.normal(k_x, (B, S_TGT, D_MODEL), jnp.float32)
    memory = jax.random.normal(k_mem, (B, S_SRC, D_MODEL), jnp.float32)

    # src_mask: [B, 1, S_src]; mask out the last source position of batch 1.
    src_mask = jnp.ones((B, 1, S_SRC), jnp.int32).at[1, 0, -1].set(0)
    # tgt_mask: causal (subsequent) mask, [B, S_tgt, S_tgt]
    causal = jnp.tril(jnp.ones((S_TGT, S_TGT), jnp.int32))
    tgt_mask = jnp.broadcast_to(causal[None], (B, S_TGT, S_TGT))

    fwd = jax.jit(functools.partial(decoder_forward, n_heads=N_HEADS))
    out = jax.block_until_ready(fwd(params, x, memory, src_mask, tgt_mask))
    assert out.shape == (B, S_TGT, D_MODEL) and out.dtype == jnp.float32
    assert bool(jnp.all(jnp.isfinite(out)))
    print("KERNEL_OK")
</pallas_src>

<mosaic_0001>
module attributes {stable_mosaic.version = 11 : i64} {
  func.func @_self_attn_kernel(%arg0: i32, %arg1: i32, %arg2: memref<1x8x32xf32, #tpu.memory_space<vmem>>, %arg3: memref<1x8x8xi8, #tpu.memory_space<vmem>>, %arg4: memref<1x32xf32, #tpu.memory_space<vmem>>, %arg5: memref<1x32xf32, #tpu.memory_space<vmem>>, %arg6: memref<32x96xbf16, #tpu.memory_space<vmem>>, %arg7: memref<1x96xf32, #tpu.memory_space<vmem>>, %arg8: memref<32x32xbf16, #tpu.memory_space<vmem>>, %arg9: memref<1x32xf32, #tpu.memory_space<vmem>>, %arg10: memref<1x8x32xf32, #tpu.memory_space<vmem>>) attributes {dimension_semantics = [#tpu.dimension_semantics<parallel>, #tpu.dimension_semantics<parallel>], iteration_bounds = array<i64: 2, 1>, scalar_prefetch = 0 : i64, scratch_operands = 0 : i64, tpu.core_type = #tpu.core_type<tc>, window_params = [{transform_indices = @transform_0, window_bounds = array<i64: 1, 8, 32>}, {transform_indices = @transform_1, window_bounds = array<i64: 1, 8, 8>}, {pipeline_mode = #tpu.pipeline_mode<synchronous>, transform_indices = @transform_2, window_bounds = array<i64: 1, 32>}, {pipeline_mode = #tpu.pipeline_mode<synchronous>, transform_indices = @transform_3, window_bounds = array<i64: 1, 32>}, {pipeline_mode = #tpu.pipeline_mode<synchronous>, transform_indices = @transform_4, window_bounds = array<i64: 32, 96>}, {pipeline_mode = #tpu.pipeline_mode<synchronous>, transform_indices = @transform_5, window_bounds = array<i64: 1, 96>}, {pipeline_mode = #tpu.pipeline_mode<synchronous>, transform_indices = @transform_6, window_bounds = array<i64: 32, 32>}, {pipeline_mode = #tpu.pipeline_mode<synchronous>, transform_indices = @transform_7, window_bounds = array<i64: 1, 32>}, {transform_indices = @transform_8, window_bounds = array<i64: 1, 8, 32>}]} {
    %c0 = arith.constant 0 : index
    %c0_0 = arith.constant 0 : index
    %c0_1 = arith.constant 0 : index
    %0 = vector.load %arg2[%c0, %c0_0, %c0_1] : memref<1x8x32xf32, #tpu.memory_space<vmem>>, vector<1x8x32xf32>
    %1 = vector.shape_cast %0 : vector<1x8x32xf32> to vector<8x32xf32>
    %c0_2 = arith.constant 0 : index
    %c0_3 = arith.constant 0 : index
    %2 = vector.load %arg4[%c0_2, %c0_3] : memref<1x32xf32, #tpu.memory_space<vmem>>, vector<1x32xf32>
    %c0_4 = arith.constant 0 : index
    %c0_5 = arith.constant 0 : index
    %3 = vector.load %arg5[%c0_4, %c0_5] : memref<1x32xf32, #tpu.memory_space<vmem>>, vector<1x32xf32>
    %cst = arith.constant dense<0.000000e+00> : vector<8xf32>
    %4 = vector.multi_reduction <add>, %1, %cst [1] : vector<8x32xf32> to vector<8xf32>
    %5 = vector.shape_cast %4 : vector<8xf32> to vector<8x1xf32>
    %cst_6 = arith.constant 3.200000e+01 : f32
    %6 = vector.broadcast %cst_6 : f32 to vector<8x1xf32>
    %7 = arith.divf %5, %6 : vector<8x1xf32>
    %8 = vector.broadcast %7 : vector<8x1xf32> to vector<8x32xf32>
    %9 = arith.subf %1, %8 : vector<8x32xf32>
    %10 = arith.mulf %9, %9 : vector<8x32xf32>
    %cst_7 = arith.constant dense<0.000000e+00> : vector<8xf32>
    %11 = vector.multi_reduction <add>, %10, %cst_7 [1] : vector<8x32xf32> to vector<8xf32>
    %12 = vector.shape_cast %11 : vector<8xf32> to vector<8x1xf32>
    %cst_8 = arith.constant 0.0322580636 : f32
    %13 = vector.broadcast %cst_8 : f32 to vector<8x1xf32>
    %14 = arith.mulf %12, %13 : vector<8x1xf32>
    %15 = math.sqrt %14 : vector<8x1xf32>
    %16 = vector.broadcast %2 : vector<1x32xf32> to vector<8x32xf32>
    %17 = arith.mulf %16, %9 : vector<8x32xf32>
    %cst_9 = arith.constant 9.99999997E-7 : f32
    %18 = vector.broadcast %cst_9 : f32 to vector<8x1xf32>
    %19 = arith.addf %15, %18 : vector<8x1xf32>
    %20 = vector.broadcast %19 : vector<8x1xf32> to vector<8x32xf32>
    %21 = arith.divf %17, %20 : vector<8x32xf32>
    %22 = vector.broadcast %3 : vector<1x32xf32> to vector<8x32xf32>
    %23 = arith.addf %21, %22 : vector<8x32xf32>
    %24 = arith.truncf %23 : vector<8x32xf32> to vector<8x32xbf16>
    %c0_10 = arith.constant 0 : index
    %c0_11 = arith.constant 0 : index
    %25 = vector.load %arg6[%c0_10, %c0_11] : memref<32x96xbf16, #tpu.memory_space<vmem>>, vector<32x96xbf16>
    %c0_12 = arith.constant 0 : index
    %c0_13 = arith.constant 0 : index
    %26 = vector.load %arg7[%c0_12, %c0_13] : memref<1x96xf32, #tpu.memory_space<vmem>>, vector<1x96xf32>
    %cst_14 = arith.constant dense<0.000000e+00> : vector<8x96xf32>
    %27 = tpu.matmul %24, %25, %cst_14 {dimension_numbers = #tpu.dot_dimension_numbers<[1], [0], [0], [1], [0, 0, 1, 1], [], []>} : vector<8x32xbf16>, vector<32x96xbf16>, vector<8x96xf32> -> vector<8x96xf32>
    %28 = vector.broadcast %26 : vector<1x96xf32> to vector<8x96xf32>
    %29 = arith.addf %27, %28 : vector<8x96xf32>
    %30 = vector.extract_strided_slice %29 {offsets = [0, 0], sizes = [8, 32], strides = [1, 1]} : vector<8x96xf32> to vector<8x32xf32>
    %31 = vector.extract_strided_slice %29 {offsets = [0, 32], sizes = [8, 64], strides = [1, 1]} : vector<8x96xf32> to vector<8x64xf32>
    %cst_15 = arith.constant 0.353553385 : f32
    %32 = vector.broadcast %cst_15 : f32 to vector<8x32xf32>
    %33 = arith.mulf %30, %32 : vector<8x32xf32>
    %c0_16 = arith.constant 0 : index
    %c0_17 = arith.constant 0 : index
    %c0_18 = arith.constant 0 : index
    %34 = vector.load %arg3[%c0_16, %c0_17, %c0_18] : memref<1x8x8xi8, #tpu.memory_space<vmem>>, vector<1x8x8xi8>
    %35 = vector.shape_cast %34 : vector<1x8x8xi8> to vector<8x8xi8>
    %36 = arith.extsi %35 : vector<8x8xi8> to vector<8x8xi32>
    %c0_i32 = arith.constant 0 : i32
    %37 = vector.broadcast %c0_i32 : i32 to vector<8x8xi32>
    %38 = arith.cmpi eq, %36, %37 : vector<8x8xi32>
    %39 = vector.extract_strided_slice %31 {offsets = [0, 0], sizes = [8, 32], strides = [1, 1]} : vector<8x64xf32> to vector<8x32xf32>
    %40 = vector.extract_strided_slice %31 {offsets = [0, 32], sizes = [8, 32], strides = [1, 1]} : vector<8x64xf32> to vector<8x32xf32>
    %c0_19 = arith.constant 0 : index
    %c0_20 = arith.constant 0 : index
    %41 = vector.load %arg8[%c0_19, %c0_20] : memref<32x32xbf16, #tpu.memory_space<vmem>>, vector<32x32xbf16>
    %42 = arith.truncf %33 : vector<8x32xf32> to vector<8x32xbf16>
    %43 = arith.truncf %39 : vector<8x32xf32> to vector<8x32xbf16>
    %44 = arith.truncf %40 : vector<8x32xf32> to vector<8x32xbf16>
    %cst_21 = arith.constant 0.000000e+00 : f32
    %45 = vector.broadcast %cst_21 : f32 to vector<8x32xf32>
    %46 = vector.extract_strided_slice %42 {offsets = [0, 0], sizes = [8, 8], strides = [1, 1]} : vector<8x32xbf16> to vector<8x8xbf16>
    %47 = vector.extract_strided_slice %43 {offsets = [0, 0], sizes = [8, 8], strides = [1, 1]} : vector<8x32xbf16> to vector<8x8xbf16>
    %cst_22 = arith.constant dense<0.000000e+00> : vector<8x8xf32>
    %48 = tpu.matmul %46, %47, %cst_22 {dimension_numbers = #tpu.dot_dimension_numbers<[1], [1], [0], [0], [0, 0, 1, 0], [], []>} : vector<8x8xbf16>, vector<8x8xbf16>, vector<8x8xf32> -> vector<8x8xf32>
    %cst_23 = arith.constant -1.000000e+09 : f32
    %49 = vector.broadcast %cst_23 : f32 to vector<8x8xf32>
    %50 = arith.select %38, %49, %48 : vector<8x8xi1>, vector<8x8xf32>
    %cst_24 = arith.constant dense<0xFF800000> : vector<8xf32>
    %51 = vector.multi_reduction <maximumf>, %50, %cst_24 [1] : vector<8x8xf32> to vector<8xf32>
    %52 = vector.shape_cast %51 : vector<8xf32> to vector<8x1xf32>
    %53 = vector.broadcast %52 : vector<8x1xf32> to vector<8x8xf32>
    %54 = arith.subf %50, %53 : vector<8x8xf32>
    %55 = math.exp %54 : vector<8x8xf32>
    %cst_25 = arith.constant dense<0.000000e+00> : vector<8xf32>
    %56 = vector.multi_reduction <add>, %55, %cst_25 [1] : vector<8x8xf32> to vector<8xf32>
    %57 = vector.shape_cast %56 : vector<8xf32> to vector<8x1xf32>
    %58 = tpu.reciprocal %57 {approx = true} : vector<8x1xf32> -> vector<8x1xf32>
    %59 = vector.broadcast %58 : vector<8x1xf32> to vector<8x8xf32>
    %60 = arith.mulf %55, %59 : vector<8x8xf32>
    %61 = arith.truncf %60 : vector<8x8xf32> to vector<8x8xbf16>
    %62 = vector.extract_strided_slice %44 {offsets = [0, 0], sizes = [8, 8], strides = [1, 1]} : vector<8x32xbf16> to vector<8x8xbf16>
    %cst_26 = arith.constant dense<0.000000e+00> : vector<8x8xf32>
    %63 = tpu.matmul %61, %62, %cst_26 {dimension_numbers = #tpu.dot_dimension_numbers<[1], [0], [0], [1], [0, 0, 1, 1], [], []>} : vector<8x8xbf16>, vector<8x8xbf16>, vector<8x8xf32> -> vector<8x8xf32>
    %64 = arith.truncf %63 : vector<8x8xf32> to vector<8x8xbf16>
    %65 = vector.extract_strided_slice %41 {offsets = [0, 0], sizes = [8, 32], strides = [1, 1]} : vector<32x32xbf16> to vector<8x32xbf16>
    %cst_27 = arith.constant dense<0.000000e+00> : vector<8x32xf32>
    %66 = tpu.matmul %64, %65, %cst_27 {dimension_numbers = #tpu.dot_dimension_numbers<[1], [0], [0], [1], [0, 0, 1, 1], [], []>} : vector<8x8xbf16>, vector<8x32xbf16>, vector<8x32xf32> -> vector<8x32xf32>
    %67 = arith.addf %45, %66 : vector<8x32xf32>
    %68 = vector.extract_strided_slice %42 {offsets = [0, 8], sizes = [8, 8], strides = [1, 1]} : vector<8x32xbf16> to vector<8x8xbf16>
    %69 = vector.extract_strided_slice %43 {offsets = [0, 8], sizes = [8, 8], strides = [1, 1]} : vector<8x32xbf16> to vector<8x8xbf16>
    %cst_28 = arith.constant dense<0.000000e+00> : vector<8x8xf32>
    %70 = tpu.matmul %68, %69, %cst_28 {dimension_numbers = #tpu.dot_dimension_numbers<[1], [1], [0], [0], [0, 0, 1, 0], [], []>} : vector<8x8xbf16>, vector<8x8xbf16>, vector<8x8xf32> -> vector<8x8xf32>
    %cst_29 = arith.constant -1.000000e+09 : f32
    %71 = vector.broadcast %cst_29 : f32 to vector<8x8xf32>
    %72 = arith.select %38, %71, %70 : vector<8x8xi1>, vector<8x8xf32>
    %cst_30 = arith.constant dense<0xFF800000> : vector<8xf32>
    %73 = vector.multi_reduction <maximumf>, %72, %cst_30 [1] : vector<8x8xf32> to vector<8xf32>
    %74 = vector.shape_cast %73 : vector<8xf32> to vector<8x1xf32>
    %75 = vector.broadcast %74 : vector<8x1xf32> to vector<8x8xf32>
    %76 = arith.subf %72, %75 : vector<8x8xf32>
    %77 = math.exp %76 : vector<8x8xf32>
    %cst_31 = arith.constant dense<0.000000e+00> : vector<8xf32>
    %78 = vector.multi_reduction <add>, %77, %cst_31 [1] : vector<8x8xf32> to vector<8xf32>
    %79 = vector.shape_cast %78 : vector<8xf32> to vector<8x1xf32>
    %80 = tpu.reciprocal %79 {approx = true} : vector<8x1xf32> -> vector<8x1xf32>
    %81 = vector.broadcast %80 : vector<8x1xf32> to vector<8x8xf32>
    %82 = arith.mulf %77, %81 : vector<8x8xf32>
    %83 = arith.truncf %82 : vector<8x8xf32> to vector<8x8xbf16>
    %84 = vector.extract_strided_slice %44 {offsets = [0, 8], sizes = [8, 8], strides = [1, 1]} : vector<8x32xbf16> to vector<8x8xbf16>
    %cst_32 = arith.constant dense<0.000000e+00> : vector<8x8xf32>
    %85 = tpu.matmul %83, %84, %cst_32 {dimension_numbers = #tpu.dot_dimension_numbers<[1], [0], [0], [1], [0, 0, 1, 1], [], []>} : vector<8x8xbf16>, vector<8x8xbf16>, vector<8x8xf32> -> vector<8x8xf32>
    %86 = arith.truncf %85 : vector<8x8xf32> to vector<8x8xbf16>
    %87 = vector.extract_strided_slice %41 {offsets = [8, 0], sizes = [8, 32], strides = [1, 1]} : vector<32x32xbf16> to vector<8x32xbf16>
    %cst_33 = arith.constant dense<0.000000e+00> : vector<8x32xf32>
    %88 = tpu.matmul %86, %87, %cst_33 {dimension_numbers = #tpu.dot_dimension_numbers<[1], [0], [0], [1], [0, 0, 1, 1], [], []>} : vector<8x8xbf16>, vector<8x32xbf16>, vector<8x32xf32> -> vector<8x32xf32>
    %89 = arith.addf %67, %88 : vector<8x32xf32>
    %90 = vector.extract_strided_slice %42 {offsets = [0, 16], sizes = [8, 8], strides = [1, 1]} : vector<8x32xbf16> to vector<8x8xbf16>
    %91 = vector.extract_strided_slice %43 {offsets = [0, 16], sizes = [8, 8], strides = [1, 1]} : vector<8x32xbf16> to vector<8x8xbf16>
    %cst_34 = arith.constant dense<0.000000e+00> : vector<8x8xf32>
    %92 = tpu.matmul %90, %91, %cst_34 {dimension_numbers = #tpu.dot_dimension_numbers<[1], [1], [0], [0], [0, 0, 1, 0], [], []>} : vector<8x8xbf16>, vector<8x8xbf16>, vector<8x8xf32> -> vector<8x8xf32>
    %cst_35 = arith.constant -1.000000e+09 : f32
    %93 = vector.broadcast %cst_35 : f32 to vector<8x8xf32>
    %94 = arith.select %38, %93, %92 : vector<8x8xi1>, vector<8x8xf32>
    %cst_36 = arith.constant dense<0xFF800000> : vector<8xf32>
    %95 = vector.multi_reduction <maximumf>, %94, %cst_36 [1] : vector<8x8xf32> to vector<8xf32>
    %96 = vector.shape_cast %95 : vector<8xf32> to vector<8x1xf32>
    %97 = vector.broadcast %96 : vector<8x1xf32> to vector<8x8xf32>
    %98 = arith.subf %94, %97 : vector<8x8xf32>
    %99 = math.exp %98 : vector<8x8xf32>
    %cst_37 = arith.constant dense<0.000000e+00> : vector<8xf32>
    %100 = vector.multi_reduction <add>, %99, %cst_37 [1] : vector<8x8xf32> to vector<8xf32>
    %101 = vector.shape_cast %100 : vector<8xf32> to vector<8x1xf32>
    %102 = tpu.reciprocal %101 {approx = true} : vector<8x1xf32> -> vector<8x1xf32>
    %103 = vector.broadcast %102 : vector<8x1xf32> to vector<8x8xf32>
    %104 = arith.mulf %99, %103 : vector<8x8xf32>
    %105 = arith.truncf %104 : vector<8x8xf32> to vector<8x8xbf16>
    %106 = vector.extract_strided_slice %44 {offsets = [0, 16], sizes = [8, 8], strides = [1, 1]} : vector<8x32xbf16> to vector<8x8xbf16>
    %cst_38 = arith.constant dense<0.000000e+00> : vector<8x8xf32>
    %107 = tpu.matmul %105, %106, %cst_38 {dimension_numbers = #tpu.dot_dimension_numbers<[1], [0], [0], [1], [0, 0, 1, 1], [], []>} : vector<8x8xbf16>, vector<8x8xbf16>, vector<8x8xf32> -> vector<8x8xf32>
    %108 = arith.truncf %107 : vector<8x8xf32> to vector<8x8xbf16>
    %109 = vector.extract_strided_slice %41 {offsets = [16, 0], sizes = [8, 32], strides = [1, 1]} : vector<32x32xbf16> to vector<8x32xbf16>
    %cst_39 = arith.constant dense<0.000000e+00> : vector<8x32xf32>
    %110 = tpu.matmul %108, %109, %cst_39 {dimension_numbers = #tpu.dot_dimension_numbers<[1], [0], [0], [1], [0, 0, 1, 1], [], []>} : vector<8x8xbf16>, vector<8x32xbf16>, vector<8x32xf32> -> vector<8x32xf32>
    %111 = arith.addf %89, %110 : vector<8x32xf32>
    %112 = vector.extract_strided_slice %42 {offsets = [0, 24], sizes = [8, 8], strides = [1, 1]} : vector<8x32xbf16> to vector<8x8xbf16>
    %113 = vector.extract_strided_slice %43 {offsets = [0, 24], sizes = [8, 8], strides = [1, 1]} : vector<8x32xbf16> to vector<8x8xbf16>
    %cst_40 = arith.constant dense<0.000000e+00> : vector<8x8xf32>
    %114 = tpu.matmul %112, %113, %cst_40 {dimension_numbers = #tpu.dot_dimension_numbers<[1], [1], [0], [0], [0, 0, 1, 0], [], []>} : vector<8x8xbf16>, vector<8x8xbf16>, vector<8x8xf32> -> vector<8x8xf32>
    %cst_41 = arith.constant -1.000000e+09 : f32
    %115 = vector.broadcast %cst_41 : f32 to vector<8x8xf32>
    %116 = arith.select %38, %115, %114 : vector<8x8xi1>, vector<8x8xf32>
    %cst_42 = arith.constant dense<0xFF800000> : vector<8xf32>
    %117 = vector.multi_reduction <maximumf>, %116, %cst_42 [1] : vector<8x8xf32> to vector<8xf32>
    %118 = vector.shape_cast %117 : vector<8xf32> to vector<8x1xf32>
    %119 = vector.broadcast %118 : vector<8x1xf32> to vector<8x8xf32>
    %120 = arith.subf %116, %119 : vector<8x8xf32>
    %121 = math.exp %120 : vector<8x8xf32>
    %cst_43 = arith.constant dense<0.000000e+00> : vector<8xf32>
    %122 = vector.multi_reduction <add>, %121, %cst_43 [1] : vector<8x8xf32> to vector<8xf32>
    %123 = vector.shape_cast %122 : vector<8xf32> to vector<8x1xf32>
    %124 = tpu.reciprocal %123 {approx = true} : vector<8x1xf32> -> vector<8x1xf32>
    %125 = vector.broadcast %124 : vector<8x1xf32> to vector<8x8xf32>
    %126 = arith.mulf %121, %125 : vector<8x8xf32>
    %127 = arith.truncf %126 : vector<8x8xf32> to vector<8x8xbf16>
    %128 = vector.extract_strided_slice %44 {offsets = [0, 24], sizes = [8, 8], strides = [1, 1]} : vector<8x32xbf16> to vector<8x8xbf16>
    %cst_44 = arith.constant dense<0.000000e+00> : vector<8x8xf32>
    %129 = tpu.matmul %127, %128, %cst_44 {dimension_numbers = #tpu.dot_dimension_numbers<[1], [0], [0], [1], [0, 0, 1, 1], [], []>} : vector<8x8xbf16>, vector<8x8xbf16>, vector<8x8xf32> -> vector<8x8xf32>
    %130 = arith.truncf %129 : vector<8x8xf32> to vector<8x8xbf16>
    %131 = vector.extract_strided_slice %41 {offsets = [24, 0], sizes = [8, 32], strides = [1, 1]} : vector<32x32xbf16> to vector<8x32xbf16>
    %cst_45 = arith.constant dense<0.000000e+00> : vector<8x32xf32>
    %132 = tpu.matmul %130, %131, %cst_45 {dimension_numbers = #tpu.dot_dimension_numbers<[1], [0], [0], [1], [0, 0, 1, 1], [], []>} : vector<8x8xbf16>, vector<8x32xbf16>, vector<8x32xf32> -> vector<8x32xf32>
    %133 = arith.addf %111, %132 : vector<8x32xf32>
    %c0_46 = arith.constant 0 : index
    %c0_47 = arith.constant 0 : index
    %134 = vector.load %arg9[%c0_46, %c0_47] : memref<1x32xf32, #tpu.memory_space<vmem>>, vector<1x32xf32>
    %135 = vector.broadcast %134 : vector<1x32xf32> to vector<8x32xf32>
    %136 = arith.addf %133, %135 : vector<8x32xf32>
    %137 = arith.addf %136, %1 : vector<8x32xf32>
    %c0_48 = arith.constant 0 : index
    %c0_49 = arith.constant 0 : index
    %c0_50 = arith.constant 0 : index
    %138 = vector.load %arg10[%c0_48, %c0_49, %c0_50] : memref<1x8x32xf32, #tpu.memory_space<vmem>>, vector<1x8x32xf32>
    %139 = vector.shape_cast %138 : vector<1x8x32xf32> to vector<8x32xf32>
    %140 = vector.shape_cast %137 : vector<8x32xf32> to vector<1x8x32xf32>
    tpu.vector_store %arg10[%c0_48, %c0_49, %c0_50], %140 {strides = array<i32>} : memref<1x8x32xf32, #tpu.memory_space<vmem>>, vector<1x8x32xf32>,
    return
  }
  func.func @transform_0(%arg0: i32, %arg1: i32) -> (i32, i32, i32) {
    %c0_i32 = arith.constant 0 : i32
    %c0_i32_0 = arith.constant 0 : i32
    return %arg0, %arg1, %c0_i32 : i32, i32, i32
  }
  func.func @transform_1(%arg0: i32, %arg1: i32) -> (i32, i32, i32) {
    %c0_i32 = arith.constant 0 : i32
    %c0_i32_0 = arith.constant 0 : i32
    return %arg0, %arg1, %c0_i32 : i32, i32, i32
  }
  func.func @transform_2(%arg0: i32, %arg1: i32) -> (i32, i32) {
    %c0_i32 = arith.constant 0 : i32
    %c0_i32_0 = arith.constant 0 : i32
    %c0_i32_1 = arith.constant 0 : i32
    return %c0_i32, %c0_i32_0 : i32, i32
  }
  func.func @transform_3(%arg0: i32, %arg1: i32) -> (i32, i32) {
    %c0_i32 = arith.constant 0 : i32
    %c0_i32_0 = arith.constant 0 : i32
    %c0_i32_1 = arith.constant 0 : i32
    return %c0_i32, %c0_i32_0 : i32, i32
  }
  func.func @transform_4(%arg0: i32, %arg1: i32) -> (i32, i32) {
    %c0_i32 = arith.constant 0 : i32
    %c0_i32_0 = arith.constant 0 : i32
    %c0_i32_1 = arith.constant 0 : i32
    return %c0_i32, %c0_i32_0 : i32, i32
  }
  func.func @transform_5(%arg0: i32, %arg1: i32) -> (i32, i32) {
    %c0_i32 = arith.constant 0 : i32
    %c0_i32_0 = arith.constant 0 : i32
    %c0_i32_1 = arith.constant 0 : i32
    return %c0_i32, %c0_i32_0 : i32, i32
  }
  func.func @transform_6(%arg0: i32, %arg1: i32) -> (i32, i32) {
    %c0_i32 = arith.constant 0 : i32
    %c0_i32_0 = arith.constant 0 : i32
    %c0_i32_1 = arith.constant 0 : i32
    return %c0_i32, %c0_i32_0 : i32, i32
  }
  func.func @transform_7(%arg0: i32, %arg1: i32) -> (i32, i32) {
    %c0_i32 = arith.constant 0 : i32
    %c0_i32_0 = arith.constant 0 : i32
    %c0_i32_1 = arith.constant 0 : i32
    return %c0_i32, %c0_i32_0 : i32, i32
  }
  func.func @transform_8(%arg0: i32, %arg1: i32) -> (i32, i32, i32) {
    %c0_i32 = arith.constant 0 : i32
    %c0_i32_0 = arith.constant 0 : i32
    return %arg0, %arg1, %c0_i32 : i32, i32, i32
  }
}

module attributes {stable_mosaic.version = 11 : i64} {
  func.func @_ffn_kernel(%arg0: i32, %arg1: memref<16x32xf32, #tpu.memory_space<vmem>>, %arg2: memref<1x32xf32, #tpu.memory_space<vmem>>, %arg3: memref<1x32xf32, #tpu.memory_space<vmem>>, %arg4: memref<32x64xbf16, #tpu.memory_space<vmem>>, %arg5: memref<1x64xf32, #tpu.memory_space<vmem>>, %arg6: memref<64x32xbf16, #tpu.memory_space<vmem>>, %arg7: memref<1x32xf32, #tpu.memory_space<vmem>>, %arg8: memref<16x32xf32, #tpu.memory_space<vmem>>) attributes {dimension_semantics = [#tpu.dimension_semantics<parallel>], iteration_bounds = array<i64: 1>, scalar_prefetch = 0 : i64, scratch_operands = 0 : i64, tpu.core_type = #tpu.core_type<tc>, window_params = [{transform_indices = @transform_0, window_bounds = array<i64: 16, 32>}, {pipeline_mode = #tpu.pipeline_mode<synchronous>, transform_indices = @transform_1, window_bounds = array<i64: 1, 32>}, {pipeline_mode = #tpu.pipeline_mode<synchronous>, transform_indices = @transform_2, window_bounds = array<i64: 1, 32>}, {pipeline_mode = #tpu.pipeline_mode<synchronous>, transform_indices = @transform_3, window_bounds = array<i64: 32, 64>}, {pipeline_mode = #tpu.pipeline_mode<synchronous>, transform_indices = @transform_4, window_bounds = array<i64: 1, 64>}, {pipeline_mode = #tpu.pipeline_mode<synchronous>, transform_indices = @transform_5, window_bounds = array<i64: 64, 32>}, {pipeline_mode = #tpu.pipeline_mode<synchronous>, transform_indices = @transform_6, window_bounds = array<i64: 1, 32>}, {transform_indices = @transform_7, window_bounds = array<i64: 16, 32>}]} {
    %c0 = arith.constant 0 : index
    %c0_0 = arith.constant 0 : index
    %0 = vector.load %arg1[%c0, %c0_0] : memref<16x32xf32, #tpu.memory_space<vmem>>, vector<16x32xf32>
    %c0_1 = arith.constant 0 : index
    %c0_2 = arith.constant 0 : index
    %1 = vector.load %arg2[%c0_1, %c0_2] : memref<1x32xf32, #tpu.memory_space<vmem>>, vector<1x32xf32>
    %c0_3 = arith.constant 0 : index
    %c0_4 = arith.constant 0 : index
    %2 = vector.load %arg3[%c0_3, %c0_4] : memref<1x32xf32, #tpu.memory_space<vmem>>, vector<1x32xf32>
    %cst = arith.constant dense<0.000000e+00> : vector<16xf32>
    %3 = vector.multi_reduction <add>, %0, %cst [1] : vector<16x32xf32> to vector<16xf32>
    %4 = vector.shape_cast %3 : vector<16xf32> to vector<16x1xf32>
    %cst_5 = arith.constant 3.200000e+01 : f32
    %5 = vector.broadcast %cst_5 : f32 to vector<16x1xf32>
    %6 = arith.divf %4, %5 : vector<16x1xf32>
    %7 = vector.broadcast %6 : vector<16x1xf32> to vector<16x32xf32>
    %8 = arith.subf %0, %7 : vector<16x32xf32>
    %9 = arith.mulf %8, %8 : vector<16x32xf32>
    %cst_6 = arith.constant dense<0.000000e+00> : vector<16xf32>
    %10 = vector.multi_reduction <add>, %9, %cst_6 [1] : vector<16x32xf32> to vector<16xf32>
    %11 = vector.shape_cast %10 : vector<16xf32> to vector<16x1xf32>
    %cst_7 = arith.constant 0.0322580636 : f32
    %12 = vector.broadcast %cst_7 : f32 to vector<16x1xf32>
    %13 = arith.mulf %11, %12 : vector<16x1xf32>
    %14 = math.sqrt %13 : vector<16x1xf32>
    %15 = vector.broadcast %1 : vector<1x32xf32> to vector<16x32xf32>
    %16 = arith.mulf %15, %8 : vector<16x32xf32>
    %cst_8 = arith.constant 9.99999997E-7 : f32
    %17 = vector.broadcast %cst_8 : f32 to vector<16x1xf32>
    %18 = arith.addf %14, %17 : vector<16x1xf32>
    %19 = vector.broadcast %18 : vector<16x1xf32> to vector<16x32xf32>
    %20 = arith.divf %16, %19 : vector<16x32xf32>
    %21 = vector.broadcast %2 : vector<1x32xf32> to vector<16x32xf32>
    %22 = arith.addf %20, %21 : vector<16x32xf32>
    %23 = arith.truncf %22 : vector<16x32xf32> to vector<16x32xbf16>
    %c0_9 = arith.constant 0 : index
    %c0_10 = arith.constant 0 : index
    %24 = vector.load %arg4[%c0_9, %c0_10] : memref<32x64xbf16, #tpu.memory_space<vmem>>, vector<32x64xbf16>
    %cst_11 = arith.constant dense<0.000000e+00> : vector<16x64xf32>
    %25 = tpu.matmul %23, %24, %cst_11 {dimension_numbers = #tpu.dot_dimension_numbers<[1], [0], [0], [1], [0, 0, 1, 1], [], []>} : vector<16x32xbf16>, vector<32x64xbf16>, vector<16x64xf32> -> vector<16x64xf32>
    %c0_12 = arith.constant 0 : index
    %c0_13 = arith.constant 0 : index
    %26 = vector.load %arg5[%c0_12, %c0_13] : memref<1x64xf32, #tpu.memory_space<vmem>>, vector<1x64xf32>
    %27 = vector.broadcast %26 : vector<1x64xf32> to vector<16x64xf32>
    %28 = arith.addf %25, %27 : vector<16x64xf32>
    %cst_14 = arith.constant 0.000000e+00 : f32
    %29 = vector.broadcast %cst_14 : f32 to vector<16x64xf32>
    %30 = arith.maximumf %28, %29 : vector<16x64xf32>
    %31 = arith.truncf %30 : vector<16x64xf32> to vector<16x64xbf16>
    %c0_15 = arith.constant 0 : index
    %c0_16 = arith.constant 0 : index
    %32 = vector.load %arg6[%c0_15, %c0_16] : memref<64x32xbf16, #tpu.memory_space<vmem>>, vector<64x32xbf16>
    %cst_17 = arith.constant dense<0.000000e+00> : vector<16x32xf32>
    %33 = tpu.matmul %31, %32, %cst_17 {dimension_numbers = #tpu.dot_dimension_numbers<[1], [0], [0], [1], [0, 0, 1, 1], [], []>} : vector<16x64xbf16>, vector<64x32xbf16>, vector<16x32xf32> -> vector<16x32xf32>
    %c0_18 = arith.constant 0 : index
    %c0_19 = arith.constant 0 : index
    %34 = vector.load %arg7[%c0_18, %c0_19] : memref<1x32xf32, #tpu.memory_space<vmem>>, vector<1x32xf32>
    %35 = vector.broadcast %34 : vector<1x32xf32> to vector<16x32xf32>
    %36 = arith.addf %33, %35 : vector<16x32xf32>
    %37 = arith.addf %36, %0 : vector<16x32xf32>
    %c0_20 = arith.constant 0 : index
    %c0_21 = arith.constant 0 : index
    %38 = vector.load %arg8[%c0_20, %c0_21] : memref<16x32xf32, #tpu.memory_space<vmem>>, vector<16x32xf32>
    tpu.vector_store %arg8[%c0_20, %c0_21], %37 {strides = array<i32>} : memref<16x32xf32, #tpu.memory_space<vmem>>, vector<16x32xf32>,
    return
  }
  func.func @transform_0(%arg0: i32) -> (i32, i32) {
    %c0_i32 = arith.constant 0 : i32
    %c0_i32_0 = arith.constant 0 : i32
    return %arg0, %c0_i32 : i32, i32
  }
  func.func @transform_1(%arg0: i32) -> (i32, i32) {
    %c0_i32 = arith.constant 0 : i32
    %c0_i32_0 = arith.constant 0 : i32
    %c0_i32_1 = arith.constant 0 : i32
    return %c0_i32, %c0_i32_0 : i32, i32
  }
  func.func @transform_2(%arg0: i32) -> (i32, i32) {
    %c0_i32 = arith.constant 0 : i32
    %c0_i32_0 = arith.constant 0 : i32
    %c0_i32_1 = arith.constant 0 : i32
    return %c0_i32, %c0_i32_0 : i32, i32
  }
  func.func @transform_3(%arg0: i32) -> (i32, i32) {
    %c0_i32 = arith.constant 0 : i32
    %c0_i32_0 = arith.constant 0 : i32
    %c0_i32_1 = arith.constant 0 : i32
    return %c0_i32, %c0_i32_0 : i32, i32
  }
  func.func @transform_4(%arg0: i32) -> (i32, i32) {
    %c0_i32 = arith.constant 0 : i32
    %c0_i32_0 = arith.constant 0 : i32
    %c0_i32_1 = arith.constant 0 : i32
    return %c0_i32, %c0_i32_0 : i32, i32
  }
  func.func @transform_5(%arg0: i32) -> (i32, i32) {
    %c0_i32 = arith.constant 0 : i32
    %c0_i32_0 = arith.constant 0 : i32
    %c0_i32_1 = arith.constant 0 : i32
    return %c0_i32, %c0_i32_0 : i32, i32
  }
  func.func @transform_6(%arg0: i32) -> (i32, i32) {
    %c0_i32 = arith.constant 0 : i32
    %c0_i32_0 = arith.constant 0 : i32
    %c0_i32_1 = arith.constant 0 : i32
    return %c0_i32, %c0_i32_0 : i32, i32
  }
  func.func @transform_7(%arg0: i32) -> (i32, i32) {
    %c0_i32 = arith.constant 0 : i32
    %c0_i32_0 = arith.constant 0 : i32
    return %arg0, %c0_i32 : i32, i32
  }
}

module attributes {stable_mosaic.version = 11 : i64} {
  func.func @_cross_attn_kernel(%arg0: i32, %arg1: i32, %arg2: memref<1x8x32xf32, #tpu.memory_space<vmem>>, %arg3: memref<1x8x32xf32, #tpu.memory_space<vmem>>, %arg4: memref<1x1x8xi8, #tpu.memory_space<vmem>>, %arg5: memref<1x32xf32, #tpu.memory_space<vmem>>, %arg6: memref<1x32xf32, #tpu.memory_space<vmem>>, %arg7: memref<32x96xbf16, #tpu.memory_space<vmem>>, %arg8: memref<1x96xf32, #tpu.memory_space<vmem>>, %arg9: memref<32x32xbf16, #tpu.memory_space<vmem>>, %arg10: memref<1x32xf32, #tpu.memory_space<vmem>>, %arg11: memref<1x8x32xf32, #tpu.memory_space<vmem>>) attributes {dimension_semantics = [#tpu.dimension_semantics<parallel>, #tpu.dimension_semantics<parallel>], iteration_bounds = array<i64: 2, 1>, scalar_prefetch = 0 : i64, scratch_operands = 0 : i64, tpu.core_type = #tpu.core_type<tc>, window_params = [{transform_indices = @transform_0, window_bounds = array<i64: 1, 8, 32>}, {transform_indices = @transform_1, window_bounds = array<i64: 1, 8, 32>}, {transform_indices = @transform_2, window_bounds = array<i64: 1, 1, 8>}, {pipeline_mode = #tpu.pipeline_mode<synchronous>, transform_indices = @transform_3, window_bounds = array<i64: 1, 32>}, {pipeline_mode = #tpu.pipeline_mode<synchronous>, transform_indices = @transform_4, window_bounds = array<i64: 1, 32>}, {pipeline_mode = #tpu.pipeline_mode<synchronous>, transform_indices = @transform_5, window_bounds = array<i64: 32, 96>}, {pipeline_mode = #tpu.pipeline_mode<synchronous>, transform_indices = @transform_6, window_bounds = array<i64: 1, 96>}, {pipeline_mode = #tpu.pipeline_mode<synchronous>, transform_indices = @transform_7, window_bounds = array<i64: 32, 32>}, {pipeline_mode = #tpu.pipeline_mode<synchronous>, transform_indices = @transform_8, window_bounds = array<i64: 1, 32>}, {transform_indices = @transform_9, window_bounds = array<i64: 1, 8, 32>}]} {
    %c0 = arith.constant 0 : index
    %c0_0 = arith.constant 0 : index
    %c0_1 = arith.constant 0 : index
    %0 = vector.load %arg2[%c0, %c0_0, %c0_1] : memref<1x8x32xf32, #tpu.memory_space<vmem>>, vector<1x8x32xf32>
    %1 = vector.shape_cast %0 : vector<1x8x32xf32> to vector<8x32xf32>
    %c0_2 = arith.constant 0 : index
    %c0_3 = arith.constant 0 : index
    %2 = vector.load %arg5[%c0_2, %c0_3] : memref<1x32xf32, #tpu.memory_space<vmem>>, vector<1x32xf32>
    %c0_4 = arith.constant 0 : index
    %c0_5 = arith.constant 0 : index
    %3 = vector.load %arg6[%c0_4, %c0_5] : memref<1x32xf32, #tpu.memory_space<vmem>>, vector<1x32xf32>
    %cst = arith.constant dense<0.000000e+00> : vector<8xf32>
    %4 = vector.multi_reduction <add>, %1, %cst [1] : vector<8x32xf32> to vector<8xf32>
    %5 = vector.shape_cast %4 : vector<8xf32> to vector<8x1xf32>
    %cst_6 = arith.constant 3.200000e+01 : f32
    %6 = vector.broadcast %cst_6 : f32 to vector<8x1xf32>
    %7 = arith.divf %5, %6 : vector<8x1xf32>
    %8 = vector.broadcast %7 : vector<8x1xf32> to vector<8x32xf32>
    %9 = arith.subf %1, %8 : vector<8x32xf32>
    %10 = arith.mulf %9, %9 : vector<8x32xf32>
    %cst_7 = arith.constant dense<0.000000e+00> : vector<8xf32>
    %11 = vector.multi_reduction <add>, %10, %cst_7 [1] : vector<8x32xf32> to vector<8xf32>
    %12 = vector.shape_cast %11 : vector<8xf32> to vector<8x1xf32>
    %cst_8 = arith.constant 0.0322580636 : f32
    %13 = vector.broadcast %cst_8 : f32 to vector<8x1xf32>
    %14 = arith.mulf %12, %13 : vector<8x1xf32>
    %15 = math.sqrt %14 : vector<8x1xf32>
    %16 = vector.broadcast %2 : vector<1x32xf32> to vector<8x32xf32>
    %17 = arith.mulf %16, %9 : vector<8x32xf32>
    %cst_9 = arith.constant 9.99999997E-7 : f32
    %18 = vector.broadcast %cst_9 : f32 to vector<8x1xf32>
    %19 = arith.addf %15, %18 : vector<8x1xf32>
    %20 = vector.broadcast %19 : vector<8x1xf32> to vector<8x32xf32>
    %21 = arith.divf %17, %20 : vector<8x32xf32>
    %22 = vector.broadcast %3 : vector<1x32xf32> to vector<8x32xf32>
    %23 = arith.addf %21, %22 : vector<8x32xf32>
    %24 = arith.truncf %23 : vector<8x32xf32> to vector<8x32xbf16>
    %c0_10 = arith.constant 0 : index
    %c0_11 = arith.constant 0 : index
    %25 = vector.load %arg7[%c0_10, %c0_11] : memref<32x96xbf16, #tpu.memory_space<vmem>>, vector<32x96xbf16>
    %c0_12 = arith.constant 0 : index
    %c0_13 = arith.constant 0 : index
    %26 = vector.load %arg8[%c0_12, %c0_13] : memref<1x96xf32, #tpu.memory_space<vmem>>, vector<1x96xf32>
    %27 = vector.extract_strided_slice %25 {offsets = [0, 0], sizes = [32, 32], strides = [1, 1]} : vector<32x96xbf16> to vector<32x32xbf16>
    %cst_14 = arith.constant dense<0.000000e+00> : vector<8x32xf32>
    %28 = tpu.matmul %24, %27, %cst_14 {dimension_numbers = #tpu.dot_dimension_numbers<[1], [0], [0], [1], [0, 0, 1, 1], [], []>} : vector<8x32xbf16>, vector<32x32xbf16>, vector<8x32xf32> -> vector<8x32xf32>
    %29 = vector.extract_strided_slice %26 {offsets = [0, 0], sizes = [1, 32], strides = [1, 1]} : vector<1x96xf32> to vector<1x32xf32>
    %30 = vector.broadcast %29 : vector<1x32xf32> to vector<8x32xf32>
    %31 = arith.addf %28, %30 : vector<8x32xf32>
    %cst_15 = arith.constant 0.353553385 : f32
    %32 = vector.broadcast %cst_15 : f32 to vector<8x32xf32>
    %33 = arith.mulf %31, %32 : vector<8x32xf32>
    %c0_16 = arith.constant 0 : index
    %c0_17 = arith.constant 0 : index
    %c0_18 = arith.constant 0 : index
    %34 = vector.load %arg3[%c0_16, %c0_17, %c0_18] : memref<1x8x32xf32, #tpu.memory_space<vmem>>, vector<1x8x32xf32>
    %35 = vector.shape_cast %34 : vector<1x8x32xf32> to vector<8x32xf32>
    %36 = arith.truncf %35 : vector<8x32xf32> to vector<8x32xbf16>
    %37 = vector.extract_strided_slice %25 {offsets = [0, 32], sizes = [32, 64], strides = [1, 1]} : vector<32x96xbf16> to vector<32x64xbf16>
    %cst_19 = arith.constant dense<0.000000e+00> : vector<8x64xf32>
    %38 = tpu.matmul %36, %37, %cst_19 {dimension_numbers = #tpu.dot_dimension_numbers<[1], [0], [0], [1], [0, 0, 1, 1], [], []>} : vector<8x32xbf16>, vector<32x64xbf16>, vector<8x64xf32> -> vector<8x64xf32>
    %39 = vector.extract_strided_slice %26 {offsets = [0, 32], sizes = [1, 64], strides = [1, 1]} : vector<1x96xf32> to vector<1x64xf32>
    %40 = vector.broadcast %39 : vector<1x64xf32> to vector<8x64xf32>
    %41 = arith.addf %38, %40 : vector<8x64xf32>
    %c0_20 = arith.constant 0 : index
    %c0_21 = arith.constant 0 : index
    %c0_22 = arith.constant 0 : index
    %42 = vector.load %arg4[%c0_20, %c0_21, %c0_22] : memref<1x1x8xi8, #tpu.memory_space<vmem>>, vector<1x1x8xi8>
    %43 = vector.shape_cast %42 : vector<1x1x8xi8> to vector<1x8xi8>
    %44 = arith.extsi %43 : vector<1x8xi8> to vector<1x8xi32>
    %c0_i32 = arith.constant 0 : i32
    %45 = vector.broadcast %c0_i32 : i32 to vector<1x8xi32>
    %46 = arith.cmpi eq, %44, %45 : vector<1x8xi32>
    %47 = vector.extract_strided_slice %41 {offsets = [0, 0], sizes = [8, 32], strides = [1, 1]} : vector<8x64xf32> to vector<8x32xf32>
    %48 = vector.extract_strided_slice %41 {offsets = [0, 32], sizes = [8, 32], strides = [1, 1]} : vector<8x64xf32> to vector<8x32xf32>
    %c0_23 = arith.constant 0 : index
    %c0_24 = arith.constant 0 : index
    %49 = vector.load %arg9[%c0_23, %c0_24] : memref<32x32xbf16, #tpu.memory_space<vmem>>, vector<32x32xbf16>
    %50 = arith.truncf %33 : vector<8x32xf32> to vector<8x32xbf16>
    %51 = arith.truncf %47 : vector<8x32xf32> to vector<8x32xbf16>
    %52 = arith.truncf %48 : vector<8x32xf32> to vector<8x32xbf16>
    %cst_25 = arith.constant 0.000000e+00 : f32
    %53 = vector.broadcast %cst_25 : f32 to vector<8x32xf32>
    %54 = vector.extract_strided_slice %50 {offsets = [0, 0], sizes = [8, 8], strides = [1, 1]} : vector<8x32xbf16> to vector<8x8xbf16>
    %55 = vector.extract_strided_slice %51 {offsets = [0, 0], sizes = [8, 8], strides = [1, 1]} : vector<8x32xbf16> to vector<8x8xbf16>
    %cst_26 = arith.constant dense<0.000000e+00> : vector<8x8xf32>
    %56 = tpu.matmul %54, %55, %cst_26 {dimension_numbers = #tpu.dot_dimension_numbers<[1], [1], [0], [0], [0, 0, 1, 0], [], []>} : vector<8x8xbf16>, vector<8x8xbf16>, vector<8x8xf32> -> vector<8x8xf32>
    %cst_27 = arith.constant -1.000000e+09 : f32
    %57 = vector.shape_cast %46 : vector<1x8xi1> to vector<1x8xi1>
    %58 = vector.broadcast %57 : vector<1x8xi1> to vector<8x8xi1>
    %59 = vector.broadcast %cst_27 : f32 to vector<8x8xf32>
    %60 = arith.select %58, %59, %56 : vector<8x8xi1>, vector<8x8xf32>
    %cst_28 = arith.constant dense<0xFF800000> : vector<8xf32>
    %61 = vector.multi_reduction <maximumf>, %60, %cst_28 [1] : vector<8x8xf32> to vector<8xf32>
    %62 = vector.shape_cast %61 : vector<8xf32> to vector<8x1xf32>
    %63 = vector.broadcast %62 : vector<8x1xf32> to vector<8x8xf32>
    %64 = arith.subf %60, %63 : vector<8x8xf32>
    %65 = math.exp %64 : vector<8x8xf32>
    %cst_29 = arith.constant dense<0.000000e+00> : vector<8xf32>
    %66 = vector.multi_reduction <add>, %65, %cst_29 [1] : vector<8x8xf32> to vector<8xf32>
    %67 = vector.shape_cast %66 : vector<8xf32> to vector<8x1xf32>
    %68 = tpu.reciprocal %67 {approx = true} : vector<8x1xf32> -> vector<8x1xf32>
    %69 = vector.broadcast %68 : vector<8x1xf32> to vector<8x8xf32>
    %70 = arith.mulf %65, %69 : vector<8x8xf32>
    %71 = arith.truncf %70 : vector<8x8xf32> to vector<8x8xbf16>
    %72 = vector.extract_strided_slice %52 {offsets = [0, 0], sizes = [8, 8], strides = [1, 1]} : vector<8x32xbf16> to vector<8x8xbf16>
    %cst_30 = arith.constant dense<0.000000e+00> : vector<8x8xf32>
    %73 = tpu.matmul %71, %72, %cst_30 {dimension_numbers = #tpu.dot_dimension_numbers<[1], [0], [0], [1], [0, 0, 1, 1], [], []>} : vector<8x8xbf16>, vector<8x8xbf16>, vector<8x8xf32> -> vector<8x8xf32>
    %74 = arith.truncf %73 : vector<8x8xf32> to vector<8x8xbf16>
    %75 = vector.extract_strided_slice %49 {offsets = [0, 0], sizes = [8, 32], strides = [1, 1]} : vector<32x32xbf16> to vector<8x32xbf16>
    %cst_31 = arith.constant dense<0.000000e+00> : vector<8x32xf32>
    %76 = tpu.matmul %74, %75, %cst_31 {dimension_numbers = #tpu.dot_dimension_numbers<[1], [0], [0], [1], [0, 0, 1, 1], [], []>} : vector<8x8xbf16>, vector<8x32xbf16>, vector<8x32xf32> -> vector<8x32xf32>
    %77 = arith.addf %53, %76 : vector<8x32xf32>
    %78 = vector.extract_strided_slice %50 {offsets = [0, 8], sizes = [8, 8], strides = [1, 1]} : vector<8x32xbf16> to vector<8x8xbf16>
    %79 = vector.extract_strided_slice %51 {offsets = [0, 8], sizes = [8, 8], strides = [1, 1]} : vector<8x32xbf16> to vector<8x8xbf16>
    %cst_32 = arith.constant dense<0.000000e+00> : vector<8x8xf32>
    %80 = tpu.matmul %78, %79, %cst_32 {dimension_numbers = #tpu.dot_dimension_numbers<[1], [1], [0], [0], [0, 0, 1, 0], [], []>} : vector<8x8xbf16>, vector<8x8xbf16>, vector<8x8xf32> -> vector<8x8xf32>
    %cst_33 = arith.constant -1.000000e+09 : f32
    %81 = vector.shape_cast %46 : vector<1x8xi1> to vector<1x8xi1>
    %82 = vector.broadcast %81 : vector<1x8xi1> to vector<8x8xi1>
    %83 = vector.broadcast %cst_33 : f32 to vector<8x8xf32>
    %84 = arith.select %82, %83, %80 : vector<8x8xi1>, vector<8x8xf32>
    %cst_34 = arith.constant dense<0xFF800000> : vector<8xf32>
    %85 = vector.multi_reduction <maximumf>, %84, %cst_34 [1] : vector<8x8xf32> to vector<8xf32>
    %86 = vector.shape_cast %85 : vector<8xf32> to vector<8x1xf32>
    %87 = vector.broadcast %86 : vector<8x1xf32> to vector<8x8xf32>
    %88 = arith.subf %84, %87 : vector<8x8xf32>
    %89 = math.exp %88 : vector<8x8xf32>
    %cst_35 = arith.constant dense<0.000000e+00> : vector<8xf32>
    %90 = vector.multi_reduction <add>, %89, %cst_35 [1] : vector<8x8xf32> to vector<8xf32>
    %91 = vector.shape_cast %90 : vector<8xf32> to vector<8x1xf32>
    %92 = tpu.reciprocal %91 {approx = true} : vector<8x1xf32> -> vector<8x1xf32>
    %93 = vector.broadcast %92 : vector<8x1xf32> to vector<8x8xf32>
    %94 = arith.mulf %89, %93 : vector<8x8xf32>
    %95 = arith.truncf %94 : vector<8x8xf32> to vector<8x8xbf16>
    %96 = vector.extract_strided_slice %52 {offsets = [0, 8], sizes = [8, 8], strides = [1, 1]} : vector<8x32xbf16> to vector<8x8xbf16>
    %cst_36 = arith.constant dense<0.000000e+00> : vector<8x8xf32>
    %97 = tpu.matmul %95, %96, %cst_36 {dimension_numbers = #tpu.dot_dimension_numbers<[1], [0], [0], [1], [0, 0, 1, 1], [], []>} : vector<8x8xbf16>, vector<8x8xbf16>, vector<8x8xf32> -> vector<8x8xf32>
    %98 = arith.truncf %97 : vector<8x8xf32> to vector<8x8xbf16>
    %99 = vector.extract_strided_slice %49 {offsets = [8, 0], sizes = [8, 32], strides = [1, 1]} : vector<32x32xbf16> to vector<8x32xbf16>
    %cst_37 = arith.constant dense<0.000000e+00> : vector<8x32xf32>
    %100 = tpu.matmul %98, %99, %cst_37 {dimension_numbers = #tpu.dot_dimension_numbers<[1], [0], [0], [1], [0, 0, 1, 1], [], []>} : vector<8x8xbf16>, vector<8x32xbf16>, vector<8x32xf32> -> vector<8x32xf32>
    %101 = arith.addf %77, %100 : vector<8x32xf32>
    %102 = vector.extract_strided_slice %50 {offsets = [0, 16], sizes = [8, 8], strides = [1, 1]} : vector<8x32xbf16> to vector<8x8xbf16>
    %103 = vector.extract_strided_slice %51 {offsets = [0, 16], sizes = [8, 8], strides = [1, 1]} : vector<8x32xbf16> to vector<8x8xbf16>
    %cst_38 = arith.constant dense<0.000000e+00> : vector<8x8xf32>
    %104 = tpu.matmul %102, %103, %cst_38 {dimension_numbers = #tpu.dot_dimension_numbers<[1], [1], [0], [0], [0, 0, 1, 0], [], []>} : vector<8x8xbf16>, vector<8x8xbf16>, vector<8x8xf32> -> vector<8x8xf32>
    %cst_39 = arith.constant -1.000000e+09 : f32
    %105 = vector.shape_cast %46 : vector<1x8xi1> to vector<1x8xi1>
    %106 = vector.broadcast %105 : vector<1x8xi1> to vector<8x8xi1>
    %107 = vector.broadcast %cst_39 : f32 to vector<8x8xf32>
    %108 = arith.select %106, %107, %104 : vector<8x8xi1>, vector<8x8xf32>
    %cst_40 = arith.constant dense<0xFF800000> : vector<8xf32>
    %109 = vector.multi_reduction <maximumf>, %108, %cst_40 [1] : vector<8x8xf32> to vector<8xf32>
    %110 = vector.shape_cast %109 : vector<8xf32> to vector<8x1xf32>
    %111 = vector.broadcast %110 : vector<8x1xf32> to vector<8x8xf32>
    %112 = arith.subf %108, %111 : vector<8x8xf32>
    %113 = math.exp %112 : vector<8x8xf32>
    %cst_41 = arith.constant dense<0.000000e+00> : vector<8xf32>
    %114 = vector.multi_reduction <add>, %113, %cst_41 [1] : vector<8x8xf32> to vector<8xf32>
    %115 = vector.shape_cast %114 : vector<8xf32> to vector<8x1xf32>
    %116 = tpu.reciprocal %115 {approx = true} : vector<8x1xf32> -> vector<8x1xf32>
    %117 = vector.broadcast %116 : vector<8x1xf32> to vector<8x8xf32>
    %118 = arith.mulf %113, %117 : vector<8x8xf32>
    %119 = arith.truncf %118 : vector<8x8xf32> to vector<8x8xbf16>
    %120 = vector.extract_strided_slice %52 {offsets = [0, 16], sizes = [8, 8], strides = [1, 1]} : vector<8x32xbf16> to vector<8x8xbf16>
    %cst_42 = arith.constant dense<0.000000e+00> : vector<8x8xf32>
    %121 = tpu.matmul %119, %120, %cst_42 {dimension_numbers = #tpu.dot_dimension_numbers<[1], [0], [0], [1], [0, 0, 1, 1], [], []>} : vector<8x8xbf16>, vector<8x8xbf16>, vector<8x8xf32> -> vector<8x8xf32>
    %122 = arith.truncf %121 : vector<8x8xf32> to vector<8x8xbf16>
    %123 = vector.extract_strided_slice %49 {offsets = [16, 0], sizes = [8, 32], strides = [1, 1]} : vector<32x32xbf16> to vector<8x32xbf16>
    %cst_43 = arith.constant dense<0.000000e+00> : vector<8x32xf32>
    %124 = tpu.matmul %122, %123, %cst_43 {dimension_numbers = #tpu.dot_dimension_numbers<[1], [0], [0], [1], [0, 0, 1, 1], [], []>} : vector<8x8xbf16>, vector<8x32xbf16>, vector<8x32xf32> -> vector<8x32xf32>
    %125 = arith.addf %101, %124 : vector<8x32xf32>
    %126 = vector.extract_strided_slice %50 {offsets = [0, 24], sizes = [8, 8], strides = [1, 1]} : vector<8x32xbf16> to vector<8x8xbf16>
    %127 = vector.extract_strided_slice %51 {offsets = [0, 24], sizes = [8, 8], strides = [1, 1]} : vector<8x32xbf16> to vector<8x8xbf16>
    %cst_44 = arith.constant dense<0.000000e+00> : vector<8x8xf32>
    %128 = tpu.matmul %126, %127, %cst_44 {dimension_numbers = #tpu.dot_dimension_numbers<[1], [1], [0], [0], [0, 0, 1, 0], [], []>} : vector<8x8xbf16>, vector<8x8xbf16>, vector<8x8xf32> -> vector<8x8xf32>
    %cst_45 = arith.constant -1.000000e+09 : f32
    %129 = vector.shape_cast %46 : vector<1x8xi1> to vector<1x8xi1>
    %130 = vector.broadcast %129 : vector<1x8xi1> to vector<8x8xi1>
    %131 = vector.broadcast %cst_45 : f32 to vector<8x8xf32>
    %132 = arith.select %130, %131, %128 : vector<8x8xi1>, vector<8x8xf32>
    %cst_46 = arith.constant dense<0xFF800000> : vector<8xf32>
    %133 = vector.multi_reduction <maximumf>, %132, %cst_46 [1] : vector<8x8xf32> to vector<8xf32>
    %134 = vector.shape_cast %133 : vector<8xf32> to vector<8x1xf32>
    %135 = vector.broadcast %134 : vector<8x1xf32> to vector<8x8xf32>
    %136 = arith.subf %132, %135 : vector<8x8xf32>
    %137 = math.exp %136 : vector<8x8xf32>
    %cst_47 = arith.constant dense<0.000000e+00> : vector<8xf32>
    %138 = vector.multi_reduction <add>, %137, %cst_47 [1] : vector<8x8xf32> to vector<8xf32>
    %139 = vector.shape_cast %138 : vector<8xf32> to vector<8x1xf32>
    %140 = tpu.reciprocal %139 {approx = true} : vector<8x1xf32> -> vector<8x1xf32>
    %141 = vector.broadcast %140 : vector<8x1xf32> to vector<8x8xf32>
    %142 = arith.mulf %137, %141 : vector<8x8xf32>
    %143 = arith.truncf %142 : vector<8x8xf32> to vector<8x8xbf16>
    %144 = vector.extract_strided_slice %52 {offsets = [0, 24], sizes = [8, 8], strides = [1, 1]} : vector<8x32xbf16> to vector<8x8xbf16>
    %cst_48 = arith.constant dense<0.000000e+00> : vector<8x8xf32>
    %145 = tpu.matmul %143, %144, %cst_48 {dimension_numbers = #tpu.dot_dimension_numbers<[1], [0], [0], [1], [0, 0, 1, 1], [], []>} : vector<8x8xbf16>, vector<8x8xbf16>, vector<8x8xf32> -> vector<8x8xf32>
    %146 = arith.truncf %145 : vector<8x8xf32> to vector<8x8xbf16>
    %147 = vector.extract_strided_slice %49 {offsets = [24, 0], sizes = [8, 32], strides = [1, 1]} : vector<32x32xbf16> to vector<8x32xbf16>
    %cst_49 = arith.constant dense<0.000000e+00> : vector<8x32xf32>
    %148 = tpu.matmul %146, %147, %cst_49 {dimension_numbers = #tpu.dot_dimension_numbers<[1], [0], [0], [1], [0, 0, 1, 1], [], []>} : vector<8x8xbf16>, vector<8x32xbf16>, vector<8x32xf32> -> vector<8x32xf32>
    %149 = arith.addf %125, %148 : vector<8x32xf32>
    %c0_50 = arith.constant 0 : index
    %c0_51 = arith.constant 0 : index
    %150 = vector.load %arg10[%c0_50, %c0_51] : memref<1x32xf32, #tpu.memory_space<vmem>>, vector<1x32xf32>
    %151 = vector.broadcast %150 : vector<1x32xf32> to vector<8x32xf32>
    %152 = arith.addf %149, %151 : vector<8x32xf32>
    %153 = arith.addf %152, %1 : vector<8x32xf32>
    %c0_52 = arith.constant 0 : index
    %c0_53 = arith.constant 0 : index
    %c0_54 = arith.constant 0 : index
    %154 = vector.load %arg11[%c0_52, %c0_53, %c0_54] : memref<1x8x32xf32, #tpu.memory_space<vmem>>, vector<1x8x32xf32>
    %155 = vector.shape_cast %154 : vector<1x8x32xf32> to vector<8x32xf32>
    %156 = vector.shape_cast %153 : vector<8x32xf32> to vector<1x8x32xf32>
    tpu.vector_store %arg11[%c0_52, %c0_53, %c0_54], %156 {strides = array<i32>} : memref<1x8x32xf32, #tpu.memory_space<vmem>>, vector<1x8x32xf32>,
    return
  }
  func.func @transform_0(%arg0: i32, %arg1: i32) -> (i32, i32, i32) {
    %c0_i32 = arith.constant 0 : i32
    %c0_i32_0 = arith.constant 0 : i32
    return %arg0, %arg1, %c0_i32 : i32, i32, i32
  }
  func.func @transform_1(%arg0: i32, %arg1: i32) -> (i32, i32, i32) {
    %c0_i32 = arith.constant 0 : i32
    %c0_i32_0 = arith.constant 0 : i32
    %c0_i32_1 = arith.constant 0 : i32
    return %arg0, %c0_i32, %c0_i32_0 : i32, i32, i32
  }
  func.func @transform_2(%arg0: i32, %arg1: i32) -> (i32, i32, i32) {
    %c0_i32 = arith.constant 0 : i32
    %c0_i32_0 = arith.constant 0 : i32
    %c0_i32_1 = arith.constant 0 : i32
    return %arg0, %c0_i32, %c0_i32_0 : i32, i32, i32
  }
  func.func @transform_3(%arg0: i32, %arg1: i32) -> (i32, i32) {
    %c0_i32 = arith.constant 0 : i32
    %c0_i32_0 = arith.constant 0 : i32
    %c0_i32_1 = arith.constant 0 : i32
    return %c0_i32, %c0_i32_0 : i32, i32
  }
  func.func @transform_4(%arg0: i32, %arg1: i32) -> (i32, i32) {
    %c0_i32 = arith.constant 0 : i32
    %c0_i32_0 = arith.constant 0 : i32
    %c0_i32_1 = arith.constant 0 : i32
    return %c0_i32, %c0_i32_0 : i32, i32
  }
  func.func @transform_5(%arg0: i32, %arg1: i32) -> (i32, i32) {
    %c0_i32 = arith.constant 0 : i32
    %c0_i32_0 = arith.constant 0 : i32
    %c0_i32_1 = arith.constant 0 : i32
    return %c0_i32, %c0_i32_0 : i32, i32
  }
  func.func @transform_6(%arg0: i32, %arg1: i32) -> (i32, i32) {
    %c0_i32 = arith.constant 0 : i32
    %c0_i32_0 = arith.constant 0 : i32
    %c0_i32_1 = arith.constant 0 : i32
    return %c0_i32, %c0_i32_0 : i32, i32
  }
  func.func @transform_7(%arg0: i32, %arg1: i32) -> (i32, i32) {
    %c0_i32 = arith.constant 0 : i32
    %c0_i32_0 = arith.constant 0 : i32
    %c0_i32_1 = arith.constant 0 : i32
    return %c0_i32, %c0_i32_0 : i32, i32
  }
  func.func @transform_8(%arg0: i32, %arg1: i32) -> (i32, i32) {
    %c0_i32 = arith.constant 0 : i32
    %c0_i32_0 = arith.constant 0 : i32
    %c0_i32_1 = arith.constant 0 : i32
    return %c0_i32, %c0_i32_0 : i32, i32
  }
  func.func @transform_9(%arg0: i32, %arg1: i32) -> (i32, i32, i32) {
    %c0_i32 = arith.constant 0 : i32
    %c0_i32_0 = arith.constant 0 : i32
    return %arg0, %arg1, %c0_i32 : i32, i32, i32
  }
}

module attributes {stable_mosaic.version = 11 : i64} {
  func.func @_ffn_kernel(%arg0: i32, %arg1: memref<16x32xf32, #tpu.memory_space<vmem>>, %arg2: memref<1x32xf32, #tpu.memory_space<vmem>>, %arg3: memref<1x32xf32, #tpu.memory_space<vmem>>, %arg4: memref<32x64xbf16, #tpu.memory_space<vmem>>, %arg5: memref<1x64xf32, #tpu.memory_space<vmem>>, %arg6: memref<64x32xbf16, #tpu.memory_space<vmem>>, %arg7: memref<1x32xf32, #tpu.memory_space<vmem>>, %arg8: memref<1x32xf32, #tpu.memory_space<vmem>>, %arg9: memref<1x32xf32, #tpu.memory_space<vmem>>, %arg10: memref<16x32xf32, #tpu.memory_space<vmem>>) attributes {dimension_semantics = [#tpu.dimension_semantics<parallel>], iteration_bounds = array<i64: 1>, scalar_prefetch = 0 : i64, scratch_operands = 0 : i64, tpu.core_type = #tpu.core_type<tc>, window_params = [{transform_indices = @transform_0, window_bounds = array<i64: 16, 32>}, {pipeline_mode = #tpu.pipeline_mode<synchronous>, transform_indices = @transform_1, window_bounds = array<i64: 1, 32>}, {pipeline_mode = #tpu.pipeline_mode<synchronous>, transform_indices = @transform_2, window_bounds = array<i64: 1, 32>}, {pipeline_mode = #tpu.pipeline_mode<synchronous>, transform_indices = @transform_3, window_bounds = array<i64: 32, 64>}, {pipeline_mode = #tpu.pipeline_mode<synchronous>, transform_indices = @transform_4, window_bounds = array<i64: 1, 64>}, {pipeline_mode = #tpu.pipeline_mode<synchronous>, transform_indices = @transform_5, window_bounds = array<i64: 64, 32>}, {pipeline_mode = #tpu.pipeline_mode<synchronous>, transform_indices = @transform_6, window_bounds = array<i64: 1, 32>}, {pipeline_mode = #tpu.pipeline_mode<synchronous>, transform_indices = @transform_7, window_bounds = array<i64: 1, 32>}, {pipeline_mode = #tpu.pipeline_mode<synchronous>, transform_indices = @transform_8, window_bounds = array<i64: 1, 32>}, {transform_indices = @transform_9, window_bounds = array<i64: 16, 32>}]} {
    %c0 = arith.constant 0 : index
    %c0_0 = arith.constant 0 : index
    %0 = vector.load %arg1[%c0, %c0_0] : memref<16x32xf32, #tpu.memory_space<vmem>>, vector<16x32xf32>
    %c0_1 = arith.constant 0 : index
    %c0_2 = arith.constant 0 : index
    %1 = vector.load %arg2[%c0_1, %c0_2] : memref<1x32xf32, #tpu.memory_space<vmem>>, vector<1x32xf32>
    %c0_3 = arith.constant 0 : index
    %c0_4 = arith.constant 0 : index
    %2 = vector.load %arg3[%c0_3, %c0_4] : memref<1x32xf32, #tpu.memory_space<vmem>>, vector<1x32xf32>
    %cst = arith.constant dense<0.000000e+00> : vector<16xf32>
    %3 = vector.multi_reduction <add>, %0, %cst [1] : vector<16x32xf32> to vector<16xf32>
    %4 = vector.shape_cast %3 : vector<16xf32> to vector<16x1xf32>
    %cst_5 = arith.constant 3.200000e+01 : f32
    %5 = vector.broadcast %cst_5 : f32 to vector<16x1xf32>
    %6 = arith.divf %4, %5 : vector<16x1xf32>
    %7 = vector.broadcast %6 : vector<16x1xf32> to vector<16x32xf32>
    %8 = arith.subf %0, %7 : vector<16x32xf32>
    %9 = arith.mulf %8, %8 : vector<16x32xf32>
    %cst_6 = arith.constant dense<0.000000e+00> : vector<16xf32>
    %10 = vector.multi_reduction <add>, %9, %cst_6 [1] : vector<16x32xf32> to vector<16xf32>
    %11 = vector.shape_cast %10 : vector<16xf32> to vector<16x1xf32>
    %cst_7 = arith.constant 0.0322580636 : f32
    %12 = vector.broadcast %cst_7 : f32 to vector<16x1xf32>
    %13 = arith.mulf %11, %12 : vector<16x1xf32>
    %14 = math.sqrt %13 : vector<16x1xf32>
    %15 = vector.broadcast %1 : vector<1x32xf32> to vector<16x32xf32>
    %16 = arith.mulf %15, %8 : vector<16x32xf32>
    %cst_8 = arith.constant 9.99999997E-7 : f32
    %17 = vector.broadcast %cst_8 : f32 to vector<16x1xf32>
    %18 = arith.addf %14, %17 : vector<16x1xf32>
    %19 = vector.broadcast %18 : vector<16x1xf32> to vector<16x32xf32>
    %20 = arith.divf %16, %19 : vector<16x32xf32>
    %21 = vector.broadcast %2 : vector<1x32xf32> to vector<16x32xf32>
    %22 = arith.addf %20, %21 : vector<16x32xf32>
    %23 = arith.truncf %22 : vector<16x32xf32> to vector<16x32xbf16>
    %c0_9 = arith.constant 0 : index
    %c0_10 = arith.constant 0 : index
    %24 = vector.load %arg4[%c0_9, %c0_10] : memref<32x64xbf16, #tpu.memory_space<vmem>>, vector<32x64xbf16>
    %cst_11 = arith.constant dense<0.000000e+00> : vector<16x64xf32>
    %25 = tpu.matmul %23, %24, %cst_11 {dimension_numbers = #tpu.dot_dimension_numbers<[1], [0], [0], [1], [0, 0, 1, 1], [], []>} : vector<16x32xbf16>, vector<32x64xbf16>, vector<16x64xf32> -> vector<16x64xf32>
    %c0_12 = arith.constant 0 : index
    %c0_13 = arith.constant 0 : index
    %26 = vector.load %arg5[%c0_12, %c0_13] : memref<1x64xf32, #tpu.memory_space<vmem>>, vector<1x64xf32>
    %27 = vector.broadcast %26 : vector<1x64xf32> to vector<16x64xf32>
    %28 = arith.addf %25, %27 : vector<16x64xf32>
    %cst_14 = arith.constant 0.000000e+00 : f32
    %29 = vector.broadcast %cst_14 : f32 to vector<16x64xf32>
    %30 = arith.maximumf %28, %29 : vector<16x64xf32>
    %31 = arith.truncf %30 : vector<16x64xf32> to vector<16x64xbf16>
    %c0_15 = arith.constant 0 : index
    %c0_16 = arith.constant 0 : index
    %32 = vector.load %arg6[%c0_15, %c0_16] : memref<64x32xbf16, #tpu.memory_space<vmem>>, vector<64x32xbf16>
    %cst_17 = arith.constant dense<0.000000e+00> : vector<16x32xf32>
    %33 = tpu.matmul %31, %32, %cst_17 {dimension_numbers = #tpu.dot_dimension_numbers<[1], [0], [0], [1], [0, 0, 1, 1], [], []>} : vector<16x64xbf16>, vector<64x32xbf16>, vector<16x32xf32> -> vector<16x32xf32>
    %c0_18 = arith.constant 0 : index
    %c0_19 = arith.constant 0 : index
    %34 = vector.load %arg7[%c0_18, %c0_19] : memref<1x32xf32, #tpu.memory_space<vmem>>, vector<1x32xf32>
    %35 = vector.broadcast %34 : vector<1x32xf32> to vector<16x32xf32>
    %36 = arith.addf %33, %35 : vector<16x32xf32>
    %37 = arith.addf %36, %0 : vector<16x32xf32>
    %c0_20 = arith.constant 0 : index
    %c0_21 = arith.constant 0 : index
    %38 = vector.load %arg8[%c0_20, %c0_21] : memref<1x32xf32, #tpu.memory_space<vmem>>, vector<1x32xf32>
    %c0_22 = arith.constant 0 : index
    %c0_23 = arith.constant 0 : index
    %39 = vector.load %arg9[%c0_22, %c0_23] : memref<1x32xf32, #tpu.memory_space<vmem>>, vector<1x32xf32>
    %cst_24 = arith.constant dense<0.000000e+00> : vector<16xf32>
    %40 = vector.multi_reduction <add>, %37, %cst_24 [1] : vector<16x32xf32> to vector<16xf32>
    %41 = vector.shape_cast %40 : vector<16xf32> to vector<16x1xf32>
    %cst_25 = arith.constant 3.200000e+01 : f32
    %42 = vector.broadcast %cst_25 : f32 to vector<16x1xf32>
    %43 = arith.divf %41, %42 : vector<16x1xf32>
    %44 = vector.broadcast %43 : vector<16x1xf32> to vector<16x32xf32>
    %45 = arith.subf %37, %44 : vector<16x32xf32>
    %46 = arith.mulf %45, %45 : vector<16x32xf32>
    %cst_26 = arith.constant dense<0.000000e+00> : vector<16xf32>
    %47 = vector.multi_reduction <add>, %46, %cst_26 [1] : vector<16x32xf32> to vector<16xf32>
    %48 = vector.shape_cast %47 : vector<16xf32> to vector<16x1xf32>
    %cst_27 = arith.constant 0.0322580636 : f32
    %49 = vector.broadcast %cst_27 : f32 to vector<16x1xf32>
    %50 = arith.mulf %48, %49 : vector<16x1xf32>
    %51 = math.sqrt %50 : vector<16x1xf32>
    %52 = vector.broadcast %38 : vector<1x32xf32> to vector<16x32xf32>
    %53 = arith.mulf %52, %45 : vector<16x32xf32>
    %cst_28 = arith.constant 9.99999997E-7 : f32
    %54 = vector.broadcast %cst_28 : f32 to vector<16x1xf32>
    %55 = arith.addf %51, %54 : vector<16x1xf32>
    %56 = vector.broadcast %55 : vector<16x1xf32> to vector<16x32xf32>
    %57 = arith.divf %53, %56 : vector<16x32xf32>
    %58 = vector.broadcast %39 : vector<1x32xf32> to vector<16x32xf32>
    %59 = arith.addf %57, %58 : vector<16x32xf32>
    %c0_29 = arith.constant 0 : index
    %c0_30 = arith.constant 0 : index
    %60 = vector.load %arg10[%c0_29, %c0_30] : memref<16x32xf32, #tpu.memory_space<vmem>>, vector<16x32xf32>
    tpu.vector_store %arg10[%c0_29, %c0_30], %59 {strides = array<i32>} : memref<16x32xf32, #tpu.memory_space<vmem>>, vector<16x32xf32>,
    return
  }
  func.func @transform_0(%arg0: i32) -> (i32, i32) {
    %c0_i32 = arith.constant 0 : i32
    %c0_i32_0 = arith.constant 0 : i32
    return %arg0, %c0_i32 : i32, i32
  }
  func.func @transform_1(%arg0: i32) -> (i32, i32) {
    %c0_i32 = arith.constant 0 : i32
    %c0_i32_0 = arith.constant 0 : i32
    %c0_i32_1 = arith.constant 0 : i32
    return %c0_i32, %c0_i32_0 : i32, i32
  }
  func.func @transform_2(%arg0: i32) -> (i32, i32) {
    %c0_i32 = arith.constant 0 : i32
    %c0_i32_0 = arith.constant 0 : i32
    %c0_i32_1 = arith.constant 0 : i32
    return %c0_i32, %c0_i32_0 : i32, i32
  }
  func.func @transform_3(%arg0: i32) -> (i32, i32) {
    %c0_i32 = arith.constant 0 : i32
    %c0_i32_0 = arith.constant 0 : i32
    %c0_i32_1 = arith.constant 0 : i32
    return %c0_i32, %c0_i32_0 : i32, i32
  }
  func.func @transform_4(%arg0: i32) -> (i32, i32) {
    %c0_i32 = arith.constant 0 : i32
    %c0_i32_0 = arith.constant 0 : i32
    %c0_i32_1 = arith.constant 0 : i32
    return %c0_i32, %c0_i32_0 : i32, i32
  }
  func.func @transform_5(%arg0: i32) -> (i32, i32) {
    %c0_i32 = arith.constant 0 : i32
    %c0_i32_0 = arith.constant 0 : i32
    %c0_i32_1 = arith.constant 0 : i32
    return %c0_i32, %c0_i32_0 : i32, i32
  }
  func.func @transform_6(%arg0: i32) -> (i32, i32) {
    %c0_i32 = arith.constant 0 : i32
    %c0_i32_0 = arith.constant 0 : i32
    %c0_i32_1 = arith.constant 0 : i32
    return %c0_i32, %c0_i32_0 : i32, i32
  }
  func.func @transform_7(%arg0: i32) -> (i32, i32) {
    %c0_i32 = arith.constant 0 : i32
    %c0_i32_0 = arith.constant 0 : i32
    %c0_i32_1 = arith.constant 0 : i32
    return %c0_i32, %c0_i32_0 : i32, i32
  }
  func.func @transform_8(%arg0: i32) -> (i32, i32) {
    %c0_i32 = arith.constant 0 : i32
    %c0_i32_0 = arith.constant 0 : i32
    %c0_i32_1 = arith.constant 0 : i32
    return %c0_i32, %c0_i32_0 : i32, i32
  }
  func.func @transform_9(%arg0: i32) -> (i32, i32) {
    %c0_i32 = arith.constant 0 : i32
    %c0_i32_0 = arith.constant 0 : i32
    return %arg0, %c0_i32 : i32, i32
  }
}

</mosaic_0001>

<llo_original>
// kernel: decoder_forward.8
$region0: #{decoder_forward.8}
  #allocation0 [shape = 'u32[]', space=smem, size = 0x4, offset = 0x4, fixed_abs, tag = 'smem constant byte address 0x4 - core index']
  #allocation1 [shape = 'u32[144,128]{1,0:T(1,128)}', space=vmem, size = 0x12000, scoped, tag = 'internal scratch']
  %s0 = inlined_call_operand.hbm [shape: f32[16,32], index: 0, kind: input, shape index: {}, may-alias: {0,7}]
  %s1 = inlined_call_operand.hbm [shape: f32[1,32], index: 1, kind: input, shape index: {}]
  %s2 = inlined_call_operand.hbm [shape: f32[1,32], index: 2, kind: input, shape index: {}]
  %s3 = inlined_call_operand.hbm [shape: bf16[32,64], index: 3, kind: input, shape index: {}]
  %s4 = inlined_call_operand.hbm [shape: f32[1,64], index: 4, kind: input, shape index: {}]
  %s5 = inlined_call_operand.hbm [shape: bf16[64,32], index: 5, kind: input, shape index: {}]
  %s6 = inlined_call_operand.hbm [shape: f32[1,32], index: 6, kind: input, shape index: {}]
  %s7 = inlined_call_operand.hbm [shape: f32[16,32], index: 7, kind: output, shape index: {}, may-alias: {0,7}]
  %s8 = sld [smem:[#allocation0]]
  $region66: #{decoder_forward.8} parent=0
    _
  %s10 = ssub.s32 1, %s8
  %s11 = scalar_select 0, %s10, %s8
  $region1: #{decoder_forward.8} parent=0
    #allocation2 [shape = 'u8[8192]{0}', space=vmem, size = 0x2000, scoped, tag = 'input window, operand 0, single buffered']
    #allocation3 [shape = 's32[1]{0}', space=sflag, size = 0x4, scoped, tag = 'scoped memory for decoder_forward.8']
    #allocation4 [shape = 's32[1]{0}', space=sflag, size = 0x4, scoped, tag = 'scoped memory for decoder_forward.8']
    #allocation5 [shape = 'u8[512]{0}', space=vmem, size = 0x400, scoped, tag = 'input window, operand 1, single buffered']
    #allocation6 [shape = 's32[1]{0}', space=sflag, size = 0x4, scoped, tag = 'scoped memory for decoder_forward.8']
    #allocation7 [shape = 'u8[512]{0}', space=vmem, size = 0x400, scoped, tag = 'input window, operand 2, single buffered']
    #allocation8 [shape = 'u8[8192]{0}', space=vmem, size = 0x2000, scoped, tag = 'input window, operand 3, single buffered']
    #allocation9 [shape = 's32[1]{0}', space=sflag, size = 0x4, scoped, tag = 'scoped memory for decoder_forward.8']
    #allocation10 [shape = 'u8[512]{0}', space=vmem, size = 0x400, scoped, tag = 'input window, operand 4, single buffered']
    #allocation11 [shape = 'u8[16384]{0}', space=vmem, size = 0x4000, scoped, tag = 'input window, operand 5, single buffered']
    #allocation12 [shape = 's32[1]{0}', space=sflag, size = 0x4, scoped, tag = 'scoped memory for decoder_forward.8']
    #allocation13 [shape = 'u8[512]{0}', space=vmem, size = 0x400, scoped, tag = 'input window, operand 6, single buffered']
    #allocation14 [shape = 'u8[8192]{0}', space=vmem, size = 0x2000, scoped, tag = 'output window, operand 0, single buffered']
    %12 = vsyncpa [#allocation3], 0
    %13 = vsyncpa [#allocation6], 0
    %14 = vsyncpa [#allocation9], 0
    %15 = vsyncpa [#allocation12], 0
    %16 = vsyncpa [#allocation4], 0
    // Predicated region
    $region2: #{decoder_forward.8} parent=1 // pred_check
      _
    $region3: #{decoder_forward.8} parent=1 // pred_check_branch
      %18 = sbr.rel (0) target = $region5
    $region4: #{decoder_forward.8} parent=1 // pred_region
      %s20 = ssub.s32 256, 256
      %21 = vsyncadd [#allocation3], %s20
      %s22 = sshll.u32 [#allocation2], 4
      %s23 = int_to_ptr.vmem [resolvable:$true] %s22
      %28 = dma.hbm_to_vmem [thread:$0]  %s0, 256, %s23, [#allocation3], 128, 128, 8
    $region5: #{decoder_forward.8} parent=1 // pred_fallthru
      _
    // Predicated region
    $region6: #{decoder_forward.8} parent=1 // pred_check
      _
    $region7: #{decoder_forward.8} parent=1 // pred_check_branch
      %30 = sbr.rel (0) target = $region9
    $region8: #{decoder_forward.8} parent=1 // pred_region
      %s32 = ssub.s32 16, 16
      %33 = vsyncadd [#allocation6], %s32
      %s35 = sshll.u32 [#allocation5], 4
      %s36 = int_to_ptr.vmem [resolvable:$true] %s35
      %38 = dma.hbm_to_vmem [thread:$0]  %s1, 16, %s36, [#allocation6]
    $region9: #{decoder_forward.8} parent=1 // pred_fallthru
      _
    // Predicated region
    $region10: #{decoder_forward.8} parent=1 // pred_check
      _
    $region11: #{decoder_forward.8} parent=1 // pred_check_branch
      %40 = sbr.rel (0) target = $region13
    $region12: #{decoder_forward.8} parent=1 // pred_region
      %s42 = ssub.s32 16, 16
      %43 = vsyncadd [#allocation6], %s42
      %s45 = sshll.u32 [#allocation7], 4
      %s46 = int_to_ptr.vmem [resolvable:$true] %s45
      %48 = dma.hbm_to_vmem [thread:$0]  %s2, 16, %s46, [#allocation6]
    $region13: #{decoder_forward.8} parent=1 // pred_fallthru
      _
    // Predicated region
    $region14: #{decoder_forward.8} parent=1 // pred_check
      _
    $region15: #{decoder_forward.8} parent=1 // pred_check_branch
      %50 = sbr.rel (0) target = $region17
    $region16: #{decoder_forward.8} parent=1 // pred_region
      %s52 = ssub.s32 256, 256
      %53 = vsyncadd [#allocation9], %s52
      %s54 = sshll.u32 [#allocation8], 4
      %s55 = int_to_ptr.vmem [resolvable:$true] %s54
      %60 = dma.hbm_to_vmem [thread:$0]  %s3, 256, %s55, [#allocation9], 64, 64, 4
    $region17: #{decoder_forward.8} parent=1 // pred_fallthru
      _
    // Predicated region
    $region18: #{decoder_forward.8} parent=1 // pred_check
      _
    $region19: #{decoder_forward.8} parent=1 // pred_check_branch
      %62 = sbr.rel (0) target = $region21
    $region20: #{decoder_forward.8} parent=1 // pred_region
      %s64 = ssub.s32 16, 16
      %65 = vsyncadd [#allocation9], %s64
      %s67 = sshll.u32 [#allocation10], 4
      %s68 = int_to_ptr.vmem [resolvable:$true] %s67
      %70 = dma.hbm_to_vmem [thread:$0]  %s4, 16, %s68, [#allocation9]
    $region21: #{decoder_forward.8} parent=1 // pred_fallthru
      _
    // Predicated region
    $region22: #{decoder_forward.8} parent=1 // pred_check
      _
    $region23: #{decoder_forward.8} parent=1 // pred_check_branch
      %72 = sbr.rel (0) target = $region25
    $region24: #{decoder_forward.8} parent=1 // pred_region
      %s74 = ssub.s32 512, 512
      %75 = vsyncadd [#allocation12], %s74
      %s76 = sshll.u32 [#allocation11], 4
      %s77 = int_to_ptr.vmem [resolvable:$true] %s76
      %82 = dma.hbm_to_vmem [thread:$0]  %s5, 512, %s77, [#allocation12], 64, 64, 4
    $region25: #{decoder_forward.8} parent=1 // pred_fallthru
      _
    // Predicated region
    $region26: #{decoder_forward.8} parent=1 // pred_check
      _
    $region27: #{decoder_forward.8} parent=1 // pred_check_branch
      %84 = sbr.rel (0) target = $region29
    $region28: #{decoder_forward.8} parent=1 // pred_region
      %s86 = ssub.s32 16, 16
      %87 = vsyncadd [#allocation12], %s86
      %s89 = sshll.u32 [#allocation13], 4
      %s90 = int_to_ptr.vmem [resolvable:$true] %s89
      %92 = dma.hbm_to_vmem [thread:$0]  %s6, 16, %s90, [#allocation12]
    $region29: #{decoder_forward.8} parent=1 // pred_fallthru
      _
    // Predicated region
    $region30: #{decoder_forward.8} parent=1 // pred_check
      _
    $region31: #{decoder_forward.8} parent=1 // pred_check_branch
      %94 = sbr.rel (0) target = $region33
    $region32: #{decoder_forward.8} parent=1 // pred_region
      %95 = dma.done [#allocation3], 256
    $region33: #{decoder_forward.8} parent=1 // pred_fallthru
      _
    // Predicated region
    $region34: #{decoder_forward.8} parent=1 // pred_check
      _
    $region35: #{decoder_forward.8} parent=1 // pred_check_branch
      %97 = sbr.rel (0) target = $region37
    $region36: #{decoder_forward.8} parent=1 // pred_region
      %98 = dma.done [#allocation6], 16
    $region37: #{decoder_forward.8} parent=1 // pred_fallthru
      _
    // Predicated region
    $region38: #{decoder_forward.8} parent=1 // pred_check
      _
    $region39: #{decoder_forward.8} parent=1 // pred_check_branch
      %100 = sbr.rel (0) target = $region41
    $region40: #{decoder_forward.8} parent=1 // pred_region
      %101 = dma.done [#allocation6], 16
    $region41: #{decoder_forward.8} parent=1 // pred_fallthru
      _
    // Predicated region
    $region42: #{decoder_forward.8} parent=1 // pred_check
      _
    $region43: #{decoder_forward.8} parent=1 // pred_check_branch
      %103 = sbr.rel (0) target = $region45
    $region44: #{decoder_forward.8} parent=1 // pred_region
      %104 = dma.done [#allocation9], 256
    $region45: #{decoder_forward.8} parent=1 // pred_fallthru
      _
    // Predicated region
    $region46: #{decoder_forward.8} parent=1 // pred_check
      _
    $region47: #{decoder_forward.8} parent=1 // pred_check_branch
      %106 = sbr.rel (0) target = $region49
    $region48: #{decoder_forward.8} parent=1 // pred_region
      %107 = dma.done [#allocation9], 16
    $region49: #{decoder_forward.8} parent=1 // pred_fallthru
      _
    // Predicated region
    $region50: #{decoder_forward.8} parent=1 // pred_check
      _
    $region51: #{decoder_forward.8} parent=1 // pred_check_branch
      %109 = sbr.rel (0) target = $region53
    $region52: #{decoder_forward.8} parent=1 // pred_region
      %110 = dma.done [#allocation12], 512
    $region53: #{decoder_forward.8} parent=1 // pred_fallthru
      _
    // Predicated region
    $region54: #{decoder_forward.8} parent=1 // pred_check
      _
    $region55: #{decoder_forward.8} parent=1 // pred_check_branch
      %112 = sbr.rel (0) target = $region57
    $region56: #{decoder_forward.8} parent=1 // pred_region
      %113 = dma.done [#allocation12], 16
    $region57: #{decoder_forward.8} parent=1 // pred_fallthru
      _
    %v115 = vld [vmem:[#allocation2] sm:$0xff]
    %v116 = vld [vmem:[#allocation2 + $0x8] sm:$0xff]
    %v117 = vld [vmem:[#allocation5] sm:$0x1]
    %v118 = vld [vmem:[#allocation7] sm:$0x1]
    %vm119 = vcmask 261120
    %v120 = vsel %vm119, %v115, 0.0
    %121 = vadd.xlane.f32.xlu0 %v120
    %v122 = vpop.xlane.xlu0 %121
    %v123 = vsel %vm119, %v116, 0.0
    %124 = vadd.xlane.f32.xlu0 %v123
    %v125 = vpop.xlane.xlu0 %124
    %v126 = vrcp.pop 32.0
    %v127 = vmul.f32 %v122, %v126
    %v128 = vmul.f32 %v125, %v126
    %v129 = vsub.f32 %v115, %v127
    %v130 = vsub.f32 %v116, %v128
    %v131 = vmul.f32 %v129, %v129
    %v132 = vmul.f32 %v130, %v130
    %v133 = vsel %vm119, %v131, 0.0
    %134 = vadd.xlane.f32.xlu0 %v133
    %v135 = vpop.xlane.xlu0 %134
    %v136 = vsel %vm119, %v132, 0.0
    %137 = vadd.xlane.f32.xlu0 %v136
    %v138 = vpop.xlane.xlu0 %137
    %v139 = vmul.f32 %v135, 0.032258064
    %v140 = vmul.f32 %v138, 0.032258064
    %v141 = vrsqrt.pop %v139
    %v142 = vmul.f32 %v139, %v141
    %vm143 = vcmp.eq.f32.partialorder %v139, inf
    %v144 = vsel %vm143, %v139, %v142
    %vm145 = vcmp.eq.f32.partialorder %v139, 0.0
    %v146 = vand.u32 %v139, 2147483648
    %v147 = vsel %vm145, %v146, %v144
    %v148 = vrsqrt.pop %v140
    %v149 = vmul.f32 %v140, %v148
    %vm150 = vcmp.eq.f32.partialorder %v140, inf
    %v151 = vsel %vm150, %v140, %v149
    %vm152 = vcmp.eq.f32.partialorder %v140, 0.0
    %v153 = vand.u32 %v140, 2147483648
    %v154 = vsel %vm152, %v153, %v151
    %v156 = vlaneseq
    %v157 = vshrl.u32 %v156, 7
    %v158 = vsub.s32 0, %v157
    %v159 = vrot.slane %v117, %v158
    %v161 = vmul.f32 %v159, %v129
    %v162 = vmul.f32 %v159, %v130
    %v163 = vadd.f32 %v147, 1e-06
    %v164 = vadd.f32 %v154, 1e-06
    %v165 = vrcp.pop %v163
    %v166 = vmul.f32 %v161, %v165
    %v167 = vrcp.pop %v164
    %v168 = vmul.f32 %v162, %v167
    %v170 = vlaneseq
    %v171 = vshrl.u32 %v170, 7
    %v172 = vsub.s32 0, %v171
    %v173 = vrot.slane %v118, %v172
    %v175 = vadd.f32 %v166, %v173
    %v176 = vadd.f32 %v168, %v173
    %v177 = vpack.c.bf16 %v176, %v175
    %v178 = vld [vmem:[#allocation8] sm:$0xf]
    %v179 = vld [vmem:[#allocation8 + $0x4] sm:$0xf]
    %v180 = vld [vmem:[#allocation8 + $0x8] sm:$0xf]
    %v181 = vld [vmem:[#allocation8 + $0xc] sm:$0xf]
    %v182 = vld [vmem:[#allocation10] sm:$0x1]
    %v184 = vlaneseq
    %v185 = vshrl.u32 %v184, 7
    %v186 = vsub.s32 0, %v185
    %v187 = vrot.slane %v182, %v186
    %v193 = vunpack.c.l.b16 %v178
    %v194 = vunpack.c.l.b16 %v179
    %v195 = vunpack.c.l.b16 %v180
    %v196 = vunpack.c.l.b16 %v181
    %v197 = vpack.c.b16 %v194, %v193
    %v198 = vpack.c.b16 %v196, %v195
    %v202 = vsel %vm119, %v177, 0
    %204 = vmatprep.subr.bf16.mxu0 0
    %205 = vmatpush1.bf16.msra.mxu0 %v197
    %206 = vmatprep.subr.bf16.mxu0 0
    %207 = vmatpush1.bf16.msra.mxu0 %v198
    %208 = vmatprep.subr.bf16.mxu0 0
    %209 = vmatpush1.bf16.msra.mxu0 0
    %210 = vmatprep.subr.bf16.mxu0 0
    %211 = vmatpush1.bf16.msra.mxu0 0
    %212 = vmatprep.subr.bf16.mxu0 0
    %213 = vmatpush1.bf16.msra.mxu0 0
    %214 = vmatprep.subr.bf16.mxu0 0
    %215 = vmatpush1.bf16.msra.mxu0 0
    %216 = vmatprep.subr.bf16.mxu0 0
    %217 = vmatpush1.bf16.msra.mxu0 0
    %218 = vmatprep.subr.bf16.mxu0 0
    %219 = vmatpush1.bf16.msra.mxu0 0
    %220 = vmatprep.subr.bf16.mxu0 0
    %221 = vmatpush1.bf16.msra.mxu0 0
    %222 = vmatprep.subr.bf16.mxu0 0
    %223 = vmatpush1.bf16.msra.mxu0 0
    %224 = vmatprep.subr.bf16.mxu0 0
    %225 = vmatpush1.bf16.msra.mxu0 0
    %226 = vmatprep.subr.bf16.mxu0 0
    %227 = vmatpush1.bf16.msra.mxu0 0
    %228 = vmatprep.subr.bf16.mxu0 0
    %229 = vmatpush1.bf16.msra.mxu0 0
    %230 = vmatprep.subr.bf16.mxu0 0
    %231 = vmatpush1.bf16.msra.mxu0 0
    %232 = vmatprep.subr.bf16.mxu0 0
    %233 = vmatpush1.bf16.msra.mxu0 0
    %234 = vmatprep.subr.bf16.mxu0 0
    %235 = vmatpush1.bf16.msra.mxu0 0
    %236 = vmatprep.mubr.bf16.mxu0 0
    %237 = vmatmul.mubr.bf16.gmra.mrb[0].mxu0 %v202
    %v238 = vpop.f32.mrb[0].mxu0
    %v239 = vadd.f32 %v187, %v238
    %v240 = vpop.f32.mrb[0].mxu0
    %v241 = vpop.f32.mrb[0].mxu0
    %v242 = vadd.f32 %v187, %v241
    %v243 = vpop.f32.mrb[0].mxu0
    %244 = vdwg.mxu0
    %v245 = vmax.f32 %v239, 0.0
    %v246 = vmax.f32 %v242, 0.0
    %v247 = vpack.c.bf16 %v246, %v245
    %v248 = vld [vmem:[#allocation11] sm:$0xf]
    %v249 = vld [vmem:[#allocation11 + $0x4] sm:$0xf]
    %v250 = vld [vmem:[#allocation11 + $0x8] sm:$0xf]
    %v251 = vld [vmem:[#allocation11 + $0xc] sm:$0xf]
    %v252 = vld [vmem:[#allocation11 + $0x10] sm:$0xf]
    %v253 = vld [vmem:[#allocation11 + $0x14] sm:$0xf]
    %v254 = vld [vmem:[#allocation11 + $0x18] sm:$0xf]
    %v255 = vld [vmem:[#allocation11 + $0x1c] sm:$0xf]
    %v256 = vld [vmem:[#allocation13] sm:$0x1]
    %v258 = vlaneseq
    %v259 = vshrl.u32 %v258, 7
    %v260 = vsub.s32 0, %v259
    %v261 = vrot.slane %v256, %v260
    %v271 = vunpack.c.l.b16 %v248
    %v272 = vunpack.c.l.b16 %v249
    %v273 = vunpack.c.l.b16 %v250
    %v274 = vunpack.c.l.b16 %v251
    %v275 = vunpack.c.l.b16 %v252
    %v276 = vunpack.c.l.b16 %v253
    %v277 = vunpack.c.l.b16 %v254
    %v278 = vunpack.c.l.b16 %v255
    %v279 = vpack.c.b16 %v272, %v271
    %v280 = vpack.c.b16 %v274, %v273
    %v281 = vpack.c.b16 %v276, %v275
    %v282 = vpack.c.b16 %v278, %v277
    %vm287 = vcmask 523264
    %v289 = vsel %vm287, %v247, 0
    %291 = vmatprep.subr.bf16.mxu0 0
    %292 = vmatpush1.bf16.msra.mxu0 %v279
    %293 = vmatprep.subr.bf16.mxu0 0
    %294 = vmatpush1.bf16.msra.mxu0 %v280
    %295 = vmatprep.subr.bf16.mxu0 0
    %296 = vmatpush1.bf16.msra.mxu0 %v281
    %297 = vmatprep.subr.bf16.mxu0 0
    %298 = vmatpush1.bf16.msra.mxu0 %v282
    %299 = vmatprep.subr.bf16.mxu0 0
    %300 = vmatpush1.bf16.msra.mxu0 0
    %301 = vmatprep.subr.bf16.mxu0 0
    %302 = vmatpush1.bf16.msra.mxu0 0
    %303 = vmatprep.subr.bf16.mxu0 0
    %304 = vmatpush1.bf16.msra.mxu0 0
    %305 = vmatprep.subr.bf16.mxu0 0
    %306 = vmatpush1.bf16.msra.mxu0 0
    %307 = vmatprep.subr.bf16.mxu0 0
    %308 = vmatpush1.bf16.msra.mxu0 0
    %309 = vmatprep.subr.bf16.mxu0 0
    %310 = vmatpush1.bf16.msra.mxu0 0
    %311 = vmatprep.subr.bf16.mxu0 0
    %312 = vmatpush1.bf16.msra.mxu0 0
    %313 = vmatprep.subr.bf16.mxu0 0
    %314 = vmatpush1.bf16.msra.mxu0 0
    %315 = vmatprep.subr.bf16.mxu0 0
    %316 = vmatpush1.bf16.msra.mxu0 0
    %317 = vmatprep.subr.bf16.mxu0 0
    %318 = vmatpush1.bf16.msra.mxu0 0
    %319 = vmatprep.subr.bf16.mxu0 0
    %320 = vmatpush1.bf16.msra.mxu0 0
    %321 = vmatprep.subr.bf16.mxu0 0
    %322 = vmatpush1.bf16.msra.mxu0 0
    %323 = vmatprep.mubr.bf16.mxu0 0
    %324 = vmatmul.mubr.bf16.gmra.mrb[0].mxu0 %v289
    %v325 = vpop.f32.mrb[0].mxu0
    %v326 = vadd.f32 %v261, %v325
    %v327 = vpop.f32.mrb[0].mxu0
    %v328 = vpop.f32.mrb[0].mxu0
    %v329 = vadd.f32 %v261, %v328
    %v330 = vpop.f32.mrb[0].mxu0
    %331 = vdwg.mxu0
    %v332 = vadd.f32 %v326, %v115
    %v333 = vadd.f32 %v329, %v116
    %334 = vst.msk [vmem:[#allocation14] sm:$0xff] %vm119, %v332
    %335 = vst.msk [vmem:[#allocation14 + $0x8] sm:$0xff] %vm119, %v333
    // Predicated region
    $region58: #{decoder_forward.8} parent=1 // pred_check
      _
    $region59: #{decoder_forward.8} parent=1 // pred_check_branch
      %337 = sbr.rel (0) target = $region61
    $region60: #{decoder_forward.8} parent=1 // pred_region
      %s339 = ssub.s32 256, 256
      %340 = vsyncadd [#allocation4], %s339
      %s341 = sshll.u32 [#allocation14], 4
      %s342 = int_to_ptr.vmem [resolvable:$true] %s341
      %347 = dma.vmem_to_hbm [thread:$0]  %s342, 256, %s7, [#allocation4], 128, 128, 8
    $region61: #{decoder_forward.8} parent=1 // pred_fallthru
      _
    // Predicated region
    $region62: #{decoder_forward.8} parent=1 // pred_check
      _
    $region63: #{decoder_forward.8} parent=1 // pred_check_branch
      %349 = sbr.rel (0) target = $region65
    $region64: #{decoder_forward.8} parent=1 // pred_region
      %350 = dma.done [#allocation4], 256
    $region65: #{decoder_forward.8} parent=1 // pred_fallthru
      _
    %351 = vsyncpa [#allocation3], 1
    %352 = vsyncpa [#allocation6], 1
    %353 = vsyncpa [#allocation9], 1
    %354 = vsyncpa [#allocation12], 1
    %355 = vsyncpa [#allocation4], 1

// kernel: decoder_forward.11
$region0: #{decoder_forward.11}
  #allocation0 [shape = 'u32[]', space=smem, size = 0x4, offset = 0x4, fixed_abs, tag = 'smem constant byte address 0x4 - core index']
  #allocation1 [shape = 'u32[144,128]{1,0:T(1,128)}', space=vmem, size = 0x12000, scoped, tag = 'internal scratch']
  %s0 = inlined_call_operand.hbm [shape: f32[16,32], index: 0, kind: input, shape index: {}, may-alias: {0,9}]
  %s1 = inlined_call_operand.hbm [shape: f32[1,32], index: 1, kind: input, shape index: {}]
  %s2 = inlined_call_operand.hbm [shape: f32[1,32], index: 2, kind: input, shape index: {}]
  %s3 = inlined_call_operand.hbm [shape: bf16[32,64], index: 3, kind: input, shape index: {}]
  %s4 = inlined_call_operand.hbm [shape: f32[1,64], index: 4, kind: input, shape index: {}]
  %s5 = inlined_call_operand.hbm [shape: bf16[64,32], index: 5, kind: input, shape index: {}]
  %s6 = inlined_call_operand.hbm [shape: f32[1,32], index: 6, kind: input, shape index: {}]
  %s7 = inlined_call_operand.hbm [shape: f32[1,32], index: 7, kind: input, shape index: {}]
  %s8 = inlined_call_operand.hbm [shape: f32[1,32], index: 8, kind: input, shape index: {}]
  %s9 = inlined_call_operand.hbm [shape: f32[16,32], index: 9, kind: output, shape index: {}, may-alias: {0,9}]
  %s10 = sld [smem:[#allocation0]]
  $region82: #{decoder_forward.11} parent=0
    _
  %s12 = ssub.s32 1, %s10
  %s13 = scalar_select 0, %s12, %s10
  $region1: #{decoder_forward.11} parent=0
    #allocation2 [shape = 'u8[8192]{0}', space=vmem, size = 0x2000, scoped, tag = 'input window, operand 0, single buffered']
    #allocation3 [shape = 's32[1]{0}', space=sflag, size = 0x4, scoped, tag = 'scoped memory for decoder_forward.11']
    #allocation4 [shape = 's32[1]{0}', space=sflag, size = 0x4, scoped, tag = 'scoped memory for decoder_forward.11']
    #allocation5 [shape = 'u8[512]{0}', space=vmem, size = 0x400, scoped, tag = 'input window, operand 1, single buffered']
    #allocation6 [shape = 's32[1]{0}', space=sflag, size = 0x4, scoped, tag = 'scoped memory for decoder_forward.11']
    #allocation7 [shape = 'u8[512]{0}', space=vmem, size = 0x400, scoped, tag = 'input window, operand 2, single buffered']
    #allocation8 [shape = 'u8[8192]{0}', space=vmem, size = 0x2000, scoped, tag = 'input window, operand 3, single buffered']
    #allocation9 [shape = 's32[1]{0}', space=sflag, size = 0x4, scoped, tag = 'scoped memory for decoder_forward.11']
    #allocation10 [shape = 'u8[512]{0}', space=vmem, size = 0x400, scoped, tag = 'input window, operand 4, single buffered']
    #allocation11 [shape = 'u8[16384]{0}', space=vmem, size = 0x4000, scoped, tag = 'input window, operand 5, single buffered']
    #allocation12 [shape = 's32[1]{0}', space=sflag, size = 0x4, scoped, tag = 'scoped memory for decoder_forward.11']
    #allocation13 [shape = 'u8[512]{0}', space=vmem, size = 0x400, scoped, tag = 'input window, operand 6, single buffered']
    #allocation14 [shape = 'u8[512]{0}', space=vmem, size = 0x400, scoped, tag = 'input window, operand 7, single buffered']
    #allocation15 [shape = 's32[1]{0}', space=sflag, size = 0x4, scoped, tag = 'scoped memory for decoder_forward.11']
    #allocation16 [shape = 'u8[512]{0}', space=vmem, size = 0x400, scoped, tag = 'input window, operand 8, single buffered']
    #allocation17 [shape = 'u8[8192]{0}', space=vmem, size = 0x2000, scoped, tag = 'output window, operand 0, single buffered']
    %14 = vsyncpa [#allocation3], 0
    %15 = vsyncpa [#allocation6], 0
    %16 = vsyncpa [#allocation9], 0
    %17 = vsyncpa [#allocation12], 0
    %18 = vsyncpa [#allocation15], 0
    %19 = vsyncpa [#allocation4], 0
    // Predicated region
    $region2: #{decoder_forward.11} parent=1 // pred_check
      _
    $region3: #{decoder_forward.11} parent=1 // pred_check_branch
      %21 = sbr.rel (0) target = $region5
    $region4: #{decoder_forward.11} parent=1 // pred_region
      %s23 = ssub.s32 256, 256
      %24 = vsyncadd [#allocation3], %s23
      %s25 = sshll.u32 [#allocation2], 4
      %s26 = int_to_ptr.vmem [resolvable:$true] %s25
      %31 = dma.hbm_to_vmem [thread:$0]  %s0, 256, %s26, [#allocation3], 128, 128, 8
    $region5: #{decoder_forward.11} parent=1 // pred_fallthru
      _
    // Predicated region
    $region6: #{decoder_forward.11} parent=1 // pred_check
      _
    $region7: #{decoder_forward.11} parent=1 // pred_check_branch
      %33 = sbr.rel (0) target = $region9
    $region8: #{decoder_forward.11} parent=1 // pred_region
      %s35 = ssub.s32 16, 16
      %36 = vsyncadd [#allocation6], %s35
      %s38 = sshll.u32 [#allocation5], 4
      %s39 = int_to_ptr.vmem [resolvable:$true] %s38
      %41 = dma.hbm_to_vmem [thread:$0]  %s1, 16, %s39, [#allocation6]
    $region9: #{decoder_forward.11} parent=1 // pred_fallthru
      _
    // Predicated region
    $region10: #{decoder_forward.11} parent=1 // pred_check
      _
    $region11: #{decoder_forward.11} parent=1 // pred_check_branch
      %43 = sbr.rel (0) target = $region13
    $region12: #{decoder_forward.11} parent=1 // pred_region
      %s45 = ssub.s32 16, 16
      %46 = vsyncadd [#allocation6], %s45
      %s48 = sshll.u32 [#allocation7], 4
      %s49 = int_to_ptr.vmem [resolvable:$true] %s48
      %51 = dma.hbm_to_vmem [thread:$0]  %s2, 16, %s49, [#allocation6]
    $region13: #{decoder_forward.11} parent=1 // pred_fallthru
      _
    // Predicated region
    $region14: #{decoder_forward.11} parent=1 // pred_check
      _
    $region15: #{decoder_forward.11} parent=1 // pred_check_branch
      %53 = sbr.rel (0) target = $region17
    $region16: #{decoder_forward.11} parent=1 // pred_region
      %s55 = ssub.s32 256, 256
      %56 = vsyncadd [#allocation9], %s55
      %s57 = sshll.u32 [#allocation8], 4
      %s58 = int_to_ptr.vmem [resolvable:$true] %s57
      %63 = dma.hbm_to_vmem [thread:$0]  %s3, 256, %s58, [#allocation9], 64, 64, 4
    $region17: #{decoder_forward.11} parent=1 // pred_fallthru
      _
    // Predicated region
    $region18: #{decoder_forward.11} parent=1 // pred_check
      _
    $region19: #{decoder_forward.11} parent=1 // pred_check_branch
      %65 = sbr.rel (0) target = $region21
    $region20: #{decoder_forward.11} parent=1 // pred_region
      %s67 = ssub.s32 16, 16
      %68 = vsyncadd [#allocation9], %s67
      %s70 = sshll.u32 [#allocation10], 4
      %s71 = int_to_ptr.vmem [resolvable:$true] %s70
      %73 = dma.hbm_to_vmem [thread:$0]  %s4, 16, %s71, [#allocation9]
    $region21: #{decoder_forward.11} parent=1 // pred_fallthru
      _
    // Predicated region
    $region22: #{decoder_forward.11} parent=1 // pred_check
      _
    $region23: #{decoder_forward.11} parent=1 // pred_check_branch
      %75 = sbr.rel (0) target = $region25
    $region24: #{decoder_forward.11} parent=1 // pred_region
      %s77 = ssub.s32 512, 512
      %78 = vsyncadd [#allocation12], %s77
      %s79 = sshll.u32 [#allocation11], 4
      %s80 = int_to_ptr.vmem [resolvable:$true] %s79
      %85 = dma.hbm_to_vmem [thread:$0]  %s5, 512, %s80, [#allocation12], 64, 64, 4
    $region25: #{decoder_forward.11} parent=1 // pred_fallthru
      _
    // Predicated region
    $region26: #{decoder_forward.11} parent=1 // pred_check
      _
    $region27: #{decoder_forward.11} parent=1 // pred_check_branch
      %87 = sbr.rel (0) target = $region29
    $region28: #{decoder_forward.11} parent=1 // pred_region
      %s89 = ssub.s32 16, 16
      %90 = vsyncadd [#allocation12], %s89
      %s92 = sshll.u32 [#allocation13], 4
      %s93 = int_to_ptr.vmem [resolvable:$true] %s92
      %95 = dma.hbm_to_vmem [thread:$0]  %s6, 16, %s93, [#allocation12]
    $region29: #{decoder_forward.11} parent=1 // pred_fallthru
      _
    // Predicated region
    $region30: #{decoder_forward.11} parent=1 // pred_check
      _
    $region31: #{decoder_forward.11} parent=1 // pred_check_branch
      %97 = sbr.rel (0) target = $region33
    $region32: #{decoder_forward.11} parent=1 // pred_region
      %s99 = ssub.s32 16, 16
      %100 = vsyncadd [#allocation15], %s99
      %s102 = sshll.u32 [#allocation14], 4
      %s103 = int_to_ptr.vmem [resolvable:$true] %s102
      %105 = dma.hbm_to_vmem [thread:$0]  %s7, 16, %s103, [#allocation15]
    $region33: #{decoder_forward.11} parent=1 // pred_fallthru
      _
    // Predicated region
    $region34: #{decoder_forward.11} parent=1 // pred_check
      _
    $region35: #{decoder_forward.11} parent=1 // pred_check_branch
      %107 = sbr.rel (0) target = $region37
    $region36: #{decoder_forward.11} parent=1 // pred_region
      %s109 = ssub.s32 16, 16
      %110 = vsyncadd [#allocation15], %s109
      %s112 = sshll.u32 [#allocation16], 4
      %s113 = int_to_ptr.vmem [resolvable:$true] %s112
      %115 = dma.hbm_to_vmem [thread:$0]  %s8, 16, %s113, [#allocation15]
    $region37: #{decoder_forward.11} parent=1 // pred_fallthru
      _
    // Predicated region
    $region38: #{decoder_forward.11} parent=1 // pred_check
      _
    $region39: #{decoder_forward.11} parent=1 // pred_check_branch
      %117 = sbr.rel (0) target = $region41
    $region40: #{decoder_forward.11} parent=1 // pred_region
      %118 = dma.done [#allocation3], 256
    $region41: #{decoder_forward.11} parent=1 // pred_fallthru
      _
    // Predicated region
    $region42: #{decoder_forward.11} parent=1 // pred_check
      _
    $region43: #{decoder_forward.11} parent=1 // pred_check_branch
      %120 = sbr.rel (0) target = $region45
    $region44: #{decoder_forward.11} parent=1 // pred_region
      %121 = dma.done [#allocation6], 16
    $region45: #{decoder_forward.11} parent=1 // pred_fallthru
      _
    // Predicated region
    $region46: #{decoder_forward.11} parent=1 // pred_check
      _
    $region47: #{decoder_forward.11} parent=1 // pred_check_branch
      %123 = sbr.rel (0) target = $region49
    $region48: #{decoder_forward.11} parent=1 // pred_region
      %124 = dma.done [#allocation6], 16
    $region49: #{decoder_forward.11} parent=1 // pred_fallthru
      _
    // Predicated region
    $region50: #{decoder_forward.11} parent=1 // pred_check
      _
    $region51: #{decoder_forward.11} parent=1 // pred_check_branch
      %126 = sbr.rel (0) target = $region53
    $region52: #{decoder_forward.11} parent=1 // pred_region
      %127 = dma.done [#allocation9], 256
    $region53: #{decoder_forward.11} parent=1 // pred_fallthru
      _
    // Predicated region
    $region54: #{decoder_forward.11} parent=1 // pred_check
      _
    $region55: #{decoder_forward.11} parent=1 // pred_check_branch
      %129 = sbr.rel (0) target = $region57
    $region56: #{decoder_forward.11} parent=1 // pred_region
      %130 = dma.done [#allocation9], 16
    $region57: #{decoder_forward.11} parent=1 // pred_fallthru
      _
    // Predicated region
    $region58: #{decoder_forward.11} parent=1 // pred_check
      _
    $region59: #{decoder_forward.11} parent=1 // pred_check_branch
      %132 = sbr.rel (0) target = $region61
    $region60: #{decoder_forward.11} parent=1 // pred_region
      %133 = dma.done [#allocation12], 512
    $region61: #{decoder_forward.11} parent=1 // pred_fallthru
      _
    // Predicated region
    $region62: #{decoder_forward.11} parent=1 // pred_check
      _
    $region63: #{decoder_forward.11} parent=1 // pred_check_branch
      %135 = sbr.rel (0) target = $region65
    $region64: #{decoder_forward.11} parent=1 // pred_region
      %136 = dma.done [#allocation12], 16
    $region65: #{decoder_forward.11} parent=1 // pred_fallthru
      _
    // Predicated region
    $region66: #{decoder_forward.11} parent=1 // pred_check
      _
    $region67: #{decoder_forward.11} parent=1 // pred_check_branch
      %138 = sbr.rel (0) target = $region69
    $region68: #{decoder_forward.11} parent=1 // pred_region
      %139 = dma.done [#allocation15], 16
    $region69: #{decoder_forward.11} parent=1 // pred_fallthru
      _
    // Predicated region
    $region70: #{decoder_forward.11} parent=1 // pred_check
      _
    $region71: #{decoder_forward.11} parent=1 // pred_check_branch
      %141 = sbr.rel (0) target = $region73
    $region72: #{decoder_forward.11} parent=1 // pred_region
      %142 = dma.done [#allocation15], 16
    $region73: #{decoder_forward.11} parent=1 // pred_fallthru
      _
    %v144 = vld [vmem:[#allocation2] sm:$0xff]
    %v145 = vld [vmem:[#allocation2 + $0x8] sm:$0xff]
    %v146 = vld [vmem:[#allocation5] sm:$0x1]
    %v147 = vld [vmem:[#allocation7] sm:$0x1]
    %vm148 = vcmask 261120
    %v149 = vsel %vm148, %v144, 0.0
    %150 = vadd.xlane.f32.xlu0 %v149
    %v151 = vpop.xlane.xlu0 %150
    %v152 = vsel %vm148, %v145, 0.0
    %153 = vadd.xlane.f32.xlu0 %v152
    %v154 = vpop.xlane.xlu0 %153
    %v155 = vrcp.pop 32.0
    %v156 = vmul.f32 %v151, %v155
    %v157 = vmul.f32 %v154, %v155
    %v158 = vsub.f32 %v144, %v156
    %v159 = vsub.f32 %v145, %v157
    %v160 = vmul.f32 %v158, %v158
    %v161 = vmul.f32 %v159, %v159
    %v162 = vsel %vm148, %v160, 0.0
    %163 = vadd.xlane.f32.xlu0 %v162
    %v164 = vpop.xlane.xlu0 %163
    %v165 = vsel %vm148, %v161, 0.0
    %166 = vadd.xlane.f32.xlu0 %v165
    %v167 = vpop.xlane.xlu0 %166
    %v168 = vmul.f32 %v164, 0.032258064
    %v169 = vmul.f32 %v167, 0.032258064
    %v170 = vrsqrt.pop %v168
    %v171 = vmul.f32 %v168, %v170
    %vm172 = vcmp.eq.f32.partialorder %v168, inf
    %v173 = vsel %vm172, %v168, %v171
    %vm174 = vcmp.eq.f32.partialorder %v168, 0.0
    %v175 = vand.u32 %v168, 2147483648
    %v176 = vsel %vm174, %v175, %v173
    %v177 = vrsqrt.pop %v169
    %v178 = vmul.f32 %v169, %v177
    %vm179 = vcmp.eq.f32.partialorder %v169, inf
    %v180 = vsel %vm179, %v169, %v178
    %vm181 = vcmp.eq.f32.partialorder %v169, 0.0
    %v182 = vand.u32 %v169, 2147483648
    %v183 = vsel %vm181, %v182, %v180
    %v185 = vlaneseq
    %v186 = vshrl.u32 %v185, 7
    %v187 = vsub.s32 0, %v186
    %v188 = vrot.slane %v146, %v187
    %v190 = vmul.f32 %v188, %v158
    %v191 = vmul.f32 %v188, %v159
    %v192 = vadd.f32 %v176, 1e-06
    %v193 = vadd.f32 %v183, 1e-06
    %v194 = vrcp.pop %v192
    %v195 = vmul.f32 %v190, %v194
    %v196 = vrcp.pop %v193
    %v197 = vmul.f32 %v191, %v196
    %v199 = vlaneseq
    %v200 = vshrl.u32 %v199, 7
    %v201 = vsub.s32 0, %v200
    %v202 = vrot.slane %v147, %v201
    %v204 = vadd.f32 %v195, %v202
    %v205 = vadd.f32 %v197, %v202
    %v206 = vpack.c.bf16 %v205, %v204
    %v207 = vld [vmem:[#allocation8] sm:$0xf]
    %v208 = vld [vmem:[#allocation8 + $0x4] sm:$0xf]
    %v209 = vld [vmem:[#allocation8 + $0x8] sm:$0xf]
    %v210 = vld [vmem:[#allocation8 + $0xc] sm:$0xf]
    %v211 = vld [vmem:[#allocation10] sm:$0x1]
    %v213 = vlaneseq
    %v214 = vshrl.u32 %v213, 7
    %v215 = vsub.s32 0, %v214
    %v216 = vrot.slane %v211, %v215
    %v222 = vunpack.c.l.b16 %v207
    %v223 = vunpack.c.l.b16 %v208
    %v224 = vunpack.c.l.b16 %v209
    %v225 = vunpack.c.l.b16 %v210
    %v226 = vpack.c.b16 %v223, %v222
    %v227 = vpack.c.b16 %v225, %v224
    %v231 = vsel %vm148, %v206, 0
    %233 = vmatprep.subr.bf16.mxu0 0
    %234 = vmatpush1.bf16.msra.mxu0 %v226
    %235 = vmatprep.subr.bf16.mxu0 0
    %236 = vmatpush1.bf16.msra.mxu0 %v227
    %237 = vmatprep.subr.bf16.mxu0 0
    %238 = vmatpush1.bf16.msra.mxu0 0
    %239 = vmatprep.subr.bf16.mxu0 0
    %240 = vmatpush1.bf16.msra.mxu0 0
    %241 = vmatprep.subr.bf16.mxu0 0
    %242 = vmatpush1.bf16.msra.mxu0 0
    %243 = vmatprep.subr.bf16.mxu0 0
    %244 = vmatpush1.bf16.msra.mxu0 0
    %245 = vmatprep.subr.bf16.mxu0 0
    %246 = vmatpush1.bf16.msra.mxu0 0
    %247 = vmatprep.subr.bf16.mxu0 0
    %248 = vmatpush1.bf16.msra.mxu0 0
    %249 = vmatprep.subr.bf16.mxu0 0
    %250 = vmatpush1.bf16.msra.mxu0 0
    %251 = vmatprep.subr.bf16.mxu0 0
    %252 = vmatpush1.bf16.msra.mxu0 0
    %253 = vmatprep.subr.bf16.mxu0 0
    %254 = vmatpush1.bf16.msra.mxu0 0
    %255 = vmatprep.subr.bf16.mxu0 0
    %256 = vmatpush1.bf16.msra.mxu0 0
    %257 = vmatprep.subr.bf16.mxu0 0
    %258 = vmatpush1.bf16.msra.mxu0 0
    %259 = vmatprep.subr.bf16.mxu0 0
    %260 = vmatpush1.bf16.msra.mxu0 0
    %261 = vmatprep.subr.bf16.mxu0 0
    %262 = vmatpush1.bf16.msra.mxu0 0
    %263 = vmatprep.subr.bf16.mxu0 0
    %264 = vmatpush1.bf16.msra.mxu0 0
    %265 = vmatprep.mubr.bf16.mxu0 0
    %266 = vmatmul.mubr.bf16.gmra.mrb[0].mxu0 %v231
    %v267 = vpop.f32.mrb[0].mxu0
    %v268 = vadd.f32 %v216, %v267
    %v269 = vpop.f32.mrb[0].mxu0
    %v270 = vpop.f32.mrb[0].mxu0
    %v271 = vadd.f32 %v216, %v270
    %v272 = vpop.f32.mrb[0].mxu0
    %273 = vdwg.mxu0
    %v274 = vmax.f32 %v268, 0.0
    %v275 = vmax.f32 %v271, 0.0
    %v276 = vpack.c.bf16 %v275, %v274
    %v277 = vld [vmem:[#allocation11] sm:$0xf]
    %v278 = vld [vmem:[#allocation11 + $0x4] sm:$0xf]
    %v279 = vld [vmem:[#allocation11 + $0x8] sm:$0xf]
    %v280 = vld [vmem:[#allocation11 + $0xc] sm:$0xf]
    %v281 = vld [vmem:[#allocation11 + $0x10] sm:$0xf]
    %v282 = vld [vmem:[#allocation11 + $0x14] sm:$0xf]
    %v283 = vld [vmem:[#allocation11 + $0x18] sm:$0xf]
    %v284 = vld [vmem:[#allocation11 + $0x1c] sm:$0xf]
    %v285 = vld [vmem:[#allocation13] sm:$0x1]
    %v287 = vlaneseq
    %v288 = vshrl.u32 %v287, 7
    %v289 = vsub.s32 0, %v288
    %v290 = vrot.slane %v285, %v289
    %v300 = vunpack.c.l.b16 %v277
    %v301 = vunpack.c.l.b16 %v278
    %v302 = vunpack.c.l.b16 %v279
    %v303 = vunpack.c.l.b16 %v280
    %v304 = vunpack.c.l.b16 %v281
    %v305 = vunpack.c.l.b16 %v282
    %v306 = vunpack.c.l.b16 %v283
    %v307 = vunpack.c.l.b16 %v284
    %v308 = vpack.c.b16 %v301, %v300
    %v309 = vpack.c.b16 %v303, %v302
    %v310 = vpack.c.b16 %v305, %v304
    %v311 = vpack.c.b16 %v307, %v306
    %vm316 = vcmask 523264
    %v318 = vsel %vm316, %v276, 0
    %320 = vmatprep.subr.bf16.mxu0 0
    %321 = vmatpush1.bf16.msra.mxu0 %v308
    %322 = vmatprep.subr.bf16.mxu0 0
    %323 = vmatpush1.bf16.msra.mxu0 %v309
    %324 = vmatprep.subr.bf16.mxu0 0
    %325 = vmatpush1.bf16.msra.mxu0 %v310
    %326 = vmatprep.subr.bf16.mxu0 0
    %327 = vmatpush1.bf16.msra.mxu0 %v311
    %328 = vmatprep.subr.bf16.mxu0 0
    %329 = vmatpush1.bf16.msra.mxu0 0
    %330 = vmatprep.subr.bf16.mxu0 0
    %331 = vmatpush1.bf16.msra.mxu0 0
    %332 = vmatprep.subr.bf16.mxu0 0
    %333 = vmatpush1.bf16.msra.mxu0 0
    %334 = vmatprep.subr.bf16.mxu0 0
    %335 = vmatpush1.bf16.msra.mxu0 0
    %336 = vmatprep.subr.bf16.mxu0 0
    %337 = vmatpush1.bf16.msra.mxu0 0
    %338 = vmatprep.subr.bf16.mxu0 0
    %339 = vmatpush1.bf16.msra.mxu0 0
    %340 = vmatprep.subr.bf16.mxu0 0
    %341 = vmatpush1.bf16.msra.mxu0 0
    %342 = vmatprep.subr.bf16.mxu0 0
    %343 = vmatpush1.bf16.msra.mxu0 0
    %344 = vmatprep.subr.bf16.mxu0 0
    %345 = vmatpush1.bf16.msra.mxu0 0
    %346 = vmatprep.subr.bf16.mxu0 0
    %347 = vmatpush1.bf16.msra.mxu0 0
    %348 = vmatprep.subr.bf16.mxu0 0
    %349 = vmatpush1.bf16.msra.mxu0 0
    %350 = vmatprep.subr.bf16.mxu0 0
    %351 = vmatpush1.bf16.msra.mxu0 0
    %352 = vmatprep.mubr.bf16.mxu0 0
    %353 = vmatmul.mubr.bf16.gmra.mrb[0].mxu0 %v318
    %v354 = vpop.f32.mrb[0].mxu0
    %v355 = vadd.f32 %v290, %v354
    %v356 = vpop.f32.mrb[0].mxu0
    %v357 = vpop.f32.mrb[0].mxu0
    %v358 = vadd.f32 %v290, %v357
    %v359 = vpop.f32.mrb[0].mxu0
    %360 = vdwg.mxu0
    %v361 = vadd.f32 %v355, %v144
    %v362 = vadd.f32 %v358, %v145
    %v363 = vld [vmem:[#allocation14] sm:$0x1]
    %v364 = vld [vmem:[#allocation16] sm:$0x1]
    %v365 = vsel %vm148, %v361, 0.0
    %366 = vadd.xlane.f32.xlu0 %v365
    %v367 = vpop.xlane.xlu0 %366
    %v368 = vsel %vm148, %v362, 0.0
    %369 = vadd.xlane.f32.xlu0 %v368
    %v370 = vpop.xlane.xlu0 %369
    %v371 = vmul.f32 %v367, %v155
    %v372 = vmul.f32 %v370, %v155
    %v373 = vsub.f32 %v361, %v371
    %v374 = vsub.f32 %v362, %v372
    %v375 = vmul.f32 %v373, %v373
    %v376 = vmul.f32 %v374, %v374
    %v377 = vsel %vm148, %v375, 0.0
    %378 = vadd.xlane.f32.xlu0 %v377
    %v379 = vpop.xlane.xlu0 %378
    %v380 = vsel %vm148, %v376, 0.0
    %381 = vadd.xlane.f32.xlu0 %v380
    %v382 = vpop.xlane.xlu0 %381
    %v383 = vmul.f32 %v379, 0.032258064
    %v384 = vmul.f32 %v382, 0.032258064
    %v385 = vrsqrt.pop %v383
    %v386 = vmul.f32 %v383, %v385
    %vm387 = vcmp.eq.f32.partialorder %v383, inf
    %v388 = vsel %vm387, %v383, %v386
    %vm389 = vcmp.eq.f32.partialorder %v383, 0.0
    %v390 = vand.u32 %v383, 2147483648
    %v391 = vsel %vm389, %v390, %v388
    %v392 = vrsqrt.pop %v384
    %v393 = vmul.f32 %v384, %v392
    %vm394 = vcmp.eq.f32.partialorder %v384, inf
    %v395 = vsel %vm394, %v384, %v393
    %vm396 = vcmp.eq.f32.partialorder %v384, 0.0
    %v397 = vand.u32 %v384, 2147483648
    %v398 = vsel %vm396, %v397, %v395
    %v400 = vlaneseq
    %v401 = vshrl.u32 %v400, 7
    %v402 = vsub.s32 0, %v401
    %v403 = vrot.slane %v363, %v402
    %v405 = vmul.f32 %v403, %v373
    %v406 = vmul.f32 %v403, %v374
    %v407 = vadd.f32 %v391, 1e-06
    %v408 = vadd.f32 %v398, 1e-06
    %v409 = vrcp.pop %v407
    %v410 = vmul.f32 %v405, %v409
    %v411 = vrcp.pop %v408
    %v412 = vmul.f32 %v406, %v411
    %v414 = vlaneseq
    %v415 = vshrl.u32 %v414, 7
    %v416 = vsub.s32 0, %v415
    %v417 = vrot.slane %v364, %v416
    %v419 = vadd.f32 %v410, %v417
    %v420 = vadd.f32 %v412, %v417
    %421 = vst.msk [vmem:[#allocation17] sm:$0xff] %vm148, %v419
    %422 = vst.msk [vmem:[#allocation17 + $0x8] sm:$0xff] %vm148, %v420
    // Predicated region
    $region74: #{decoder_forward.11} parent=1 // pred_check
      _
    $region75: #{decoder_forward.11} parent=1 // pred_check_branch
      %424 = sbr.rel (0) target = $region77
    $region76: #{decoder_forward.11} parent=1 // pred_region
      %s426 = ssub.s32 256, 256
      %427 = vsyncadd [#allocation4], %s426
      %s428 = sshll.u32 [#allocation17], 4
      %s429 = int_to_ptr.vmem [resolvable:$true] %s428
      %434 = dma.vmem_to_hbm [thread:$0]  %s429, 256, %s9, [#allocation4], 128, 128, 8
    $region77: #{decoder_forward.11} parent=1 // pred_fallthru
      _
    // Predicated region
    $region78: #{decoder_forward.11} parent=1 // pred_check
      _
    $region79: #{decoder_forward.11} parent=1 // pred_check_branch
      %436 = sbr.rel (0) target = $region81
    $region80: #{decoder_forward.11} parent=1 // pred_region
      %437 = dma.done [#allocation4], 256
    $region81: #{decoder_forward.11} parent=1 // pred_fallthru
      _
    %438 = vsyncpa [#allocation3], 1
    %439 = vsyncpa [#allocation6], 1
    %440 = vsyncpa [#allocation9], 1
    %441 = vsyncpa [#allocation12], 1
    %442 = vsyncpa [#allocation15], 1
    %443 = vsyncpa [#allocation4], 1

// kernel: decoder_forward.6
$region0: #{decoder_forward.6}
  #allocation0 [shape = 'u32[]', space=smem, size = 0x4, offset = 0x4, fixed_abs, tag = 'smem constant byte address 0x4 - core index']
  #allocation1 [shape = 'u32[144,128]{1,0:T(1,128)}', space=vmem, size = 0x12000, scoped, tag = 'internal scratch']
  %s0 = inlined_call_operand.hbm [shape: f32[2,8,32], index: 0, kind: input, shape index: {}, may-alias: {0,8}]
  %s1 = inlined_call_operand.hbm [shape: s8[2,8,8], index: 1, kind: input, shape index: {}]
  %s2 = inlined_call_operand.hbm [shape: f32[1,32], index: 2, kind: input, shape index: {}]
  %s3 = inlined_call_operand.hbm [shape: f32[1,32], index: 3, kind: input, shape index: {}]
  %s4 = inlined_call_operand.hbm [shape: bf16[32,96], index: 4, kind: input, shape index: {}]
  %s5 = inlined_call_operand.hbm [shape: f32[1,96], index: 5, kind: input, shape index: {}]
  %s6 = inlined_call_operand.hbm [shape: bf16[32,32], index: 6, kind: input, shape index: {}]
  %s7 = inlined_call_operand.hbm [shape: f32[1,32], index: 7, kind: input, shape index: {}]
  %s8 = inlined_call_operand.hbm [shape: f32[2,8,32], index: 8, kind: output, shape index: {}, may-alias: {0,8}]
  %s9 = sld [smem:[#allocation0]]
  $region97: #{decoder_forward.6} parent=0
    _
  %s11 = ssub.s32 1, %s9
  %s12 = scalar_select 0, %s11, %s9
  $region1: #{decoder_forward.6} parent=0
    #allocation2 [shape = 'u8[8192]{0}', space=vmem, size = 0x2000, scoped, tag = 'input window, operand 0']
    #allocation3 [shape = 's32[2]{0}', space=sflag, size = 0x8, scoped, tag = 'scoped memory for decoder_forward.6']
    #allocation4 [shape = 's32[2]{0}', space=sflag, size = 0x8, scoped, tag = 'scoped memory for decoder_forward.6']
    #allocation5 [shape = 'u8[2048]{0}', space=vmem, size = 0x800, scoped, tag = 'input window, operand 1']
    #allocation6 [shape = 's32[2]{0}', space=sflag, size = 0x8, scoped, tag = 'scoped memory for decoder_forward.6']
    #allocation7 [shape = 'u8[512]{0}', space=vmem, size = 0x400, scoped, tag = 'input window, operand 2, single buffered']
    #allocation8 [shape = 'u8[512]{0}', space=vmem, size = 0x400, scoped, tag = 'input window, operand 3, single buffered']
    #allocation9 [shape = 's32[1]{0}', space=sflag, size = 0x4, scoped, tag = 'scoped memory for decoder_forward.6']
    #allocation10 [shape = 'u8[8192]{0}', space=vmem, size = 0x2000, scoped, tag = 'input window, operand 4, single buffered']
    #allocation11 [shape = 'u8[512]{0}', space=vmem, size = 0x400, scoped, tag = 'input window, operand 5, single buffered']
    #allocation12 [shape = 's32[1]{0}', space=sflag, size = 0x4, scoped, tag = 'scoped memory for decoder_forward.6']
    #allocation13 [shape = 'u8[8192]{0}', space=vmem, size = 0x2000, scoped, tag = 'input window, operand 6, single buffered']
    #allocation14 [shape = 'u8[512]{0}', space=vmem, size = 0x400, scoped, tag = 'input window, operand 7, single buffered']
    #allocation15 [shape = 's32[1]{0}', space=sflag, size = 0x4, scoped, tag = 'scoped memory for decoder_forward.6']
    #allocation16 [shape = 'u8[8192]{0}', space=vmem, size = 0x2000, scoped, tag = 'output window, operand 0']
    %13 = vsyncpa [#allocation3], 0
    %s14 = scalar_lea.sflag [#allocation3], 1
    %15 = vsyncpa %s14, 0
    %16 = vsyncpa [#allocation6], 0
    %s17 = scalar_lea.sflag [#allocation6], 1
    %18 = vsyncpa %s17, 0
    %19 = vsyncpa [#allocation9], 0
    %20 = vsyncpa [#allocation12], 0
    %21 = vsyncpa [#allocation15], 0
    %22 = vsyncpa [#allocation4], 0
    %s23 = scalar_lea.sflag [#allocation4], 1
    %24 = vsyncpa %s23, 0
    loop: start=0, step=1, limit=4
    $region2: #{decoder_forward.6} parent=1 // loop_pre_header
      _
    $region3: #{decoder_forward.6} parent=1 // loop_header
      %s26 = sphi 0, %s30
      %p27 = scmp.ge.s32.totalorder %s26, 4
      %s33 = sphi 0, %s45
      %s34 = sphi 0, %s41
      %s35 = sphi 0, %s33
      %s36 = sphi 0, %s34
      %s37 = sphi 0, %s35
      %s38 = sphi 0, %s36
      %s50 = sphi 0, %s52
      %s53 = sphi 0, %s50
      %s54 = sphi 0, %s53
      %s70 = sphi 0, %s54
      %s78 = sphi 0, %s80
      %s81 = sphi 0, %s78
      %s82 = sphi 0, %s81
      %s98 = sphi 0, %s82
      %s102 = sphi 0, %s102
      %s104 = sphi 0, %s102
      %s105 = sphi 0, %s104
      %s119 = sphi 0, %s105
      %s123 = sphi 0, %s123
      %s125 = sphi 0, %s123
      %s126 = sphi 0, %s125
      %s140 = sphi 0, %s126
      %s144 = sphi 0, %s144
      %s146 = sphi 0, %s144
      %s147 = sphi 0, %s146
      %s161 = sphi 0, %s147
      %s165 = sphi 0, %s165
      %s167 = sphi 0, %s165
      %s168 = sphi 0, %s167
      %s182 = sphi 0, %s168
      %s186 = sphi 0, %s186
      %s188 = sphi 0, %s186
      %s189 = sphi 0, %s188
      %s203 = sphi 0, %s189
      %s207 = sphi 0, %s207
      %s209 = sphi 0, %s207
      %s210 = sphi 0, %s209
      %s224 = sphi 0, %s210
      %s232 = sphi 0, %s234
      %s235 = sphi 0, %s232
      %s236 = sphi 0, %s235
      %s252 = sphi 0, %s236
    $region4: #{decoder_forward.6} parent=1 // loop_header_branch
      %29 = sbr.rel (%p27) target = $region8
    $region5: #{decoder_forward.6} parent=1 // loop_body
      %s31 = ssub.s32 %s26, 1
      %s32 = ssub.s32 %s26, 2
      %s39 = sadd.s32 1, %s34
      %p40 = scmp.ge.s32.totalorder %s39, 1
      %s41 = scalar_select %p40, 0, %s39
      %s42 = sadd.s32 1, %s33
      %s43 = scalar_select %p40, %s42, %s33
      %p44 = scmp.ge.s32.totalorder %s43, 2
      %s45 = scalar_select %p44, 0, %s43
      %s46 = ssub.s32 %s33, %s45
      %s47 = ssub.s32 %s34, %s41
      %s48 = sor.u32 %s46, %s47
      %p49 = scmp.eq.s32.totalorder %s48, 0
      %s51 = sadd.s32 %s50, 1
      %s52 = scalar_select %p49, %s50, %s51
      %p55 = pneg %p49
      %p56 = scmp.eq.s32.totalorder %s26, 1
      %p57 = por %p55, %p56
      %p58 = scmp.ne.s32.totalorder %s50, %s53
      %p59 = scmp.eq.s32.totalorder %s26, 0
      %p60 = por %p58, %p59
      %p61 = scmp.ne.s32.totalorder %s50, %s53
      %p62 = scmp.eq.s32.totalorder %s31, 1
      %p63 = por %p61, %p62
      %p64 = scmp.ne.s32.totalorder %s53, %s54
      %p65 = scmp.eq.s32.totalorder %s31, 0
      %p66 = por %p64, %p65
      %p67 = scmp.ne.s32.totalorder %s53, %s54
      %p68 = scmp.eq.s32.totalorder %s32, 1
      %p69 = por %p67, %p68
      %p71 = scmp.ne.s32.totalorder %s54, %s70
      %p72 = scmp.eq.s32.totalorder %s32, 0
      %p73 = por %p71, %p72
      %s74 = ssub.s32 %s33, %s45
      %s75 = ssub.s32 %s34, %s41
      %s76 = sor.u32 %s74, %s75
      %p77 = scmp.eq.s32.totalorder %s76, 0
      %s79 = sadd.s32 %s78, 1
      %s80 = scalar_select %p77, %s78, %s79
      %p83 = pneg %p77
      %p84 = scmp.eq.s32.totalorder %s26, 1
      %p85 = por %p83, %p84
      %p86 = scmp.ne.s32.totalorder %s78, %s81
      %p87 = scmp.eq.s32.totalorder %s26, 0
      %p88 = por %p86, %p87
      %p89 = scmp.ne.s32.totalorder %s78, %s81
      %p90 = scmp.eq.s32.totalorder %s31, 1
      %p91 = por %p89, %p90
      %p92 = scmp.ne.s32.totalorder %s81, %s82
      %p93 = scmp.eq.s32.totalorder %s31, 0
      %p94 = por %p92, %p93
      %p95 = scmp.ne.s32.totalorder %s81, %s82
      %p96 = scmp.eq.s32.totalorder %s32, 1
      %p97 = por %p95, %p96
      %p99 = scmp.ne.s32.totalorder %s82, %s98
      %p100 = scmp.eq.s32.totalorder %s32, 0
      %p101 = por %p99, %p100
      %s103 = sadd.s32 %s102, 1
      %p106 = scmp.eq.s32.totalorder %s26, 1
      %p107 = scmp.ne.s32.totalorder %s102, %s104
      %p108 = scmp.eq.s32.totalorder %s26, 0
      %p109 = por %p107, %p108
      %p110 = scmp.ne.s32.totalorder %s102, %s104
      %p111 = scmp.eq.s32.totalorder %s31, 1
      %p112 = por %p110, %p111
      %p113 = scmp.ne.s32.totalorder %s104, %s105
      %p114 = scmp.eq.s32.totalorder %s31, 0
      %p115 = por %p113, %p114
      %p116 = scmp.ne.s32.totalorder %s104, %s105
      %p117 = scmp.eq.s32.totalorder %s32, 1
      %p118 = por %p116, %p117
      %p120 = scmp.ne.s32.totalorder %s105, %s119
      %p121 = scmp.eq.s32.totalorder %s32, 0
      %p122 = por %p120, %p121
      %s124 = sadd.s32 %s123, 1
      %p127 = scmp.eq.s32.totalorder %s26, 1
      %p128 = scmp.ne.s32.totalorder %s123, %s125
      %p129 = scmp.eq.s32.totalorder %s26, 0
      %p130 = por %p128, %p129
      %p131 = scmp.ne.s32.totalorder %s123, %s125
      %p132 = scmp.eq.s32.totalorder %s31, 1
      %p133 = por %p131, %p132
      %p134 = scmp.ne.s32.totalorder %s125, %s126
      %p135 = scmp.eq.s32.totalorder %s31, 0
      %p136 = por %p134, %p135
      %p137 = scmp.ne.s32.totalorder %s125, %s126
      %p138 = scmp.eq.s32.totalorder %s32, 1
      %p139 = por %p137, %p138
      %p141 = scmp.ne.s32.totalorder %s126, %s140
      %p142 = scmp.eq.s32.totalorder %s32, 0
      %p143 = por %p141, %p142
      %s145 = sadd.s32 %s144, 1
      %p148 = scmp.eq.s32.totalorder %s26, 1
      %p149 = scmp.ne.s32.totalorder %s144, %s146
      %p150 = scmp.eq.s32.totalorder %s26, 0
      %p151 = por %p149, %p150
      %p152 = scmp.ne.s32.totalorder %s144, %s146
      %p153 = scmp.eq.s32.totalorder %s31, 1
      %p154 = por %p152, %p153
      %p155 = scmp.ne.s32.totalorder %s146, %s147
      %p156 = scmp.eq.s32.totalorder %s31, 0
      %p157 = por %p155, %p156
      %p158 = scmp.ne.s32.totalorder %s146, %s147
      %p159 = scmp.eq.s32.totalorder %s32, 1
      %p160 = por %p158, %p159
      %p162 = scmp.ne.s32.totalorder %s147, %s161
      %p163 = scmp.eq.s32.totalorder %s32, 0
      %p164 = por %p162, %p163
      %s166 = sadd.s32 %s165, 1
      %p169 = scmp.eq.s32.totalorder %s26, 1
      %p170 = scmp.ne.s32.totalorder %s165, %s167
      %p171 = scmp.eq.s32.totalorder %s26, 0
      %p172 = por %p170, %p171
      %p173 = scmp.ne.s32.totalorder %s165, %s167
      %p174 = scmp.eq.s32.totalorder %s31, 1
      %p175 = por %p173, %p174
      %p176 = scmp.ne.s32.totalorder %s167, %s168
      %p177 = scmp.eq.s32.totalorder %s31, 0
      %p178 = por %p176, %p177
      %p179 = scmp.ne.s32.totalorder %s167, %s168
      %p180 = scmp.eq.s32.totalorder %s32, 1
      %p181 = por %p179, %p180
      %p183 = scmp.ne.s32.totalorder %s168, %s182
      %p184 = scmp.eq.s32.totalorder %s32, 0
      %p185 = por %p183, %p184
      %s187 = sadd.s32 %s186, 1
      %p190 = scmp.eq.s32.totalorder %s26, 1
      %p191 = scmp.ne.s32.totalorder %s186, %s188
      %p192 = scmp.eq.s32.totalorder %s26, 0
      %p193 = por %p191, %p192
      %p194 = scmp.ne.s32.totalorder %s186, %s188
      %p195 = scmp.eq.s32.totalorder %s31, 1
      %p196 = por %p194, %p195
      %p197 = scmp.ne.s32.totalorder %s188, %s189
      %p198 = scmp.eq.s32.totalorder %s31, 0
      %p199 = por %p197, %p198
      %p200 = scmp.ne.s32.totalorder %s188, %s189
      %p201 = scmp.eq.s32.totalorder %s32, 1
      %p202 = por %p200, %p201
      %p204 = scmp.ne.s32.totalorder %s189, %s203
      %p205 = scmp.eq.s32.totalorder %s32, 0
      %p206 = por %p204, %p205
      %s208 = sadd.s32 %s207, 1
      %p211 = scmp.eq.s32.totalorder %s26, 1
      %p212 = scmp.ne.s32.totalorder %s207, %s209
      %p213 = scmp.eq.s32.totalorder %s26, 0
      %p214 = por %p212, %p213
      %p215 = scmp.ne.s32.totalorder %s207, %s209
      %p216 = scmp.eq.s32.totalorder %s31, 1
      %p217 = por %p215, %p216
      %p218 = scmp.ne.s32.totalorder %s209, %s210
      %p219 = scmp.eq.s32.totalorder %s31, 0
      %p220 = por %p218, %p219
      %p221 = scmp.ne.s32.totalorder %s209, %s210
      %p222 = scmp.eq.s32.totalorder %s32, 1
      %p223 = por %p221, %p222
      %p225 = scmp.ne.s32.totalorder %s210, %s224
      %p226 = scmp.eq.s32.totalorder %s32, 0
      %p227 = por %p225, %p226
      %s228 = ssub.s32 %s33, %s45
      %s229 = ssub.s32 %s34, %s41
      %s230 = sor.u32 %s228, %s229
      %p231 = scmp.eq.s32.totalorder %s230, 0
      %s233 = sadd.s32 %s232, 1
      %s234 = scalar_select %p231, %s232, %s233
      %p237 = pneg %p231
      %p238 = scmp.eq.s32.totalorder %s26, 1
      %p239 = por %p237, %p238
      %p240 = scmp.ne.s32.totalorder %s232, %s235
      %p241 = scmp.eq.s32.totalorder %s26, 0
      %p242 = por %p240, %p241
      %p243 = scmp.ne.s32.totalorder %s232, %s235
      %p244 = scmp.eq.s32.totalorder %s31, 1
      %p245 = por %p243, %p244
      %p246 = scmp.ne.s32.totalorder %s235, %s236
      %p247 = scmp.eq.s32.totalorder %s31, 0
      %p248 = por %p246, %p247
      %p249 = scmp.ne.s32.totalorder %s235, %s236
      %p250 = scmp.eq.s32.totalorder %s32, 1
      %p251 = por %p249, %p250
      %p253 = scmp.ne.s32.totalorder %s236, %s252
      %p254 = scmp.eq.s32.totalorder %s32, 0
      %p255 = por %p253, %p254
      %p256 = scmp.le.s32.totalorder 1, %s26
      %p257 = scmp.lt.s32.totalorder %s26, 3
      %p258 = pnand %p256, %p257
      %p259 = pneg %p258
      // Predicated region
      $region9: #{decoder_forward.6} parent=5 // pred_check
        _
      $region10: #{decoder_forward.6} parent=5 // pred_check_branch
        %261 = sbr.rel (%p258) target = $region12
      $region11: #{decoder_forward.6} parent=5 // pred_region
        %s262 = ssub.s32 %s26, 1
        // Predicated region
        $region13: #{decoder_forward.6} parent=11 // pred_check
          %p263 = pneg %p115
        $region14: #{decoder_forward.6} parent=11 // pred_check_branch
          %265 = sbr.rel (%p263) target = $region16
        $region15: #{decoder_forward.6} parent=11 // pred_region
          %s267 = ssub.s32 16, 16
          %268 = vsyncadd [#allocation6], %s267
          %s270 = sshll.u32 [#allocation7], 4
          %s271 = int_to_ptr.vmem [resolvable:$true] %s270
          %273 = dma.hbm_to_vmem [thread:$0]  %s2, 16, %s271, [#allocation6]
        $region16: #{decoder_forward.6} parent=11 // pred_fallthru
          _
        // Predicated region
        $region17: #{decoder_forward.6} parent=11 // pred_check
          %p274 = pneg %p136
        $region18: #{decoder_forward.6} parent=11 // pred_check_branch
          %276 = sbr.rel (%p274) target = $region20
        $region19: #{decoder_forward.6} parent=11 // pred_region
          %s278 = ssub.s32 16, 16
          %279 = vsyncadd [#allocation9], %s278
          %s281 = sshll.u32 [#allocation8], 4
          %s282 = int_to_ptr.vmem [resolvable:$true] %s281
          %284 = dma.hbm_to_vmem [thread:$0]  %s3, 16, %s282, [#allocation9]
        $region20: #{decoder_forward.6} parent=11 // pred_fallthru
          _
        // Predicated region
        $region21: #{decoder_forward.6} parent=11 // pred_check
          %p285 = pneg %p157
        $region22: #{decoder_forward.6} parent=11 // pred_check_branch
          %287 = sbr.rel (%p285) target = $region24
        $region23: #{decoder_forward.6} parent=11 // pred_region
          %s289 = ssub.s32 256, 256
          %290 = vsyncadd [#allocation9], %s289
          %s291 = sshll.u32 [#allocation10], 4
          %s292 = int_to_ptr.vmem [resolvable:$true] %s291
          %297 = dma.hbm_to_vmem [thread:$0]  %s4, 256, %s292, [#allocation9], 64, 64, 4
        $region24: #{decoder_forward.6} parent=11 // pred_fallthru
          _
        // Predicated region
        $region25: #{decoder_forward.6} parent=11 // pred_check
          %p298 = pneg %p178
        $region26: #{decoder_forward.6} parent=11 // pred_check_branch
          %300 = sbr.rel (%p298) target = $region28
        $region27: #{decoder_forward.6} parent=11 // pred_region
          %s302 = ssub.s32 16, 16
          %303 = vsyncadd [#allocation12], %s302
          %s305 = sshll.u32 [#allocation11], 4
          %s306 = int_to_ptr.vmem [resolvable:$true] %s305
          %308 = dma.hbm_to_vmem [thread:$0]  %s5, 16, %s306, [#allocation12]
        $region28: #{decoder_forward.6} parent=11 // pred_fallthru
          _
        // Predicated region
        $region29: #{decoder_forward.6} parent=11 // pred_check
          %p309 = pneg %p199
        $region30: #{decoder_forward.6} parent=11 // pred_check_branch
          %311 = sbr.rel (%p309) target = $region32
        $region31: #{decoder_forward.6} parent=11 // pred_region
          %s313 = ssub.s32 256, 256
          %314 = vsyncadd [#allocation12], %s313
          %s315 = sshll.u32 [#allocation13], 4
          %s316 = int_to_ptr.vmem [resolvable:$true] %s315
          %321 = dma.hbm_to_vmem [thread:$0]  %s6, 256, %s316, [#allocation12], 64, 64, 4
        $region32: #{decoder_forward.6} parent=11 // pred_fallthru
          _
        // Predicated region
        $region33: #{decoder_forward.6} parent=11 // pred_check
          %p322 = pneg %p220
        $region34: #{decoder_forward.6} parent=11 // pred_check_branch
          %324 = sbr.rel (%p322) target = $region36
        $region35: #{decoder_forward.6} parent=11 // pred_region
          %s326 = ssub.s32 16, 16
          %327 = vsyncadd [#allocation15], %s326
          %s329 = sshll.u32 [#allocation14], 4
          %s330 = int_to_ptr.vmem [resolvable:$true] %s329
          %332 = dma.hbm_to_vmem [thread:$0]  %s7, 16, %s330, [#allocation15]
        $region36: #{decoder_forward.6} parent=11 // pred_fallthru
          _
      $region12: #{decoder_forward.6} parent=5 // pred_fallthru
        _
      %p333 = scmp.lt.s32.totalorder %s26, 2
      // Predicated region
      $region37: #{decoder_forward.6} parent=5 // pred_check
        %p334 = pneg %p333
      $region38: #{decoder_forward.6} parent=5 // pred_check_branch
        %336 = sbr.rel (%p334) target = $region40
      $region39: #{decoder_forward.6} parent=5 // pred_region
        // Predicated region
        $region41: #{decoder_forward.6} parent=39 // pred_check
          %p337 = pneg %p60
        $region42: #{decoder_forward.6} parent=39 // pred_check_branch
          %339 = sbr.rel (%p337) target = $region44
        $region43: #{decoder_forward.6} parent=39 // pred_region
          %s340 = sand.u32 %s50, 1
          %s341 = scalar_lea.sflag [#allocation3], %s340
          %s342 = sand.u32 %s50, 1
          %s343 = smul.addr %s342, 8
          %s344 = scalar_lea.vmem [#allocation2], %s343
          %s346 = ssub.s32 128, 128
          %347 = vsyncadd %s341, %s346
          %s348 = sadd.s32 %s34, %s33
          %s349 = smul.addr %s348, 128
          %s350 = scalar_lea.hbm %s0, %s349
          %s352 = sshll.u32 %s344, 4
          %s353 = int_to_ptr.vmem [resolvable:$true] %s352
          %355 = dma.hbm_to_vmem [thread:$0]  %s350, 128, %s353, %s341
        $region44: #{decoder_forward.6} parent=39 // pred_fallthru
          _
        // Predicated region
        $region45: #{decoder_forward.6} parent=39 // pred_check
          %p356 = pneg %p88
        $region46: #{decoder_forward.6} parent=39 // pred_check_branch
          %358 = sbr.rel (%p356) target = $region48
        $region47: #{decoder_forward.6} parent=39 // pred_region
          %s359 = sand.u32 %s26, 1
          %s360 = scalar_lea.sflag [#allocation6], %s359
          %s361 = sand.u32 %s78, 1
          %s362 = smul.addr %s361, 2
          %s363 = scalar_lea.vmem [#allocation5], %s362
          %s365 = ssub.s32 32, 32
          %366 = vsyncadd %s360, %s365
          %s367 = sadd.s32 %s34, %s33
          %s368 = smul.addr %s367, 32
          %s369 = scalar_lea.hbm %s1, %s368
          %s371 = sshll.u32 %s363, 4
          %s372 = int_to_ptr.vmem [resolvable:$true] %s371
          %374 = dma.hbm_to_vmem [thread:$0]  %s369, 32, %s372, %s360
        $region48: #{decoder_forward.6} parent=39 // pred_fallthru
          _
      $region40: #{decoder_forward.6} parent=5 // pred_fallthru
        _
      %p375 = scmp.le.s32.totalorder 1, %s26
      %p376 = scmp.lt.s32.totalorder %s26, 3
      %p377 = pnand %p375, %p376
      %p378 = pneg %p377
      // Predicated region
      $region49: #{decoder_forward.6} parent=5 // pred_check
        _
      $region50: #{decoder_forward.6} parent=5 // pred_check_branch
        %380 = sbr.rel (%p377) target = $region52
      $region51: #{decoder_forward.6} parent=5 // pred_region
        %s381 = ssub.s32 %s26, 1
        %s382 = sand.u32 %s53, 1
        %s383 = scalar_lea.sflag [#allocation3], %s382
        %s384 = sand.u32 %s53, 1
        %s385 = smul.addr %s384, 8
        %s386 = scalar_lea.vmem [#allocation2], %s385
        // Predicated region
        $region53: #{decoder_forward.6} parent=51 // pred_check
          %p387 = pneg %p66
        $region54: #{decoder_forward.6} parent=51 // pred_check_branch
          %389 = sbr.rel (%p387) target = $region56
        $region55: #{decoder_forward.6} parent=51 // pred_region
          %390 = dma.done %s383, 128
        $region56: #{decoder_forward.6} parent=51 // pred_fallthru
          _
        %s391 = sand.u32 %s31, 1
        %s392 = scalar_lea.sflag [#allocation6], %s391
        %s393 = sand.u32 %s81, 1
        %s394 = smul.addr %s393, 2
        %s395 = scalar_lea.vmem [#allocation5], %s394
        // Predicated region
        $region57: #{decoder_forward.6} parent=51 // pred_check
          %p396 = pneg %p94
        $region58: #{decoder_forward.6} parent=51 // pred_check_branch
          %398 = sbr.rel (%p396) target = $region60
        $region59: #{decoder_forward.6} parent=51 // pred_region
          %399 = dma.done %s392, 32
        $region60: #{decoder_forward.6} parent=51 // pred_fallthru
          _
        // Predicated region
        $region61: #{decoder_forward.6} parent=51 // pred_check
          %p400 = pneg %p115
        $region62: #{decoder_forward.6} parent=51 // pred_check_branch
          %402 = sbr.rel (%p400) target = $region64
        $region63: #{decoder_forward.6} parent=51 // pred_region
          %403 = dma.done [#allocation6], 16
        $region64: #{decoder_forward.6} parent=51 // pred_fallthru
          _
        // Predicated region
        $region65: #{decoder_forward.6} parent=51 // pred_check
          %p404 = pneg %p136
        $region66: #{decoder_forward.6} parent=51 // pred_check_branch
          %406 = sbr.rel (%p404) target = $region68
        $region67: #{decoder_forward.6} parent=51 // pred_region
          %407 = dma.done [#allocation9], 16
        $region68: #{decoder_forward.6} parent=51 // pred_fallthru
          _
        // Predicated region
        $region69: #{decoder_forward.6} parent=51 // pred_check
          %p408 = pneg %p157
        $region70: #{decoder_forward.6} parent=51 // pred_check_branch
          %410 = sbr.rel (%p408) target = $region72
        $region71: #{decoder_forward.6} parent=51 // pred_region
          %411 = dma.done [#allocation9], 256
        $region72: #{decoder_forward.6} parent=51 // pred_fallthru
          _
        // Predicated region
        $region73: #{decoder_forward.6} parent=51 // pred_check
          %p412 = pneg %p178
        $region74: #{decoder_forward.6} parent=51 // pred_check_branch
          %414 = sbr.rel (%p412) target = $region76
        $region75: #{decoder_forward.6} parent=51 // pred_region
          %415 = dma.done [#allocation12], 16
        $region76: #{decoder_forward.6} parent=51 // pred_fallthru
          _
        // Predicated region
        $region77: #{decoder_forward.6} parent=51 // pred_check
          %p416 = pneg %p199
        $region78: #{decoder_forward.6} parent=51 // pred_check_branch
          %418 = sbr.rel (%p416) target = $region80
        $region79: #{decoder_forward.6} parent=51 // pred_region
          %419 = dma.done [#allocation12], 256
        $region80: #{decoder_forward.6} parent=51 // pred_fallthru
          _
        // Predicated region
        $region81: #{decoder_forward.6} parent=51 // pred_check
          %p420 = pneg %p220
        $region82: #{decoder_forward.6} parent=51 // pred_check_branch
          %422 = sbr.rel (%p420) target = $region84
        $region83: #{decoder_forward.6} parent=51 // pred_region
          %423 = dma.done [#allocation15], 16
        $region84: #{decoder_forward.6} parent=51 // pred_fallthru
          _
        %s424 = sand.u32 %s53, 1
        %s425 = scalar_lea.sflag [#allocation3], %s424
        %s426 = sand.u32 %s53, 1
        %s427 = smul.addr %s426, 8
        %s428 = scalar_lea.vmem [#allocation2], %s427
        %p429 = pneg %p66
        %p430 = pneg %p63
        %s431 = sand.u32 %s31, 1
        %s432 = scalar_lea.sflag [#allocation6], %s431
        %s433 = sand.u32 %s81, 1
        %s434 = smul.addr %s433, 2
        %s435 = scalar_lea.vmem [#allocation5], %s434
        %p436 = pneg %p94
        %p437 = pneg %p91
        %p438 = pneg %p115
        %p439 = pneg %p112
        %p440 = pneg %p136
        %p441 = pneg %p133
        %p442 = pneg %p157
        %p443 = pneg %p154
        %p444 = pneg %p178
        %p445 = pneg %p175
        %p446 = pneg %p199
        %p447 = pneg %p196
        %p448 = pneg %p220
        %p449 = pneg %p217
        %p450 = pneg %p248
        %p451 = pneg %p245
        %s452 = sand.u32 %s235, 1
        %s453 = scalar_lea.sflag [#allocation4], %s452
        %s454 = sand.u32 %s235, 1
        %s455 = smul.addr %s454, 8
        %s456 = scalar_lea.vmem [#allocation16], %s455
        %v458 = vld [vmem:[%s386] sm:$0xff]
        %v459 = vld [vmem:[#allocation7] sm:$0x1]
        %v460 = vld [vmem:[#allocation8] sm:$0x1]
        %vm461 = vcmask 261120
        %v462 = vsel %vm461, %v458, 0.0
        %463 = vadd.xlane.f32.xlu0 %v462
        %v464 = vpop.xlane.xlu0 %463
        %v465 = vrcp.pop 32.0
        %v466 = vmul.f32 %v464, %v465
        %v467 = vsub.f32 %v458, %v466
        %v468 = vmul.f32 %v467, %v467
        %v469 = vsel %vm461, %v468, 0.0
        %470 = vadd.xlane.f32.xlu0 %v469
        %v471 = vpop.xlane.xlu0 %470
        %v472 = vmul.f32 %v471, 0.032258064
        %v473 = vrsqrt.pop %v472
        %v474 = vmul.f32 %v472, %v473
        %vm475 = vcmp.eq.f32.partialorder %v472, inf
        %v476 = vsel %vm475, %v472, %v474
        %vm477 = vcmp.eq.f32.partialorder %v472, 0.0
        %v478 = vand.u32 %v472, 2147483648
        %v479 = vsel %vm477, %v478, %v476
        %v481 = vlaneseq
        %v482 = vshrl.u32 %v481, 7
        %v483 = vsub.s32 0, %v482
        %v484 = vrot.slane %v459, %v483
        %v486 = vmul.f32 %v484, %v467
        %v487 = vadd.f32 %v479, 1e-06
        %v488 = vrcp.pop %v487
        %v489 = vmul.f32 %v486, %v488
        %v491 = vlaneseq
        %v492 = vshrl.u32 %v491, 7
        %v493 = vsub.s32 0, %v492
        %v494 = vrot.slane %v460, %v493
        %v496 = vadd.f32 %v489, %v494
        %v497 = vpack.c.bf16 %v496, %v496
        %v498 = vld [vmem:[#allocation10] sm:$0xf]
        %v499 = vld [vmem:[#allocation10 + $0x4] sm:$0xf]
        %v500 = vld [vmem:[#allocation10 + $0x8] sm:$0xf]
        %v501 = vld [vmem:[#allocation10 + $0xc] sm:$0xf]
        %v502 = vld [vmem:[#allocation11] sm:$0x1]
        %v504 = vlaneseq
        %v505 = vshrl.u32 %v504, 7
        %v506 = vsub.s32 0, %v505
        %v507 = vrot.slane %v502, %v506
        %v513 = vunpack.c.l.b16 %v498
        %v514 = vunpack.c.l.b16 %v499
        %v515 = vunpack.c.l.b16 %v500
        %v516 = vunpack.c.l.b16 %v501
        %v517 = vpack.c.b16 %v514, %v513
        %v518 = vpack.c.b16 %v516, %v515
        %v522 = vsel %vm461, %v497, 0
        %524 = vmatprep.subr.bf16.mxu0 0
        %525 = vmatpush1.bf16.msra.mxu0 %v517
        %526 = vmatprep.subr.bf16.mxu0 0
        %527 = vmatpush1.bf16.msra.mxu0 %v518
        %528 = vmatprep.subr.bf16.mxu0 0
        %529 = vmatpush1.bf16.msra.mxu0 0
        %530 = vmatprep.subr.bf16.mxu0 0
        %531 = vmatpush1.bf16.msra.mxu0 0
        %532 = vmatprep.subr.bf16.mxu0 0
        %533 = vmatpush1.bf16.msra.mxu0 0
        %534 = vmatprep.subr.bf16.mxu0 0
        %535 = vmatpush1.bf16.msra.mxu0 0
        %536 = vmatprep.subr.bf16.mxu0 0
        %537 = vmatpush1.bf16.msra.mxu0 0
        %538 = vmatprep.subr.bf16.mxu0 0
        %539 = vmatpush1.bf16.msra.mxu0 0
        %540 = vmatprep.subr.bf16.mxu0 0
        %541 = vmatpush1.bf16.msra.mxu0 0
        %542 = vmatprep.subr.bf16.mxu0 0
        %543 = vmatpush1.bf16.msra.mxu0 0
        %544 = vmatprep.subr.bf16.mxu0 0
        %545 = vmatpush1.bf16.msra.mxu0 0
        %546 = vmatprep.subr.bf16.mxu0 0
        %547 = vmatpush1.bf16.msra.mxu0 0
        %548 = vmatprep.subr.bf16.mxu0 0
        %549 = vmatpush1.bf16.msra.mxu0 0
        %550 = vmatprep.subr.bf16.mxu0 0
        %551 = vmatpush1.bf16.msra.mxu0 0
        %552 = vmatprep.subr.bf16.mxu0 0
        %553 = vmatpush1.bf16.msra.mxu0 0
        %554 = vmatprep.subr.bf16.mxu0 0
        %555 = vmatpush1.bf16.msra.mxu0 0
        %556 = vmatprep.mubr.bf16.mxu0 0
        %557 = vmatmul.mubr.bf16.gmra.mrb[0].mxu0 %v522
        %v558 = vpop.f32.mrb[0].mxu0
        %v559 = vadd.f32 %v507, %v558
        %v560 = vpop.f32.mrb[0].mxu0
        %v561 = vpop.f32.mrb[0].mxu0
        %v562 = vpop.f32.mrb[0].mxu0
        %563 = vdwg.mxu0
        %v564 = vmul.f32 %v559, 0.35355338
        %v565 = vld [vmem:[%s395] sm:$0x3]
        %v566 = vunpack.c.0.s8 %v565
        %vm567 = vcmp.eq.s32.totalorder %v566, 0
        %v568 = vld [vmem:[#allocation13] sm:$0xf]
        %v569 = vld [vmem:[#allocation13 + $0x4] sm:$0xf]
        %v570 = vld [vmem:[#allocation13 + $0x8] sm:$0xf]
        %v571 = vld [vmem:[#allocation13 + $0xc] sm:$0xf]
        %v572 = vpack.c.bf16 %v564, %v564
        %v573 = vpack.c.bf16 %v559, %v559
        %575 = vrot.lane.b32.xlu0 %v573, 96
        %v576 = vpop.permute.xlu0 %575
        %vm577 = vcmask 64512
        %v579 = vsel %vm577, %v572, 0
        %v582 = vsel %vm577, %v576, 0
        %584 = vmatprep.subr.bf16.mxu0 0
        %585 = vmatpush1.bf16.xpose.msra.mxu0 %v582
        %586 = vmatprep.subr.bf16.mxu0 0
        %587 = vmatpush1.bf16.xpose.msra.mxu0 0
        %588 = vmatprep.subr.bf16.mxu0 0
        %589 = vmatpush1.bf16.xpose.msra.mxu0 0
        %590 = vmatprep.subr.bf16.mxu0 0
        %591 = vmatpush1.bf16.xpose.msra.mxu0 0
        %592 = vmatprep.subr.bf16.mxu0 0
        %593 = vmatpush1.bf16.xpose.msra.mxu0 0
        %594 = vmatprep.subr.bf16.mxu0 0
        %595 = vmatpush1.bf16.xpose.msra.mxu0 0
        %596 = vmatprep.subr.bf16.mxu0 0
        %597 = vmatpush1.bf16.xpose.msra.mxu0 0
        %598 = vmatprep.subr.bf16.mxu0 0
        %599 = vmatpush1.bf16.xpose.msra.mxu0 0
        %600 = vmatprep.subr.bf16.mxu0 0
        %601 = vmatpush1.bf16.xpose.msra.mxu0 0
        %602 = vmatprep.subr.bf16.mxu0 0
        %603 = vmatpush1.bf16.xpose.msra.mxu0 0
        %604 = vmatprep.subr.bf16.mxu0 0
        %605 = vmatpush1.bf16.xpose.msra.mxu0 0
        %606 = vmatprep.subr.bf16.mxu0 0
        %607 = vmatpush1.bf16.xpose.msra.mxu0 0
        %608 = vmatprep.subr.bf16.mxu0 0
        %609 = vmatpush1.bf16.xpose.msra.mxu0 0
        %610 = vmatprep.subr.bf16.mxu0 0
        %611 = vmatpush1.bf16.xpose.msra.mxu0 0
        %612 = vmatprep.subr.bf16.mxu0 0
        %613 = vmatpush1.bf16.xpose.msra.mxu0 0
        %614 = vmatprep.subr.bf16.mxu0 0
        %615 = vmatpush1.bf16.xpose.msra.mxu0 0
        %616 = vmatprep.mubr.bf16.mxu0 0
        %617 = vmatmul.mubr.bf16.gmra.mrb[0].mxu0 %v579
        %v618 = vpop.f32.mrb[0].mxu0
        %v619 = vadd.f32 0.0, %v618
        %v620 = vpop.f32.mrb[0].mxu0
        %v621 = vpop.f32.mrb[0].mxu0
        %v622 = vpop.f32.mrb[0].mxu0
        %623 = vdwg.mxu0
        %v624 = vsel %vm567, -1e+09, %v619
        %v625 = vsel %vm577, %v624, -inf
        %626 = vmax.xlane.f32.xlu0 %v625
        %v627 = vpop.xlane.xlu0 %626
        %v628 = vsub.f32 %v624, %v627
        %v629 = vmul.f32 %v628, 1.442695
        %v630 = vpow.pop %v629
        %v631 = vsel %vm577, %v630, 0.0
        %632 = vadd.xlane.f32.xlu0 %v631
        %v633 = vpop.xlane.xlu0 %632
        %v634 = vrcp.pop %v633
        %v635 = vmul.f32 %v630, %v634
        %v636 = vpack.c.bf16 %v635, %v635
        %637 = vrot.lane.b32.xlu0 %v573, 64
        %v638 = vpop.permute.xlu0 %637
        %v640 = vsel %vm577, %v636, 0
        %vm642 = vcmask 1043456
        %v644 = vsel %vm642, %v638, 0
        %646 = vmatprep.subr.bf16.mxu0 0
        %647 = vmatpush1.bf16.msra.mxu0 %v644
        %648 = vmatprep.subr.bf16.mxu0 0
        %649 = vmatpush1.bf16.msra.mxu0 0
        %650 = vmatprep.subr.bf16.mxu0 0
        %651 = vmatpush1.bf16.msra.mxu0 0
        %652 = vmatprep.subr.bf16.mxu0 0
        %653 = vmatpush1.bf16.msra.mxu0 0
        %654 = vmatprep.subr.bf16.mxu0 0
        %655 = vmatpush1.bf16.msra.mxu0 0
        %656 = vmatprep.subr.bf16.mxu0 0
        %657 = vmatpush1.bf16.msra.mxu0 0
        %658 = vmatprep.subr.bf16.mxu0 0
        %659 = vmatpush1.bf16.msra.mxu0 0
        %660 = vmatprep.subr.bf16.mxu0 0
        %661 = vmatpush1.bf16.msra.mxu0 0
        %662 = vmatprep.subr.bf16.mxu0 0
        %663 = vmatpush1.bf16.msra.mxu0 0
        %664 = vmatprep.subr.bf16.mxu0 0
        %665 = vmatpush1.bf16.msra.mxu0 0
        %666 = vmatprep.subr.bf16.mxu0 0
        %667 = vmatpush1.bf16.msra.mxu0 0
        %668 = vmatprep.subr.bf16.mxu0 0
        %669 = vmatpush1.bf16.msra.mxu0 0
        %670 = vmatprep.subr.bf16.mxu0 0
        %671 = vmatpush1.bf16.msra.mxu0 0
        %672 = vmatprep.subr.bf16.mxu0 0
        %673 = vmatpush1.bf16.msra.mxu0 0
        %674 = vmatprep.subr.bf16.mxu0 0
        %675 = vmatpush1.bf16.msra.mxu0 0
        %676 = vmatprep.subr.bf16.mxu0 0
        %677 = vmatpush1.bf16.msra.mxu0 0
        %678 = vmatprep.mubr.bf16.mxu0 0
        %679 = vmatmul.mubr.bf16.gmra.mrb[0].mxu0 %v640
        %v680 = vpop.f32.mrb[0].mxu0
        %v681 = vadd.f32 0.0, %v680
        %v682 = vpop.f32.mrb[0].mxu0
        %v683 = vpop.f32.mrb[0].mxu0
        %v684 = vpop.f32.mrb[0].mxu0
        %685 = vdwg.mxu0
        %v686 = vpack.c.bf16 %v681, %v681
        %688 = vrot.lane.b32.xlu0 %v572, 120
        %v689 = vpop.permute.xlu0 %688
        %690 = vrot.lane.b32.xlu0 %v573, 88
        %v691 = vpop.permute.xlu0 %690
        %v693 = vsel %vm577, %v689, 0
        %v696 = vsel %vm577, %v691, 0
        %698 = vmatprep.subr.bf16.mxu0 0
        %699 = vmatpush1.bf16.xpose.msra.mxu0 %v696
        %700 = vmatprep.subr.bf16.mxu0 0
        %701 = vmatpush1.bf16.xpose.msra.mxu0 0
        %702 = vmatprep.subr.bf16.mxu0 0
        %703 = vmatpush1.bf16.xpose.msra.mxu0 0
        %704 = vmatprep.subr.bf16.mxu0 0
        %705 = vmatpush1.bf16.xpose.msra.mxu0 0
        %706 = vmatprep.subr.bf16.mxu0 0
        %707 = vmatpush1.bf16.xpose.msra.mxu0 0
        %708 = vmatprep.subr.bf16.mxu0 0
        %709 = vmatpush1.bf16.xpose.msra.mxu0 0
        %710 = vmatprep.subr.bf16.mxu0 0
        %711 = vmatpush1.bf16.xpose.msra.mxu0 0
        %712 = vmatprep.subr.bf16.mxu0 0
        %713 = vmatpush1.bf16.xpose.msra.mxu0 0
        %714 = vmatprep.subr.bf16.mxu0 0
        %715 = vmatpush1.bf16.xpose.msra.mxu0 0
        %716 = vmatprep.subr.bf16.mxu0 0
        %717 = vmatpush1.bf16.xpose.msra.mxu0 0
        %718 = vmatprep.subr.bf16.mxu0 0
        %719 = vmatpush1.bf16.xpose.msra.mxu0 0
        %720 = vmatprep.subr.bf16.mxu0 0
        %721 = vmatpush1.bf16.xpose.msra.mxu0 0
        %722 = vmatprep.subr.bf16.mxu0 0
        %723 = vmatpush1.bf16.xpose.msra.mxu0 0
        %724 = vmatprep.subr.bf16.mxu0 0
        %725 = vmatpush1.bf16.xpose.msra.mxu0 0
        %726 = vmatprep.subr.bf16.mxu0 0
        %727 = vmatpush1.bf16.xpose.msra.mxu0 0
        %728 = vmatprep.subr.bf16.mxu0 0
        %729 = vmatpush1.bf16.xpose.msra.mxu0 0
        %730 = vmatprep.mubr.bf16.mxu0 0
        %731 = vmatmul.mubr.bf16.gmra.mrb[0].mxu0 %v693
        %v732 = vpop.f32.mrb[0].mxu0
        %v733 = vadd.f32 0.0, %v732
        %v734 = vpop.f32.mrb[0].mxu0
        %v735 = vpop.f32.mrb[0].mxu0
        %v736 = vpop.f32.mrb[0].mxu0
        %737 = vdwg.mxu0
        %v738 = vsel %vm567, -1e+09, %v733
        %v739 = vsel %vm577, %v738, -inf
        %740 = vmax.xlane.f32.xlu0 %v739
        %v741 = vpop.xlane.xlu0 %740
        %v742 = vsub.f32 %v738, %v741
        %v743 = vmul.f32 %v742, 1.442695
        %v744 = vpow.pop %v743
        %v745 = vsel %vm577, %v744, 0.0
        %746 = vadd.xlane.f32.xlu0 %v745
        %v747 = vpop.xlane.xlu0 %746
        %v748 = vrcp.pop %v747
        %v749 = vmul.f32 %v744, %v748
        %v750 = vpack.c.bf16 %v749, %v749
        %751 = vrot.lane.b32.xlu0 %v573, 56
        %v752 = vpop.permute.xlu0 %751
        %v754 = vsel %vm577, %v750, 0
        %v757 = vsel %vm642, %v752, 0
        %759 = vmatprep.subr.bf16.mxu0 0
        %760 = vmatpush1.bf16.msra.mxu0 %v757
        %761 = vmatprep.subr.bf16.mxu0 0
        %762 = vmatpush1.bf16.msra.mxu0 0
        %763 = vmatprep.subr.bf16.mxu0 0
        %764 = vmatpush1.bf16.msra.mxu0 0
        %765 = vmatprep.subr.bf16.mxu0 0
        %766 = vmatpush1.bf16.msra.mxu0 0
        %767 = vmatprep.subr.bf16.mxu0 0
        %768 = vmatpush1.bf16.msra.mxu0 0
        %769 = vmatprep.subr.bf16.mxu0 0
        %770 = vmatpush1.bf16.msra.mxu0 0
        %771 = vmatprep.subr.bf16.mxu0 0
        %772 = vmatpush1.bf16.msra.mxu0 0
        %773 = vmatprep.subr.bf16.mxu0 0
        %774 = vmatpush1.bf16.msra.mxu0 0
        %775 = vmatprep.subr.bf16.mxu0 0
        %776 = vmatpush1.bf16.msra.mxu0 0
        %777 = vmatprep.subr.bf16.mxu0 0
        %778 = vmatpush1.bf16.msra.mxu0 0
        %779 = vmatprep.subr.bf16.mxu0 0
        %780 = vmatpush1.bf16.msra.mxu0 0
        %781 = vmatprep.subr.bf16.mxu0 0
        %782 = vmatpush1.bf16.msra.mxu0 0
        %783 = vmatprep.subr.bf16.mxu0 0
        %784 = vmatpush1.bf16.msra.mxu0 0
        %785 = vmatprep.subr.bf16.mxu0 0
        %786 = vmatpush1.bf16.msra.mxu0 0
        %787 = vmatprep.subr.bf16.mxu0 0
        %788 = vmatpush1.bf16.msra.mxu0 0
        %789 = vmatprep.subr.bf16.mxu0 0
        %790 = vmatpush1.bf16.msra.mxu0 0
        %791 = vmatprep.mubr.bf16.mxu0 0
        %792 = vmatmul.mubr.bf16.gmra.mrb[0].mxu0 %v754
        %v793 = vpop.f32.mrb[0].mxu0
        %v794 = vadd.f32 0.0, %v793
        %v795 = vpop.f32.mrb[0].mxu0
        %v796 = vpop.f32.mrb[0].mxu0
        %v797 = vpop.f32.mrb[0].mxu0
        %798 = vdwg.mxu0
        %v799 = vpack.c.bf16 %v794, %v794
        %v801 = vsel %vm577, %v799, 0
        %v804 = vsel %vm642, %v569, 0
        %806 = vmatprep.subr.bf16.mxu0 0
        %807 = vmatpush1.bf16.msra.mxu0 %v804
        %808 = vmatprep.subr.bf16.mxu0 0
        %809 = vmatpush1.bf16.msra.mxu0 0
        %810 = vmatprep.subr.bf16.mxu0 0
        %811 = vmatpush1.bf16.msra.mxu0 0
        %812 = vmatprep.subr.bf16.mxu0 0
        %813 = vmatpush1.bf16.msra.mxu0 0
        %814 = vmatprep.subr.bf16.mxu0 0
        %815 = vmatpush1.bf16.msra.mxu0 0
        %816 = vmatprep.subr.bf16.mxu0 0
        %817 = vmatpush1.bf16.msra.mxu0 0
        %818 = vmatprep.subr.bf16.mxu0 0
        %819 = vmatpush1.bf16.msra.mxu0 0
        %820 = vmatprep.subr.bf16.mxu0 0
        %821 = vmatpush1.bf16.msra.mxu0 0
        %822 = vmatprep.subr.bf16.mxu0 0
        %823 = vmatpush1.bf16.msra.mxu0 0
        %824 = vmatprep.subr.bf16.mxu0 0
        %825 = vmatpush1.bf16.msra.mxu0 0
        %826 = vmatprep.subr.bf16.mxu0 0
        %827 = vmatpush1.bf16.msra.mxu0 0
        %828 = vmatprep.subr.bf16.mxu0 0
        %829 = vmatpush1.bf16.msra.mxu0 0
        %830 = vmatprep.subr.bf16.mxu0 0
        %831 = vmatpush1.bf16.msra.mxu0 0
        %832 = vmatprep.subr.bf16.mxu0 0
        %833 = vmatpush1.bf16.msra.mxu0 0
        %834 = vmatprep.subr.bf16.mxu0 0
        %835 = vmatpush1.bf16.msra.mxu0 0
        %836 = vmatprep.subr.bf16.mxu0 0
        %837 = vmatpush1.bf16.msra.mxu0 0
        %838 = vmatprep.mubr.bf16.mxu0 0
        %839 = vmatmul.mubr.bf16.gmra.mrb[0].mxu0 %v801
        %v840 = vpop.f32.mrb[0].mxu0
        %v841 = vadd.f32 0.0, %v840
        %v842 = vpop.f32.mrb[0].mxu0
        %v843 = vpop.f32.mrb[0].mxu0
        %v844 = vpop.f32.mrb[0].mxu0
        %845 = vdwg.mxu0
        %v847 = vsel %vm577, %v686, 0
        %v850 = vsel %vm642, %v568, 0
        %852 = vmatprep.subr.bf16.mxu0 0
        %853 = vmatpush1.bf16.msra.mxu0 %v850
        %854 = vmatprep.subr.bf16.mxu0 0
        %855 = vmatpush1.bf16.msra.mxu0 0
        %856 = vmatprep.subr.bf16.mxu0 0
        %857 = vmatpush1.bf16.msra.mxu0 0
        %858 = vmatprep.subr.bf16.mxu0 0
        %859 = vmatpush1.bf16.msra.mxu0 0
        %860 = vmatprep.subr.bf16.mxu0 0
        %861 = vmatpush1.bf16.msra.mxu0 0
        %862 = vmatprep.subr.bf16.mxu0 0
        %863 = vmatpush1.bf16.msra.mxu0 0
        %864 = vmatprep.subr.bf16.mxu0 0
        %865 = vmatpush1.bf16.msra.mxu0 0
        %866 = vmatprep.subr.bf16.mxu0 0
        %867 = vmatpush1.bf16.msra.mxu0 0
        %868 = vmatprep.subr.bf16.mxu0 0
        %869 = vmatpush1.bf16.msra.mxu0 0
        %870 = vmatprep.subr.bf16.mxu0 0
        %871 = vmatpush1.bf16.msra.mxu0 0
        %872 = vmatprep.subr.bf16.mxu0 0
        %873 = vmatpush1.bf16.msra.mxu0 0
        %874 = vmatprep.subr.bf16.mxu0 0
        %875 = vmatpush1.bf16.msra.mxu0 0
        %876 = vmatprep.subr.bf16.mxu0 0
        %877 = vmatpush1.bf16.msra.mxu0 0
        %878 = vmatprep.subr.bf16.mxu0 0
        %879 = vmatpush1.bf16.msra.mxu0 0
        %880 = vmatprep.subr.bf16.mxu0 0
        %881 = vmatpush1.bf16.msra.mxu0 0
        %882 = vmatprep.subr.bf16.mxu0 0
        %883 = vmatpush1.bf16.msra.mxu0 0
        %884 = vmatprep.mubr.bf16.mxu0 0
        %885 = vmatmul.mubr.bf16.gmra.mrb[0].mxu0 %v847
        %v886 = vpop.f32.mrb[0].mxu0
        %v887 = vadd.f32 %v841, %v886
        %v888 = vpop.f32.mrb[0].mxu0
        %v889 = vpop.f32.mrb[0].mxu0
        %v890 = vpop.f32.mrb[0].mxu0
        %891 = vdwg.mxu0
        %892 = vrot.lane.b32.xlu0 %v572, 112
        %v893 = vpop.permute.xlu0 %892
        %894 = vrot.lane.b32.xlu0 %v573, 80
        %v895 = vpop.permute.xlu0 %894
        %v897 = vsel %vm577, %v893, 0
        %v900 = vsel %vm577, %v895, 0
        %902 = vmatprep.subr.bf16.mxu0 0
        %903 = vmatpush1.bf16.xpose.msra.mxu0 %v900
        %904 = vmatprep.subr.bf16.mxu0 0
        %905 = vmatpush1.bf16.xpose.msra.mxu0 0
        %906 = vmatprep.subr.bf16.mxu0 0
        %907 = vmatpush1.bf16.xpose.msra.mxu0 0
        %908 = vmatprep.subr.bf16.mxu0 0
        %909 = vmatpush1.bf16.xpose.msra.mxu0 0
        %910 = vmatprep.subr.bf16.mxu0 0
        %911 = vmatpush1.bf16.xpose.msra.mxu0 0
        %912 = vmatprep.subr.bf16.mxu0 0
        %913 = vmatpush1.bf16.xpose.msra.mxu0 0
        %914 = vmatprep.subr.bf16.mxu0 0
        %915 = vmatpush1.bf16.xpose.msra.mxu0 0
        %916 = vmatprep.subr.bf16.mxu0 0
        %917 = vmatpush1.bf16.xpose.msra.mxu0 0
        %918 = vmatprep.subr.bf16.mxu0 0
        %919 = vmatpush1.bf16.xpose.msra.mxu0 0
        %920 = vmatprep.subr.bf16.mxu0 0
        %921 = vmatpush1.bf16.xpose.msra.mxu0 0
        %922 = vmatprep.subr.bf16.mxu0 0
        %923 = vmatpush1.bf16.xpose.msra.mxu0 0
        %924 = vmatprep.subr.bf16.mxu0 0
        %925 = vmatpush1.bf16.xpose.msra.mxu0 0
        %926 = vmatprep.subr.bf16.mxu0 0
        %927 = vmatpush1.bf16.xpose.msra.mxu0 0
        %928 = vmatprep.subr.bf16.mxu0 0
        %929 = vmatpush1.bf16.xpose.msra.mxu0 0
        %930 = vmatprep.subr.bf16.mxu0 0
        %931 = vmatpush1.bf16.xpose.msra.mxu0 0
        %932 = vmatprep.subr.bf16.mxu0 0
        %933 = vmatpush1.bf16.xpose.msra.mxu0 0
        %934 = vmatprep.mubr.bf16.mxu0 0
        %935 = vmatmul.mubr.bf16.gmra.mrb[0].mxu0 %v897
        %v936 = vpop.f32.mrb[0].mxu0
        %v937 = vadd.f32 0.0, %v936
        %v938 = vpop.f32.mrb[0].mxu0
        %v939 = vpop.f32.mrb[0].mxu0
        %v940 = vpop.f32.mrb[0].mxu0
        %941 = vdwg.mxu0
        %v942 = vsel %vm567, -1e+09, %v937
        %v943 = vsel %vm577, %v942, -inf
        %944 = vmax.xlane.f32.xlu0 %v943
        %v945 = vpop.xlane.xlu0 %944
        %v946 = vsub.f32 %v942, %v945
        %v947 = vmul.f32 %v946, 1.442695
        %v948 = vpow.pop %v947
        %v949 = vsel %vm577, %v948, 0.0
        %950 = vadd.xlane.f32.xlu0 %v949
        %v951 = vpop.xlane.xlu0 %950
        %v952 = vrcp.pop %v951
        %v953 = vmul.f32 %v948, %v952
        %v954 = vpack.c.bf16 %v953, %v953
        %955 = vrot.lane.b32.xlu0 %v573, 48
        %v956 = vpop.permute.xlu0 %955
        %v958 = vsel %vm577, %v954, 0
        %v961 = vsel %vm642, %v956, 0
        %963 = vmatprep.subr.bf16.mxu0 0
        %964 = vmatpush1.bf16.msra.mxu0 %v961
        %965 = vmatprep.subr.bf16.mxu0 0
        %966 = vmatpush1.bf16.msra.mxu0 0
        %967 = vmatprep.subr.bf16.mxu0 0
        %968 = vmatpush1.bf16.msra.mxu0 0
        %969 = vmatprep.subr.bf16.mxu0 0
        %970 = vmatpush1.bf16.msra.mxu0 0
        %971 = vmatprep.subr.bf16.mxu0 0
        %972 = vmatpush1.bf16.msra.mxu0 0
        %973 = vmatprep.subr.bf16.mxu0 0
        %974 = vmatpush1.bf16.msra.mxu0 0
        %975 = vmatprep.subr.bf16.mxu0 0
        %976 = vmatpush1.bf16.msra.mxu0 0
        %977 = vmatprep.subr.bf16.mxu0 0
        %978 = vmatpush1.bf16.msra.mxu0 0
        %979 = vmatprep.subr.bf16.mxu0 0
        %980 = vmatpush1.bf16.msra.mxu0 0
        %981 = vmatprep.subr.bf16.mxu0 0
        %982 = vmatpush1.bf16.msra.mxu0 0
        %983 = vmatprep.subr.bf16.mxu0 0
        %984 = vmatpush1.bf16.msra.mxu0 0
        %985 = vmatprep.subr.bf16.mxu0 0
        %986 = vmatpush1.bf16.msra.mxu0 0
        %987 = vmatprep.subr.bf16.mxu0 0
        %988 = vmatpush1.bf16.msra.mxu0 0
        %989 = vmatprep.subr.bf16.mxu0 0
        %990 = vmatpush1.bf16.msra.mxu0 0
        %991 = vmatprep.subr.bf16.mxu0 0
        %992 = vmatpush1.bf16.msra.mxu0 0
        %993 = vmatprep.subr.bf16.mxu0 0
        %994 = vmatpush1.bf16.msra.mxu0 0
        %995 = vmatprep.mubr.bf16.mxu0 0
        %996 = vmatmul.mubr.bf16.gmra.mrb[0].mxu0 %v958
        %v997 = vpop.f32.mrb[0].mxu0
        %v998 = vadd.f32 0.0, %v997
        %v999 = vpop.f32.mrb[0].mxu0
        %v1000 = vpop.f32.mrb[0].mxu0
        %v1001 = vpop.f32.mrb[0].mxu0
        %1002 = vdwg.mxu0
        %v1003 = vpack.c.bf16 %v998, %v998
        %v1005 = vsel %vm577, %v1003, 0
        %v1008 = vsel %vm642, %v570, 0
        %1010 = vmatprep.subr.bf16.mxu0 0
        %1011 = vmatpush1.bf16.msra.mxu0 %v1008
        %1012 = vmatprep.subr.bf16.mxu0 0
        %1013 = vmatpush1.bf16.msra.mxu0 0
        %1014 = vmatprep.subr.bf16.mxu0 0
        %1015 = vmatpush1.bf16.msra.mxu0 0
        %1016 = vmatprep.subr.bf16.mxu0 0
        %1017 = vmatpush1.bf16.msra.mxu0 0
        %1018 = vmatprep.subr.bf16.mxu0 0
        %1019 = vmatpush1.bf16.msra.mxu0 0
        %1020 = vmatprep.subr.bf16.mxu0 0
        %1021 = vmatpush1.bf16.msra.mxu0 0
        %1022 = vmatprep.subr.bf16.mxu0 0
        %1023 = vmatpush1.bf16.msra.mxu0 0
        %1024 = vmatprep.subr.bf16.mxu0 0
        %1025 = vmatpush1.bf16.msra.mxu0 0
        %1026 = vmatprep.subr.bf16.mxu0 0
        %1027 = vmatpush1.bf16.msra.mxu0 0
        %1028 = vmatprep.subr.bf16.mxu0 0
        %1029 = vmatpush1.bf16.msra.mxu0 0
        %1030 = vmatprep.subr.bf16.mxu0 0
        %1031 = vmatpush1.bf16.msra.mxu0 0
        %1032 = vmatprep.subr.bf16.mxu0 0
        %1033 = vmatpush1.bf16.msra.mxu0 0
        %1034 = vmatprep.subr.bf16.mxu0 0
        %1035 = vmatpush1.bf16.msra.mxu0 0
        %1036 = vmatprep.subr.bf16.mxu0 0
        %1037 = vmatpush1.bf16.msra.mxu0 0
        %1038 = vmatprep.subr.bf16.mxu0 0
        %1039 = vmatpush1.bf16.msra.mxu0 0
        %1040 = vmatprep.subr.bf16.mxu0 0
        %1041 = vmatpush1.bf16.msra.mxu0 0
        %1042 = vmatprep.mubr.bf16.mxu0 0
        %1043 = vmatmul.mubr.bf16.gmra.mrb[0].mxu0 %v1005
        %v1044 = vpop.f32.mrb[0].mxu0
        %v1045 = vadd.f32 0.0, %v1044
        %v1046 = vpop.f32.mrb[0].mxu0
        %v1047 = vpop.f32.mrb[0].mxu0
        %v1048 = vpop.f32.mrb[0].mxu0
        %1049 = vdwg.mxu0
        %v1050 = vadd.f32 %v887, %v1045
        %1051 = vrot.lane.b32.xlu0 %v572, 104
        %v1052 = vpop.permute.xlu0 %1051
        %1053 = vrot.lane.b32.xlu0 %v573, 72
        %v1054 = vpop.permute.xlu0 %1053
        %v1056 = vsel %vm577, %v1052, 0
        %v1059 = vsel %vm577, %v1054, 0
        %1061 = vmatprep.subr.bf16.mxu0 0
        %1062 = vmatpush1.bf16.xpose.msra.mxu0 %v1059
        %1063 = vmatprep.subr.bf16.mxu0 0
        %1064 = vmatpush1.bf16.xpose.msra.mxu0 0
        %1065 = vmatprep.subr.bf16.mxu0 0
        %1066 = vmatpush1.bf16.xpose.msra.mxu0 0
        %1067 = vmatprep.subr.bf16.mxu0 0
        %1068 = vmatpush1.bf16.xpose.msra.mxu0 0
        %1069 = vmatprep.subr.bf16.mxu0 0
        %1070 = vmatpush1.bf16.xpose.msra.mxu0 0
        %1071 = vmatprep.subr.bf16.mxu0 0
        %1072 = vmatpush1.bf16.xpose.msra.mxu0 0
        %1073 = vmatprep.subr.bf16.mxu0 0
        %1074 = vmatpush1.bf16.xpose.msra.mxu0 0
        %1075 = vmatprep.subr.bf16.mxu0 0
        %1076 = vmatpush1.bf16.xpose.msra.mxu0 0
        %1077 = vmatprep.subr.bf16.mxu0 0
        %1078 = vmatpush1.bf16.xpose.msra.mxu0 0
        %1079 = vmatprep.subr.bf16.mxu0 0
        %1080 = vmatpush1.bf16.xpose.msra.mxu0 0
        %1081 = vmatprep.subr.bf16.mxu0 0
        %1082 = vmatpush1.bf16.xpose.msra.mxu0 0
        %1083 = vmatprep.subr.bf16.mxu0 0
        %1084 = vmatpush1.bf16.xpose.msra.mxu0 0
        %1085 = vmatprep.subr.bf16.mxu0 0
        %1086 = vmatpush1.bf16.xpose.msra.mxu0 0
        %1087 = vmatprep.subr.bf16.mxu0 0
        %1088 = vmatpush1.bf16.xpose.msra.mxu0 0
        %1089 = vmatprep.subr.bf16.mxu0 0
        %1090 = vmatpush1.bf16.xpose.msra.mxu0 0
        %1091 = vmatprep.subr.bf16.mxu0 0
        %1092 = vmatpush1.bf16.xpose.msra.mxu0 0
        %1093 = vmatprep.mubr.bf16.mxu0 0
        %1094 = vmatmul.mubr.bf16.gmra.mrb[0].mxu0 %v1056
        %v1095 = vpop.f32.mrb[0].mxu0
        %v1096 = vadd.f32 0.0, %v1095
        %v1097 = vpop.f32.mrb[0].mxu0
        %v1098 = vpop.f32.mrb[0].mxu0
        %v1099 = vpop.f32.mrb[0].mxu0
        %1100 = vdwg.mxu0
        %v1101 = vsel %vm567, -1e+09, %v1096
        %v1102 = vsel %vm577, %v1101, -inf
        %1103 = vmax.xlane.f32.xlu0 %v1102
        %v1104 = vpop.xlane.xlu0 %1103
        %v1105 = vsub.f32 %v1101, %v1104
        %v1106 = vmul.f32 %v1105, 1.442695
        %v1107 = vpow.pop %v1106
        %v1108 = vsel %vm577, %v1107, 0.0
        %1109 = vadd.xlane.f32.xlu0 %v1108
        %v1110 = vpop.xlane.xlu0 %1109
        %v1111 = vrcp.pop %v1110
        %v1112 = vmul.f32 %v1107, %v1111
        %v1113 = vpack.c.bf16 %v1112, %v1112
        %1114 = vrot.lane.b32.xlu0 %v573, 40
        %v1115 = vpop.permute.xlu0 %1114
        %v1117 = vsel %vm577, %v1113, 0
        %v1120 = vsel %vm642, %v1115, 0
        %1122 = vmatprep.subr.bf16.mxu0 0
        %1123 = vmatpush1.bf16.msra.mxu0 %v1120
        %1124 = vmatprep.subr.bf16.mxu0 0
        %1125 = vmatpush1.bf16.msra.mxu0 0
        %1126 = vmatprep.subr.bf16.mxu0 0
        %1127 = vmatpush1.bf16.msra.mxu0 0
        %1128 = vmatprep.subr.bf16.mxu0 0
        %1129 = vmatpush1.bf16.msra.mxu0 0
        %1130 = vmatprep.subr.bf16.mxu0 0
        %1131 = vmatpush1.bf16.msra.mxu0 0
        %1132 = vmatprep.subr.bf16.mxu0 0
        %1133 = vmatpush1.bf16.msra.mxu0 0
        %1134 = vmatprep.subr.bf16.mxu0 0
        %1135 = vmatpush1.bf16.msra.mxu0 0
        %1136 = vmatprep.subr.bf16.mxu0 0
        %1137 = vmatpush1.bf16.msra.mxu0 0
        %1138 = vmatprep.subr.bf16.mxu0 0
        %1139 = vmatpush1.bf16.msra.mxu0 0
        %1140 = vmatprep.subr.bf16.mxu0 0
        %1141 = vmatpush1.bf16.msra.mxu0 0
        %1142 = vmatprep.subr.bf16.mxu0 0
        %1143 = vmatpush1.bf16.msra.mxu0 0
        %1144 = vmatprep.subr.bf16.mxu0 0
        %1145 = vmatpush1.bf16.msra.mxu0 0
        %1146 = vmatprep.subr.bf16.mxu0 0
        %1147 = vmatpush1.bf16.msra.mxu0 0
        %1148 = vmatprep.subr.bf16.mxu0 0
        %1149 = vmatpush1.bf16.msra.mxu0 0
        %1150 = vmatprep.subr.bf16.mxu0 0
        %1151 = vmatpush1.bf16.msra.mxu0 0
        %1152 = vmatprep.subr.bf16.mxu0 0
        %1153 = vmatpush1.bf16.msra.mxu0 0
        %1154 = vmatprep.mubr.bf16.mxu0 0
        %1155 = vmatmul.mubr.bf16.gmra.mrb[0].mxu0 %v1117
        %v1156 = vpop.f32.mrb[0].mxu0
        %v1157 = vadd.f32 0.0, %v1156
        %v1158 = vpop.f32.mrb[0].mxu0
        %v1159 = vpop.f32.mrb[0].mxu0
        %v1160 = vpop.f32.mrb[0].mxu0
        %1161 = vdwg.mxu0
        %v1162 = vpack.c.bf16 %v1157, %v1157
        %v1164 = vsel %vm577, %v1162, 0
        %v1167 = vsel %vm642, %v571, 0
        %1169 = vmatprep.subr.bf16.mxu0 0
        %1170 = vmatpush1.bf16.msra.mxu0 %v1167
        %1171 = vmatprep.subr.bf16.mxu0 0
        %1172 = vmatpush1.bf16.msra.mxu0 0
        %1173 = vmatprep.subr.bf16.mxu0 0
        %1174 = vmatpush1.bf16.msra.mxu0 0
        %1175 = vmatprep.subr.bf16.mxu0 0
        %1176 = vmatpush1.bf16.msra.mxu0 0
        %1177 = vmatprep.subr.bf16.mxu0 0
        %1178 = vmatpush1.bf16.msra.mxu0 0
        %1179 = vmatprep.subr.bf16.mxu0 0
        %1180 = vmatpush1.bf16.msra.mxu0 0
        %1181 = vmatprep.subr.bf16.mxu0 0
        %1182 = vmatpush1.bf16.msra.mxu0 0
        %1183 = vmatprep.subr.bf16.mxu0 0
        %1184 = vmatpush1.bf16.msra.mxu0 0
        %1185 = vmatprep.subr.bf16.mxu0 0
        %1186 = vmatpush1.bf16.msra.mxu0 0
        %1187 = vmatprep.subr.bf16.mxu0 0
        %1188 = vmatpush1.bf16.msra.mxu0 0
        %1189 = vmatprep.subr.bf16.mxu0 0
        %1190 = vmatpush1.bf16.msra.mxu0 0
        %1191 = vmatprep.subr.bf16.mxu0 0
        %1192 = vmatpush1.bf16.msra.mxu0 0
        %1193 = vmatprep.subr.bf16.mxu0 0
        %1194 = vmatpush1.bf16.msra.mxu0 0
        %1195 = vmatprep.subr.bf16.mxu0 0
        %1196 = vmatpush1.bf16.msra.mxu0 0
        %1197 = vmatprep.subr.bf16.mxu0 0
        %1198 = vmatpush1.bf16.msra.mxu0 0
        %1199 = vmatprep.subr.bf16.mxu0 0
        %1200 = vmatpush1.bf16.msra.mxu0 0
        %1201 = vmatprep.mubr.bf16.mxu0 0
        %1202 = vmatmul.mubr.bf16.gmra.mrb[0].mxu0 %v1164
        %v1203 = vpop.f32.mrb[0].mxu0
        %v1204 = vadd.f32 0.0, %v1203
        %v1205 = vpop.f32.mrb[0].mxu0
        %v1206 = vpop.f32.mrb[0].mxu0
        %v1207 = vpop.f32.mrb[0].mxu0
        %1208 = vdwg.mxu0
        %v1209 = vadd.f32 %v1050, %v1204
        %v1210 = vld [vmem:[#allocation14] sm:$0x1]
        %v1212 = vlaneseq
        %v1213 = vshrl.u32 %v1212, 7
        %v1214 = vsub.s32 0, %v1213
        %v1215 = vrot.slane %v1210, %v1214
        %v1217 = vadd.f32 %v1209, %v1215
        %v1218 = vadd.f32 %v1217, %v458
        %1219 = vst.msk [vmem:[%s456] sm:$0xff] %vm461, %v1218
        %s1220 = sand.u32 %s235, 1
        %s1221 = scalar_lea.sflag [#allocation4], %s1220
        %s1222 = sand.u32 %s235, 1
        %s1223 = smul.addr %s1222, 8
        %s1224 = scalar_lea.vmem [#allocation16], %s1223
        // Predicated region
        $region85: #{decoder_forward.6} parent=51 // pred_check
          %p1225 = pneg %p245
        $region86: #{decoder_forward.6} parent=51 // pred_check_branch
          %1227 = sbr.rel (%p1225) target = $region88
        $region87: #{decoder_forward.6} parent=51 // pred_region
          %s1229 = ssub.s32 128, 128
          %1230 = vsyncadd %s1221, %s1229
          %s1231 = sadd.s32 %s36, %s35
          %s1232 = smul.addr %s1231, 128
          %s1233 = scalar_lea.hbm %s8, %s1232
          %s1235 = sshll.u32 %s1224, 4
          %s1236 = int_to_ptr.vmem [resolvable:$true] %s1235
          %1238 = dma.vmem_to_hbm [thread:$0]  %s1236, 128, %s1233, %s1221
        $region88: #{decoder_forward.6} parent=51 // pred_fallthru
          _
      $region52: #{decoder_forward.6} parent=5 // pred_fallthru
        _
      %p1239 = scmp.le.s32.totalorder 2, %s26
      // Predicated region
      $region89: #{decoder_forward.6} parent=5 // pred_check
        %p1240 = pneg %p1239
      $region90: #{decoder_forward.6} parent=5 // pred_check_branch
        %1242 = sbr.rel (%p1240) target = $region92
      $region91: #{decoder_forward.6} parent=5 // pred_region
        %s1243 = ssub.s32 %s26, 2
        // Predicated region
        $region93: #{decoder_forward.6} parent=91 // pred_check
          %p1244 = pneg %p251
        $region94: #{decoder_forward.6} parent=91 // pred_check_branch
          %1246 = sbr.rel (%p1244) target = $region96
        $region95: #{decoder_forward.6} parent=91 // pred_region
          %s1247 = sand.u32 %s236, 1
          %s1248 = scalar_lea.sflag [#allocation4], %s1247
          %s1249 = sand.u32 %s236, 1
          %s1250 = smul.addr %s1249, 8
          %s1251 = scalar_lea.vmem [#allocation16], %s1250
          %1252 = dma.done %s1248, 128
        $region96: #{decoder_forward.6} parent=91 // pred_fallthru
          _
      $region92: #{decoder_forward.6} parent=5 // pred_fallthru
        _
    $region6: #{decoder_forward.6} parent=1 // loop_footer
      %s30 = sadd.s32 1, %s26
    $region7: #{decoder_forward.6} parent=1 // loop_footer_branch
      %25 = sbr.rel target = $region3
    $region8: #{decoder_forward.6} parent=1 // loop_exit
      _
    %1253 = vsyncpa [#allocation3], 1
    %s1254 = scalar_lea.sflag [#allocation3], 1
    %1255 = vsyncpa %s1254, 1
    %1256 = vsyncpa [#allocation6], 1
    %s1257 = scalar_lea.sflag [#allocation6], 1
    %1258 = vsyncpa %s1257, 1
    %1259 = vsyncpa [#allocation9], 1
    %1260 = vsyncpa [#allocation12], 1
    %1261 = vsyncpa [#allocation15], 1
    %1262 = vsyncpa [#allocation4], 1
    %s1263 = scalar_lea.sflag [#allocation4], 1
    %1264 = vsyncpa %s1263, 1

// kernel: decoder_forward.7
$region0: #{decoder_forward.7}
  #allocation0 [shape = 'u32[]', space=smem, size = 0x4, offset = 0x4, fixed_abs, tag = 'smem constant byte address 0x4 - core index']
  #allocation1 [shape = 'u32[144,128]{1,0:T(1,128)}', space=vmem, size = 0x12000, scoped, tag = 'internal scratch']
  %s0 = inlined_call_operand.hbm [shape: f32[2,8,32], index: 0, kind: input, shape index: {}, may-alias: {0,9}]
  %s1 = inlined_call_operand.hbm [shape: f32[2,8,32], index: 1, kind: input, shape index: {}]
  %s2 = inlined_call_operand.hbm [shape: s8[2,1,8], index: 2, kind: input, shape index: {}]
  %s3 = inlined_call_operand.hbm [shape: f32[1,32], index: 3, kind: input, shape index: {}]
  %s4 = inlined_call_operand.hbm [shape: f32[1,32], index: 4, kind: input, shape index: {}]
  %s5 = inlined_call_operand.hbm [shape: bf16[32,96], index: 5, kind: input, shape index: {}]
  %s6 = inlined_call_operand.hbm [shape: f32[1,96], index: 6, kind: input, shape index: {}]
  %s7 = inlined_call_operand.hbm [shape: bf16[32,32], index: 7, kind: input, shape index: {}]
  %s8 = inlined_call_operand.hbm [shape: f32[1,32], index: 8, kind: input, shape index: {}]
  %s9 = inlined_call_operand.hbm [shape: f32[2,8,32], index: 9, kind: output, shape index: {}, may-alias: {0,9}]
  %s10 = sld [smem:[#allocation0]]
  $region105: #{decoder_forward.7} parent=0
    _
  %s12 = ssub.s32 1, %s10
  %s13 = scalar_select 0, %s12, %s10
  $region1: #{decoder_forward.7} parent=0
    #allocation2 [shape = 'u8[8192]{0}', space=vmem, size = 0x2000, scoped, tag = 'input window, operand 0']
    #allocation3 [shape = 's32[2]{0}', space=sflag, size = 0x8, scoped, tag = 'scoped memory for decoder_forward.7']
    #allocation4 [shape = 's32[2]{0}', space=sflag, size = 0x8, scoped, tag = 'scoped memory for decoder_forward.7']
    #allocation5 [shape = 'u8[8192]{0}', space=vmem, size = 0x2000, scoped, tag = 'input window, operand 1']
    #allocation6 [shape = 's32[2]{0}', space=sflag, size = 0x8, scoped, tag = 'scoped memory for decoder_forward.7']
    #allocation7 [shape = 'u8[1024]{0}', space=vmem, size = 0x400, scoped, tag = 'input window, operand 2']
    #allocation8 [shape = 'u8[512]{0}', space=vmem, size = 0x400, scoped, tag = 'input window, operand 3, single buffered']
    #allocation9 [shape = 's32[1]{0}', space=sflag, size = 0x4, scoped, tag = 'scoped memory for decoder_forward.7']
    #allocation10 [shape = 'u8[512]{0}', space=vmem, size = 0x400, scoped, tag = 'input window, operand 4, single buffered']
    #allocation11 [shape = 'u8[8192]{0}', space=vmem, size = 0x2000, scoped, tag = 'input window, operand 5, single buffered']
    #allocation12 [shape = 's32[1]{0}', space=sflag, size = 0x4, scoped, tag = 'scoped memory for decoder_forward.7']
    #allocation13 [shape = 'u8[512]{0}', space=vmem, size = 0x400, scoped, tag = 'input window, operand 6, single buffered']
    #allocation14 [shape = 'u8[8192]{0}', space=vmem, size = 0x2000, scoped, tag = 'input window, operand 7, single buffered']
    #allocation15 [shape = 's32[1]{0}', space=sflag, size = 0x4, scoped, tag = 'scoped memory for decoder_forward.7']
    #allocation16 [shape = 'u8[512]{0}', space=vmem, size = 0x400, scoped, tag = 'input window, operand 8, single buffered']
    #allocation17 [shape = 'u8[8192]{0}', space=vmem, size = 0x2000, scoped, tag = 'output window, operand 0']
    %14 = vsyncpa [#allocation3], 0
    %s15 = scalar_lea.sflag [#allocation3], 1
    %16 = vsyncpa %s15, 0
    %17 = vsyncpa [#allocation6], 0
    %s18 = scalar_lea.sflag [#allocation6], 1
    %19 = vsyncpa %s18, 0
    %20 = vsyncpa [#allocation9], 0
    %21 = vsyncpa [#allocation12], 0
    %22 = vsyncpa [#allocation15], 0
    %23 = vsyncpa [#allocation4], 0
    %s24 = scalar_lea.sflag [#allocation4], 1
    %25 = vsyncpa %s24, 0
    loop: start=0, step=1, limit=4
    $region2: #{decoder_forward.7} parent=1 // loop_pre_header
      _
    $region3: #{decoder_forward.7} parent=1 // loop_header
      %s27 = sphi 0, %s31
      %p28 = scmp.ge.s32.totalorder %s27, 4
      %s34 = sphi 0, %s46
      %s35 = sphi 0, %s42
      %s36 = sphi 0, %s34
      %s37 = sphi 0, %s35
      %s38 = sphi 0, %s36
      %s39 = sphi 0, %s37
      %s51 = sphi 0, %s53
      %s54 = sphi 0, %s51
      %s55 = sphi 0, %s54
      %s71 = sphi 0, %s55
      %s77 = sphi 0, %s79
      %s80 = sphi 0, %s77
      %s81 = sphi 0, %s80
      %s97 = sphi 0, %s81
      %s103 = sphi 0, %s105
      %s106 = sphi 0, %s103
      %s107 = sphi 0, %s106
      %s123 = sphi 0, %s107
      %s127 = sphi 0, %s127
      %s129 = sphi 0, %s127
      %s130 = sphi 0, %s129
      %s144 = sphi 0, %s130
      %s148 = sphi 0, %s148
      %s150 = sphi 0, %s148
      %s151 = sphi 0, %s150
      %s165 = sphi 0, %s151
      %s169 = sphi 0, %s169
      %s171 = sphi 0, %s169
      %s172 = sphi 0, %s171
      %s186 = sphi 0, %s172
      %s190 = sphi 0, %s190
      %s192 = sphi 0, %s190
      %s193 = sphi 0, %s192
      %s207 = sphi 0, %s193
      %s211 = sphi 0, %s211
      %s213 = sphi 0, %s211
      %s214 = sphi 0, %s213
      %s228 = sphi 0, %s214
      %s232 = sphi 0, %s232
      %s234 = sphi 0, %s232
      %s235 = sphi 0, %s234
      %s249 = sphi 0, %s235
      %s257 = sphi 0, %s259
      %s260 = sphi 0, %s257
      %s261 = sphi 0, %s260
      %s277 = sphi 0, %s261
    $region4: #{decoder_forward.7} parent=1 // loop_header_branch
      %30 = sbr.rel (%p28) target = $region8
    $region5: #{decoder_forward.7} parent=1 // loop_body
      %s32 = ssub.s32 %s27, 1
      %s33 = ssub.s32 %s27, 2
      %s40 = sadd.s32 1, %s35
      %p41 = scmp.ge.s32.totalorder %s40, 1
      %s42 = scalar_select %p41, 0, %s40
      %s43 = sadd.s32 1, %s34
      %s44 = scalar_select %p41, %s43, %s34
      %p45 = scmp.ge.s32.totalorder %s44, 2
      %s46 = scalar_select %p45, 0, %s44
      %s47 = ssub.s32 %s34, %s46
      %s48 = ssub.s32 %s35, %s42
      %s49 = sor.u32 %s47, %s48
      %p50 = scmp.eq.s32.totalorder %s49, 0
      %s52 = sadd.s32 %s51, 1
      %s53 = scalar_select %p50, %s51, %s52
      %p56 = pneg %p50
      %p57 = scmp.eq.s32.totalorder %s27, 1
      %p58 = por %p56, %p57
      %p59 = scmp.ne.s32.totalorder %s51, %s54
      %p60 = scmp.eq.s32.totalorder %s27, 0
      %p61 = por %p59, %p60
      %p62 = scmp.ne.s32.totalorder %s51, %s54
      %p63 = scmp.eq.s32.totalorder %s32, 1
      %p64 = por %p62, %p63
      %p65 = scmp.ne.s32.totalorder %s54, %s55
      %p66 = scmp.eq.s32.totalorder %s32, 0
      %p67 = por %p65, %p66
      %p68 = scmp.ne.s32.totalorder %s54, %s55
      %p69 = scmp.eq.s32.totalorder %s33, 1
      %p70 = por %p68, %p69
      %p72 = scmp.ne.s32.totalorder %s55, %s71
      %p73 = scmp.eq.s32.totalorder %s33, 0
      %p74 = por %p72, %p73
      %s75 = ssub.s32 %s34, %s46
      %p76 = scmp.eq.s32.totalorder %s75, 0
      %s78 = sadd.s32 %s77, 1
      %s79 = scalar_select %p76, %s77, %s78
      %p82 = pneg %p76
      %p83 = scmp.eq.s32.totalorder %s27, 1
      %p84 = por %p82, %p83
      %p85 = scmp.ne.s32.totalorder %s77, %s80
      %p86 = scmp.eq.s32.totalorder %s27, 0
      %p87 = por %p85, %p86
      %p88 = scmp.ne.s32.totalorder %s77, %s80
      %p89 = scmp.eq.s32.totalorder %s32, 1
      %p90 = por %p88, %p89
      %p91 = scmp.ne.s32.totalorder %s80, %s81
      %p92 = scmp.eq.s32.totalorder %s32, 0
      %p93 = por %p91, %p92
      %p94 = scmp.ne.s32.totalorder %s80, %s81
      %p95 = scmp.eq.s32.totalorder %s33, 1
      %p96 = por %p94, %p95
      %p98 = scmp.ne.s32.totalorder %s81, %s97
      %p99 = scmp.eq.s32.totalorder %s33, 0
      %p100 = por %p98, %p99
      %s101 = ssub.s32 %s34, %s46
      %p102 = scmp.eq.s32.totalorder %s101, 0
      %s104 = sadd.s32 %s103, 1
      %s105 = scalar_select %p102, %s103, %s104
      %p108 = pneg %p102
      %p109 = scmp.eq.s32.totalorder %s27, 1
      %p110 = por %p108, %p109
      %p111 = scmp.ne.s32.totalorder %s103, %s106
      %p112 = scmp.eq.s32.totalorder %s27, 0
      %p113 = por %p111, %p112
      %p114 = scmp.ne.s32.totalorder %s103, %s106
      %p115 = scmp.eq.s32.totalorder %s32, 1
      %p116 = por %p114, %p115
      %p117 = scmp.ne.s32.totalorder %s106, %s107
      %p118 = scmp.eq.s32.totalorder %s32, 0
      %p119 = por %p117, %p118
      %p120 = scmp.ne.s32.totalorder %s106, %s107
      %p121 = scmp.eq.s32.totalorder %s33, 1
      %p122 = por %p120, %p121
      %p124 = scmp.ne.s32.totalorder %s107, %s123
      %p125 = scmp.eq.s32.totalorder %s33, 0
      %p126 = por %p124, %p125
      %s128 = sadd.s32 %s127, 1
      %p131 = scmp.eq.s32.totalorder %s27, 1
      %p132 = scmp.ne.s32.totalorder %s127, %s129
      %p133 = scmp.eq.s32.totalorder %s27, 0
      %p134 = por %p132, %p133
      %p135 = scmp.ne.s32.totalorder %s127, %s129
      %p136 = scmp.eq.s32.totalorder %s32, 1
      %p137 = por %p135, %p136
      %p138 = scmp.ne.s32.totalorder %s129, %s130
      %p139 = scmp.eq.s32.totalorder %s32, 0
      %p140 = por %p138, %p139
      %p141 = scmp.ne.s32.totalorder %s129, %s130
      %p142 = scmp.eq.s32.totalorder %s33, 1
      %p143 = por %p141, %p142
      %p145 = scmp.ne.s32.totalorder %s130, %s144
      %p146 = scmp.eq.s32.totalorder %s33, 0
      %p147 = por %p145, %p146
      %s149 = sadd.s32 %s148, 1
      %p152 = scmp.eq.s32.totalorder %s27, 1
      %p153 = scmp.ne.s32.totalorder %s148, %s150
      %p154 = scmp.eq.s32.totalorder %s27, 0
      %p155 = por %p153, %p154
      %p156 = scmp.ne.s32.totalorder %s148, %s150
      %p157 = scmp.eq.s32.totalorder %s32, 1
      %p158 = por %p156, %p157
      %p159 = scmp.ne.s32.totalorder %s150, %s151
      %p160 = scmp.eq.s32.totalorder %s32, 0
      %p161 = por %p159, %p160
      %p162 = scmp.ne.s32.totalorder %s150, %s151
      %p163 = scmp.eq.s32.totalorder %s33, 1
      %p164 = por %p162, %p163
      %p166 = scmp.ne.s32.totalorder %s151, %s165
      %p167 = scmp.eq.s32.totalorder %s33, 0
      %p168 = por %p166, %p167
      %s170 = sadd.s32 %s169, 1
      %p173 = scmp.eq.s32.totalorder %s27, 1
      %p174 = scmp.ne.s32.totalorder %s169, %s171
      %p175 = scmp.eq.s32.totalorder %s27, 0
      %p176 = por %p174, %p175
      %p177 = scmp.ne.s32.totalorder %s169, %s171
      %p178 = scmp.eq.s32.totalorder %s32, 1
      %p179 = por %p177, %p178
      %p180 = scmp.ne.s32.totalorder %s171, %s172
      %p181 = scmp.eq.s32.totalorder %s32, 0
      %p182 = por %p180, %p181
      %p183 = scmp.ne.s32.totalorder %s171, %s172
      %p184 = scmp.eq.s32.totalorder %s33, 1
      %p185 = por %p183, %p184
      %p187 = scmp.ne.s32.totalorder %s172, %s186
      %p188 = scmp.eq.s32.totalorder %s33, 0
      %p189 = por %p187, %p188
      %s191 = sadd.s32 %s190, 1
      %p194 = scmp.eq.s32.totalorder %s27, 1
      %p195 = scmp.ne.s32.totalorder %s190, %s192
      %p196 = scmp.eq.s32.totalorder %s27, 0
      %p197 = por %p195, %p196
      %p198 = scmp.ne.s32.totalorder %s190, %s192
      %p199 = scmp.eq.s32.totalorder %s32, 1
      %p200 = por %p198, %p199
      %p201 = scmp.ne.s32.totalorder %s192, %s193
      %p202 = scmp.eq.s32.totalorder %s32, 0
      %p203 = por %p201, %p202
      %p204 = scmp.ne.s32.totalorder %s192, %s193
      %p205 = scmp.eq.s32.totalorder %s33, 1
      %p206 = por %p204, %p205
      %p208 = scmp.ne.s32.totalorder %s193, %s207
      %p209 = scmp.eq.s32.totalorder %s33, 0
      %p210 = por %p208, %p209
      %s212 = sadd.s32 %s211, 1
      %p215 = scmp.eq.s32.totalorder %s27, 1
      %p216 = scmp.ne.s32.totalorder %s211, %s213
      %p217 = scmp.eq.s32.totalorder %s27, 0
      %p218 = por %p216, %p217
      %p219 = scmp.ne.s32.totalorder %s211, %s213
      %p220 = scmp.eq.s32.totalorder %s32, 1
      %p221 = por %p219, %p220
      %p222 = scmp.ne.s32.totalorder %s213, %s214
      %p223 = scmp.eq.s32.totalorder %s32, 0
      %p224 = por %p222, %p223
      %p225 = scmp.ne.s32.totalorder %s213, %s214
      %p226 = scmp.eq.s32.totalorder %s33, 1
      %p227 = por %p225, %p226
      %p229 = scmp.ne.s32.totalorder %s214, %s228
      %p230 = scmp.eq.s32.totalorder %s33, 0
      %p231 = por %p229, %p230
      %s233 = sadd.s32 %s232, 1
      %p236 = scmp.eq.s32.totalorder %s27, 1
      %p237 = scmp.ne.s32.totalorder %s232, %s234
      %p238 = scmp.eq.s32.totalorder %s27, 0
      %p239 = por %p237, %p238
      %p240 = scmp.ne.s32.totalorder %s232, %s234
      %p241 = scmp.eq.s32.totalorder %s32, 1
      %p242 = por %p240, %p241
      %p243 = scmp.ne.s32.totalorder %s234, %s235
      %p244 = scmp.eq.s32.totalorder %s32, 0
      %p245 = por %p243, %p244
      %p246 = scmp.ne.s32.totalorder %s234, %s235
      %p247 = scmp.eq.s32.totalorder %s33, 1
      %p248 = por %p246, %p247
      %p250 = scmp.ne.s32.totalorder %s235, %s249
      %p251 = scmp.eq.s32.totalorder %s33, 0
      %p252 = por %p250, %p251
      %s253 = ssub.s32 %s34, %s46
      %s254 = ssub.s32 %s35, %s42
      %s255 = sor.u32 %s253, %s254
      %p256 = scmp.eq.s32.totalorder %s255, 0
      %s258 = sadd.s32 %s257, 1
      %s259 = scalar_select %p256, %s257, %s258
      %p262 = pneg %p256
      %p263 = scmp.eq.s32.totalorder %s27, 1
      %p264 = por %p262, %p263
      %p265 = scmp.ne.s32.totalorder %s257, %s260
      %p266 = scmp.eq.s32.totalorder %s27, 0
      %p267 = por %p265, %p266
      %p268 = scmp.ne.s32.totalorder %s257, %s260
      %p269 = scmp.eq.s32.totalorder %s32, 1
      %p270 = por %p268, %p269
      %p271 = scmp.ne.s32.totalorder %s260, %s261
      %p272 = scmp.eq.s32.totalorder %s32, 0
      %p273 = por %p271, %p272
      %p274 = scmp.ne.s32.totalorder %s260, %s261
      %p275 = scmp.eq.s32.totalorder %s33, 1
      %p276 = por %p274, %p275
      %p278 = scmp.ne.s32.totalorder %s261, %s277
      %p279 = scmp.eq.s32.totalorder %s33, 0
      %p280 = por %p278, %p279
      %p281 = scmp.le.s32.totalorder 1, %s27
      %p282 = scmp.lt.s32.totalorder %s27, 3
      %p283 = pnand %p281, %p282
      %p284 = pneg %p283
      // Predicated region
      $region9: #{decoder_forward.7} parent=5 // pred_check
        _
      $region10: #{decoder_forward.7} parent=5 // pred_check_branch
        %286 = sbr.rel (%p283) target = $region12
      $region11: #{decoder_forward.7} parent=5 // pred_region
        %s287 = ssub.s32 %s27, 1
        // Predicated region
        $region13: #{decoder_forward.7} parent=11 // pred_check
          %p288 = pneg %p140
        $region14: #{decoder_forward.7} parent=11 // pred_check_branch
          %290 = sbr.rel (%p288) target = $region16
        $region15: #{decoder_forward.7} parent=11 // pred_region
          %s292 = ssub.s32 16, 16
          %293 = vsyncadd [#allocation9], %s292
          %s295 = sshll.u32 [#allocation8], 4
          %s296 = int_to_ptr.vmem [resolvable:$true] %s295
          %298 = dma.hbm_to_vmem [thread:$0]  %s3, 16, %s296, [#allocation9]
        $region16: #{decoder_forward.7} parent=11 // pred_fallthru
          _
        // Predicated region
        $region17: #{decoder_forward.7} parent=11 // pred_check
          %p299 = pneg %p161
        $region18: #{decoder_forward.7} parent=11 // pred_check_branch
          %301 = sbr.rel (%p299) target = $region20
        $region19: #{decoder_forward.7} parent=11 // pred_region
          %s303 = ssub.s32 16, 16
          %304 = vsyncadd [#allocation9], %s303
          %s306 = sshll.u32 [#allocation10], 4
          %s307 = int_to_ptr.vmem [resolvable:$true] %s306
          %309 = dma.hbm_to_vmem [thread:$0]  %s4, 16, %s307, [#allocation9]
        $region20: #{decoder_forward.7} parent=11 // pred_fallthru
          _
        // Predicated region
        $region21: #{decoder_forward.7} parent=11 // pred_check
          %p310 = pneg %p182
        $region22: #{decoder_forward.7} parent=11 // pred_check_branch
          %312 = sbr.rel (%p310) target = $region24
        $region23: #{decoder_forward.7} parent=11 // pred_region
          %s314 = ssub.s32 256, 256
          %315 = vsyncadd [#allocation12], %s314
          %s316 = sshll.u32 [#allocation11], 4
          %s317 = int_to_ptr.vmem [resolvable:$true] %s316
          %322 = dma.hbm_to_vmem [thread:$0]  %s5, 256, %s317, [#allocation12], 64, 64, 4
        $region24: #{decoder_forward.7} parent=11 // pred_fallthru
          _
        // Predicated region
        $region25: #{decoder_forward.7} parent=11 // pred_check
          %p323 = pneg %p203
        $region26: #{decoder_forward.7} parent=11 // pred_check_branch
          %325 = sbr.rel (%p323) target = $region28
        $region27: #{decoder_forward.7} parent=11 // pred_region
          %s327 = ssub.s32 16, 16
          %328 = vsyncadd [#allocation12], %s327
          %s330 = sshll.u32 [#allocation13], 4
          %s331 = int_to_ptr.vmem [resolvable:$true] %s330
          %333 = dma.hbm_to_vmem [thread:$0]  %s6, 16, %s331, [#allocation12]
        $region28: #{decoder_forward.7} parent=11 // pred_fallthru
          _
        // Predicated region
        $region29: #{decoder_forward.7} parent=11 // pred_check
          %p334 = pneg %p224
        $region30: #{decoder_forward.7} parent=11 // pred_check_branch
          %336 = sbr.rel (%p334) target = $region32
        $region31: #{decoder_forward.7} parent=11 // pred_region
          %s338 = ssub.s32 256, 256
          %339 = vsyncadd [#allocation15], %s338
          %s340 = sshll.u32 [#allocation14], 4
          %s341 = int_to_ptr.vmem [resolvable:$true] %s340
          %346 = dma.hbm_to_vmem [thread:$0]  %s7, 256, %s341, [#allocation15], 64, 64, 4
        $region32: #{decoder_forward.7} parent=11 // pred_fallthru
          _
        // Predicated region
        $region33: #{decoder_forward.7} parent=11 // pred_check
          %p347 = pneg %p245
        $region34: #{decoder_forward.7} parent=11 // pred_check_branch
          %349 = sbr.rel (%p347) target = $region36
        $region35: #{decoder_forward.7} parent=11 // pred_region
          %s351 = ssub.s32 16, 16
          %352 = vsyncadd [#allocation15], %s351
          %s354 = sshll.u32 [#allocation16], 4
          %s355 = int_to_ptr.vmem [resolvable:$true] %s354
          %357 = dma.hbm_to_vmem [thread:$0]  %s8, 16, %s355, [#allocation15]
        $region36: #{decoder_forward.7} parent=11 // pred_fallthru
          _
      $region12: #{decoder_forward.7} parent=5 // pred_fallthru
        _
      %p358 = scmp.lt.s32.totalorder %s27, 2
      // Predicated region
      $region37: #{decoder_forward.7} parent=5 // pred_check
        %p359 = pneg %p358
      $region38: #{decoder_forward.7} parent=5 // pred_check_branch
        %361 = sbr.rel (%p359) target = $region40
      $region39: #{decoder_forward.7} parent=5 // pred_region
        // Predicated region
        $region41: #{decoder_forward.7} parent=39 // pred_check
          %p362 = pneg %p61
        $region42: #{decoder_forward.7} parent=39 // pred_check_branch
          %364 = sbr.rel (%p362) target = $region44
        $region43: #{decoder_forward.7} parent=39 // pred_region
          %s365 = sand.u32 %s51, 1
          %s366 = scalar_lea.sflag [#allocation3], %s365
          %s367 = sand.u32 %s51, 1
          %s368 = smul.addr %s367, 8
          %s369 = scalar_lea.vmem [#allocation2], %s368
          %s371 = ssub.s32 128, 128
          %372 = vsyncadd %s366, %s371
          %s373 = sadd.s32 %s35, %s34
          %s374 = smul.addr %s373, 128
          %s375 = scalar_lea.hbm %s0, %s374
          %s377 = sshll.u32 %s369, 4
          %s378 = int_to_ptr.vmem [resolvable:$true] %s377
          %380 = dma.hbm_to_vmem [thread:$0]  %s375, 128, %s378, %s366
        $region44: #{decoder_forward.7} parent=39 // pred_fallthru
          _
        // Predicated region
        $region45: #{decoder_forward.7} parent=39 // pred_check
          %p381 = pneg %p87
        $region46: #{decoder_forward.7} parent=39 // pred_check_branch
          %383 = sbr.rel (%p381) target = $region48
        $region47: #{decoder_forward.7} parent=39 // pred_region
          %s384 = sand.u32 %s27, 1
          %s385 = scalar_lea.sflag [#allocation6], %s384
          %s386 = sand.u32 %s77, 1
          %s387 = smul.addr %s386, 8
          %s388 = scalar_lea.vmem [#allocation5], %s387
          %s390 = ssub.s32 128, 128
          %391 = vsyncadd %s385, %s390
          %s392 = smul.addr %s34, 128
          %s393 = scalar_lea.hbm %s1, %s392
          %s395 = sshll.u32 %s388, 4
          %s396 = int_to_ptr.vmem [resolvable:$true] %s395
          %398 = dma.hbm_to_vmem [thread:$0]  %s393, 128, %s396, %s385
        $region48: #{decoder_forward.7} parent=39 // pred_fallthru
          _
        // Predicated region
        $region49: #{decoder_forward.7} parent=39 // pred_check
          %p399 = pneg %p113
        $region50: #{decoder_forward.7} parent=39 // pred_check_branch
          %401 = sbr.rel (%p399) target = $region52
        $region51: #{decoder_forward.7} parent=39 // pred_region
          %s402 = sand.u32 %s27, 1
          %s403 = scalar_lea.sflag [#allocation6], %s402
          %s404 = sand.u32 %s103, 1
          %s405 = scalar_lea.vmem [#allocation7], %s404
          %s407 = ssub.s32 16, 16
          %408 = vsyncadd %s403, %s407
          %s409 = smul.addr %s34, 16
          %s410 = scalar_lea.hbm %s2, %s409
          %s412 = sshll.u32 %s405, 4
          %s413 = int_to_ptr.vmem [resolvable:$true] %s412
          %415 = dma.hbm_to_vmem [thread:$0]  %s410, 16, %s413, %s403
        $region52: #{decoder_forward.7} parent=39 // pred_fallthru
          _
      $region40: #{decoder_forward.7} parent=5 // pred_fallthru
        _
      %p416 = scmp.le.s32.totalorder 1, %s27
      %p417 = scmp.lt.s32.totalorder %s27, 3
      %p418 = pnand %p416, %p417
      %p419 = pneg %p418
      // Predicated region
      $region53: #{decoder_forward.7} parent=5 // pred_check
        _
      $region54: #{decoder_forward.7} parent=5 // pred_check_branch
        %421 = sbr.rel (%p418) target = $region56
      $region55: #{decoder_forward.7} parent=5 // pred_region
        %s422 = ssub.s32 %s27, 1
        %s423 = sand.u32 %s54, 1
        %s424 = scalar_lea.sflag [#allocation3], %s423
        %s425 = sand.u32 %s54, 1
        %s426 = smul.addr %s425, 8
        %s427 = scalar_lea.vmem [#allocation2], %s426
        // Predicated region
        $region57: #{decoder_forward.7} parent=55 // pred_check
          %p428 = pneg %p67
        $region58: #{decoder_forward.7} parent=55 // pred_check_branch
          %430 = sbr.rel (%p428) target = $region60
        $region59: #{decoder_forward.7} parent=55 // pred_region
          %431 = dma.done %s424, 128
        $region60: #{decoder_forward.7} parent=55 // pred_fallthru
          _
        %s432 = sand.u32 %s32, 1
        %s433 = scalar_lea.sflag [#allocation6], %s432
        %s434 = sand.u32 %s80, 1
        %s435 = smul.addr %s434, 8
        %s436 = scalar_lea.vmem [#allocation5], %s435
        // Predicated region
        $region61: #{decoder_forward.7} parent=55 // pred_check
          %p437 = pneg %p93
        $region62: #{decoder_forward.7} parent=55 // pred_check_branch
          %439 = sbr.rel (%p437) target = $region64
        $region63: #{decoder_forward.7} parent=55 // pred_region
          %440 = dma.done %s433, 128
        $region64: #{decoder_forward.7} parent=55 // pred_fallthru
          _
        %s441 = sand.u32 %s32, 1
        %s442 = scalar_lea.sflag [#allocation6], %s441
        %s443 = sand.u32 %s106, 1
        %s444 = scalar_lea.vmem [#allocation7], %s443
        // Predicated region
        $region65: #{decoder_forward.7} parent=55 // pred_check
          %p445 = pneg %p119
        $region66: #{decoder_forward.7} parent=55 // pred_check_branch
          %447 = sbr.rel (%p445) target = $region68
        $region67: #{decoder_forward.7} parent=55 // pred_region
          %448 = dma.done %s442, 16
        $region68: #{decoder_forward.7} parent=55 // pred_fallthru
          _
        // Predicated region
        $region69: #{decoder_forward.7} parent=55 // pred_check
          %p449 = pneg %p140
        $region70: #{decoder_forward.7} parent=55 // pred_check_branch
          %451 = sbr.rel (%p449) target = $region72
        $region71: #{decoder_forward.7} parent=55 // pred_region
          %452 = dma.done [#allocation9], 16
        $region72: #{decoder_forward.7} parent=55 // pred_fallthru
          _
        // Predicated region
        $region73: #{decoder_forward.7} parent=55 // pred_check
          %p453 = pneg %p161
        $region74: #{decoder_forward.7} parent=55 // pred_check_branch
          %455 = sbr.rel (%p453) target = $region76
        $region75: #{decoder_forward.7} parent=55 // pred_region
          %456 = dma.done [#allocation9], 16
        $region76: #{decoder_forward.7} parent=55 // pred_fallthru
          _
        // Predicated region
        $region77: #{decoder_forward.7} parent=55 // pred_check
          %p457 = pneg %p182
        $region78: #{decoder_forward.7} parent=55 // pred_check_branch
          %459 = sbr.rel (%p457) target = $region80
        $region79: #{decoder_forward.7} parent=55 // pred_region
          %460 = dma.done [#allocation12], 256
        $region80: #{decoder_forward.7} parent=55 // pred_fallthru
          _
        // Predicated region
        $region81: #{decoder_forward.7} parent=55 // pred_check
          %p461 = pneg %p203
        $region82: #{decoder_forward.7} parent=55 // pred_check_branch
          %463 = sbr.rel (%p461) target = $region84
        $region83: #{decoder_forward.7} parent=55 // pred_region
          %464 = dma.done [#allocation12], 16
        $region84: #{decoder_forward.7} parent=55 // pred_fallthru
          _
        // Predicated region
        $region85: #{decoder_forward.7} parent=55 // pred_check
          %p465 = pneg %p224
        $region86: #{decoder_forward.7} parent=55 // pred_check_branch
          %467 = sbr.rel (%p465) target = $region88
        $region87: #{decoder_forward.7} parent=55 // pred_region
          %468 = dma.done [#allocation15], 256
        $region88: #{decoder_forward.7} parent=55 // pred_fallthru
          _
        // Predicated region
        $region89: #{decoder_forward.7} parent=55 // pred_check
          %p469 = pneg %p245
        $region90: #{decoder_forward.7} parent=55 // pred_check_branch
          %471 = sbr.rel (%p469) target = $region92
        $region91: #{decoder_forward.7} parent=55 // pred_region
          %472 = dma.done [#allocation15], 16
        $region92: #{decoder_forward.7} parent=55 // pred_fallthru
          _
        %s473 = sand.u32 %s54, 1
        %s474 = scalar_lea.sflag [#allocation3], %s473
        %s475 = sand.u32 %s54, 1
        %s476 = smul.addr %s475, 8
        %s477 = scalar_lea.vmem [#allocation2], %s476
        %p478 = pneg %p67
        %p479 = pneg %p64
        %s480 = sand.u32 %s32, 1
        %s481 = scalar_lea.sflag [#allocation6], %s480
        %s482 = sand.u32 %s80, 1
        %s483 = smul.addr %s482, 8
        %s484 = scalar_lea.vmem [#allocation5], %s483
        %p485 = pneg %p93
        %p486 = pneg %p90
        %s487 = sand.u32 %s32, 1
        %s488 = scalar_lea.sflag [#allocation6], %s487
        %s489 = sand.u32 %s106, 1
        %s490 = scalar_lea.vmem [#allocation7], %s489
        %p491 = pneg %p119
        %p492 = pneg %p116
        %p493 = pneg %p140
        %p494 = pneg %p137
        %p495 = pneg %p161
        %p496 = pneg %p158
        %p497 = pneg %p182
        %p498 = pneg %p179
        %p499 = pneg %p203
        %p500 = pneg %p200
        %p501 = pneg %p224
        %p502 = pneg %p221
        %p503 = pneg %p245
        %p504 = pneg %p242
        %p505 = pneg %p273
        %p506 = pneg %p270
        %s507 = sand.u32 %s260, 1
        %s508 = scalar_lea.sflag [#allocation4], %s507
        %s509 = sand.u32 %s260, 1
        %s510 = smul.addr %s509, 8
        %s511 = scalar_lea.vmem [#allocation17], %s510
        %v513 = vld [vmem:[%s427] sm:$0xff]
        %v514 = vld [vmem:[#allocation8] sm:$0x1]
        %v515 = vld [vmem:[#allocation10] sm:$0x1]
        %vm516 = vcmask 261120
        %v517 = vsel %vm516, %v513, 0.0
        %518 = vadd.xlane.f32.xlu0 %v517
        %v519 = vpop.xlane.xlu0 %518
        %v520 = vrcp.pop 32.0
        %v521 = vmul.f32 %v519, %v520
        %v522 = vsub.f32 %v513, %v521
        %v523 = vmul.f32 %v522, %v522
        %v524 = vsel %vm516, %v523, 0.0
        %525 = vadd.xlane.f32.xlu0 %v524
        %v526 = vpop.xlane.xlu0 %525
        %v527 = vmul.f32 %v526, 0.032258064
        %v528 = vrsqrt.pop %v527
        %v529 = vmul.f32 %v527, %v528
        %vm530 = vcmp.eq.f32.partialorder %v527, inf
        %v531 = vsel %vm530, %v527, %v529
        %vm532 = vcmp.eq.f32.partialorder %v527, 0.0
        %v533 = vand.u32 %v527, 2147483648
        %v534 = vsel %vm532, %v533, %v531
        %v536 = vlaneseq
        %v537 = vshrl.u32 %v536, 7
        %v538 = vsub.s32 0, %v537
        %v539 = vrot.slane %v514, %v538
        %v541 = vmul.f32 %v539, %v522
        %v542 = vadd.f32 %v534, 1e-06
        %v543 = vrcp.pop %v542
        %v544 = vmul.f32 %v541, %v543
        %v546 = vlaneseq
        %v547 = vshrl.u32 %v546, 7
        %v548 = vsub.s32 0, %v547
        %v549 = vrot.slane %v515, %v548
        %v551 = vadd.f32 %v544, %v549
        %v552 = vpack.c.bf16 %v551, %v551
        %v553 = vld [vmem:[#allocation11] sm:$0xf]
        %v554 = vld [vmem:[#allocation11 + $0x4] sm:$0xf]
        %v555 = vld [vmem:[#allocation11 + $0x8] sm:$0xf]
        %v556 = vld [vmem:[#allocation11 + $0xc] sm:$0xf]
        %v557 = vld [vmem:[#allocation13] sm:$0x1]
        %v559 = vlaneseq
        %v560 = vshrl.u32 %v559, 7
        %v561 = vsub.s32 0, %v560
        %v562 = vrot.slane %v557, %v561
        %v568 = vunpack.c.l.b16 %v553
        %v569 = vunpack.c.l.b16 %v554
        %v570 = vunpack.c.l.b16 %v555
        %v571 = vunpack.c.l.b16 %v556
        %v572 = vpack.c.b16 %v569, %v568
        %v573 = vpack.c.b16 %v571, %v570
        %v577 = vsel %vm516, %v552, 0
        %579 = vmatprep.subr.bf16.mxu0 0
        %580 = vmatpush1.bf16.msra.mxu0 %v572
        %581 = vmatprep.subr.bf16.mxu0 0
        %582 = vmatpush1.bf16.msra.mxu0 %v573
        %583 = vmatprep.subr.bf16.mxu0 0
        %584 = vmatpush1.bf16.msra.mxu0 0
        %585 = vmatprep.subr.bf16.mxu0 0
        %586 = vmatpush1.bf16.msra.mxu0 0
        %587 = vmatprep.subr.bf16.mxu0 0
        %588 = vmatpush1.bf16.msra.mxu0 0
        %589 = vmatprep.subr.bf16.mxu0 0
        %590 = vmatpush1.bf16.msra.mxu0 0
        %591 = vmatprep.subr.bf16.mxu0 0
        %592 = vmatpush1.bf16.msra.mxu0 0
        %593 = vmatprep.subr.bf16.mxu0 0
        %594 = vmatpush1.bf16.msra.mxu0 0
        %595 = vmatprep.subr.bf16.mxu0 0
        %596 = vmatpush1.bf16.msra.mxu0 0
        %597 = vmatprep.subr.bf16.mxu0 0
        %598 = vmatpush1.bf16.msra.mxu0 0
        %599 = vmatprep.subr.bf16.mxu0 0
        %600 = vmatpush1.bf16.msra.mxu0 0
        %601 = vmatprep.subr.bf16.mxu0 0
        %602 = vmatpush1.bf16.msra.mxu0 0
        %603 = vmatprep.subr.bf16.mxu0 0
        %604 = vmatpush1.bf16.msra.mxu0 0
        %605 = vmatprep.subr.bf16.mxu0 0
        %606 = vmatpush1.bf16.msra.mxu0 0
        %607 = vmatprep.subr.bf16.mxu0 0
        %608 = vmatpush1.bf16.msra.mxu0 0
        %609 = vmatprep.subr.bf16.mxu0 0
        %610 = vmatpush1.bf16.msra.mxu0 0
        %611 = vmatprep.mubr.bf16.mxu0 0
        %612 = vmatmul.mubr.bf16.gmra.mrb[0].mxu0 %v577
        %v613 = vpop.f32.mrb[0].mxu0
        %v614 = vadd.f32 %v562, %v613
        %v615 = vpop.f32.mrb[0].mxu0
        %v616 = vpop.f32.mrb[0].mxu0
        %v617 = vpop.f32.mrb[0].mxu0
        %618 = vdwg.mxu0
        %v619 = vmul.f32 %v614, 0.35355338
        %v620 = vld [vmem:[%s436] sm:$0xff]
        %v621 = vpack.c.bf16 %v620, %v620
        %622 = vrot.lane.b32.xlu0 %v572, 96
        %v623 = vpop.permute.xlu0 %622
        %624 = vrot.lane.b32.xlu0 %v573, 96
        %v625 = vpop.permute.xlu0 %624
        %628 = vrot.lane.b32.xlu0 %v562, 96
        %v629 = vpop.permute.xlu0 %628
        %v632 = vsel %vm516, %v621, 0
        %634 = vmatprep.subr.bf16.mxu0 0
        %635 = vmatpush1.bf16.msra.mxu0 %v623
        %636 = vmatprep.subr.bf16.mxu0 0
        %637 = vmatpush1.bf16.msra.mxu0 %v625
        %638 = vmatprep.subr.bf16.mxu0 0
        %639 = vmatpush1.bf16.msra.mxu0 0
        %640 = vmatprep.subr.bf16.mxu0 0
        %641 = vmatpush1.bf16.msra.mxu0 0
        %642 = vmatprep.subr.bf16.mxu0 0
        %643 = vmatpush1.bf16.msra.mxu0 0
        %644 = vmatprep.subr.bf16.mxu0 0
        %645 = vmatpush1.bf16.msra.mxu0 0
        %646 = vmatprep.subr.bf16.mxu0 0
        %647 = vmatpush1.bf16.msra.mxu0 0
        %648 = vmatprep.subr.bf16.mxu0 0
        %649 = vmatpush1.bf16.msra.mxu0 0
        %650 = vmatprep.subr.bf16.mxu0 0
        %651 = vmatpush1.bf16.msra.mxu0 0
        %652 = vmatprep.subr.bf16.mxu0 0
        %653 = vmatpush1.bf16.msra.mxu0 0
        %654 = vmatprep.subr.bf16.mxu0 0
        %655 = vmatpush1.bf16.msra.mxu0 0
        %656 = vmatprep.subr.bf16.mxu0 0
        %657 = vmatpush1.bf16.msra.mxu0 0
        %658 = vmatprep.subr.bf16.mxu0 0
        %659 = vmatpush1.bf16.msra.mxu0 0
        %660 = vmatprep.subr.bf16.mxu0 0
        %661 = vmatpush1.bf16.msra.mxu0 0
        %662 = vmatprep.subr.bf16.mxu0 0
        %663 = vmatpush1.bf16.msra.mxu0 0
        %664 = vmatprep.subr.bf16.mxu0 0
        %665 = vmatpush1.bf16.msra.mxu0 0
        %666 = vmatprep.mubr.bf16.mxu0 0
        %667 = vmatmul.mubr.bf16.gmra.mrb[0].mxu0 %v632
        %v668 = vpop.f32.mrb[0].mxu0
        %v669 = vadd.f32 %v629, %v668
        %v670 = vpop.f32.mrb[0].mxu0
        %v671 = vpop.f32.mrb[0].mxu0
        %v672 = vpop.f32.mrb[0].mxu0
        %673 = vdwg.mxu0
        %v674 = vld [vmem:[%s444] sm:$0x1]
        %v675 = vunpack.c.0.s8 %v674
        %vm676 = vcmp.eq.s32.totalorder %v675, 0
        %v677 = vld [vmem:[#allocation14] sm:$0xf]
        %v678 = vld [vmem:[#allocation14 + $0x4] sm:$0xf]
        %v679 = vld [vmem:[#allocation14 + $0x8] sm:$0xf]
        %v680 = vld [vmem:[#allocation14 + $0xc] sm:$0xf]
        %v681 = vpack.c.bf16 %v619, %v619
        %v682 = vpack.c.bf16 %v669, %v669
        %vm683 = vcmask 64512
        %v685 = vsel %vm683, %v681, 0
        %v688 = vsel %vm683, %v682, 0
        %690 = vmatprep.subr.bf16.mxu0 0
        %691 = vmatpush1.bf16.xpose.msra.mxu0 %v688
        %692 = vmatprep.subr.bf16.mxu0 0
        %693 = vmatpush1.bf16.xpose.msra.mxu0 0
        %694 = vmatprep.subr.bf16.mxu0 0
        %695 = vmatpush1.bf16.xpose.msra.mxu0 0
        %696 = vmatprep.subr.bf16.mxu0 0
        %697 = vmatpush1.bf16.xpose.msra.mxu0 0
        %698 = vmatprep.subr.bf16.mxu0 0
        %699 = vmatpush1.bf16.xpose.msra.mxu0 0
        %700 = vmatprep.subr.bf16.mxu0 0
        %701 = vmatpush1.bf16.xpose.msra.mxu0 0
        %702 = vmatprep.subr.bf16.mxu0 0
        %703 = vmatpush1.bf16.xpose.msra.mxu0 0
        %704 = vmatprep.subr.bf16.mxu0 0
        %705 = vmatpush1.bf16.xpose.msra.mxu0 0
        %706 = vmatprep.subr.bf16.mxu0 0
        %707 = vmatpush1.bf16.xpose.msra.mxu0 0
        %708 = vmatprep.subr.bf16.mxu0 0
        %709 = vmatpush1.bf16.xpose.msra.mxu0 0
        %710 = vmatprep.subr.bf16.mxu0 0
        %711 = vmatpush1.bf16.xpose.msra.mxu0 0
        %712 = vmatprep.subr.bf16.mxu0 0
        %713 = vmatpush1.bf16.xpose.msra.mxu0 0
        %714 = vmatprep.subr.bf16.mxu0 0
        %715 = vmatpush1.bf16.xpose.msra.mxu0 0
        %716 = vmatprep.subr.bf16.mxu0 0
        %717 = vmatpush1.bf16.xpose.msra.mxu0 0
        %718 = vmatprep.subr.bf16.mxu0 0
        %719 = vmatpush1.bf16.xpose.msra.mxu0 0
        %720 = vmatprep.subr.bf16.mxu0 0
        %721 = vmatpush1.bf16.xpose.msra.mxu0 0
        %722 = vmatprep.mubr.bf16.mxu0 0
        %723 = vmatmul.mubr.bf16.gmra.mrb[0].mxu0 %v685
        %v724 = vpop.f32.mrb[0].mxu0
        %v725 = vadd.f32 0.0, %v724
        %v726 = vpop.f32.mrb[0].mxu0
        %v727 = vpop.f32.mrb[0].mxu0
        %v728 = vpop.f32.mrb[0].mxu0
        %729 = vdwg.mxu0
        %v730 = vsel %vm676, 1, 0
        %v731 = vlaneseq
        %v732 = vshrl.u32 %v731, 7
        %v733 = vsub.s32 0, %v732
        %v734 = vrot.slane %v730, %v733
        %vm735 = vcmp.eq.s32.totalorder %v734, 1
        %v736 = vsel %vm735, -1e+09, %v725
        %v737 = vsel %vm683, %v736, -inf
        %738 = vmax.xlane.f32.xlu0 %v737
        %v739 = vpop.xlane.xlu0 %738
        %v740 = vsub.f32 %v736, %v739
        %v741 = vmul.f32 %v740, 1.442695
        %v742 = vpow.pop %v741
        %v743 = vsel %vm683, %v742, 0.0
        %744 = vadd.xlane.f32.xlu0 %v743
        %v745 = vpop.xlane.xlu0 %744
        %v746 = vrcp.pop %v745
        %v747 = vmul.f32 %v742, %v746
        %v748 = vpack.c.bf16 %v747, %v747
        %750 = vrot.lane.b32.xlu0 %v682, 96
        %v751 = vpop.permute.xlu0 %750
        %v753 = vsel %vm683, %v748, 0
        %vm755 = vcmask 1043456
        %v757 = vsel %vm755, %v751, 0
        %759 = vmatprep.subr.bf16.mxu0 0
        %760 = vmatpush1.bf16.msra.mxu0 %v757
        %761 = vmatprep.subr.bf16.mxu0 0
        %762 = vmatpush1.bf16.msra.mxu0 0
        %763 = vmatprep.subr.bf16.mxu0 0
        %764 = vmatpush1.bf16.msra.mxu0 0
        %765 = vmatprep.subr.bf16.mxu0 0
        %766 = vmatpush1.bf16.msra.mxu0 0
        %767 = vmatprep.subr.bf16.mxu0 0
        %768 = vmatpush1.bf16.msra.mxu0 0
        %769 = vmatprep.subr.bf16.mxu0 0
        %770 = vmatpush1.bf16.msra.mxu0 0
        %771 = vmatprep.subr.bf16.mxu0 0
        %772 = vmatpush1.bf16.msra.mxu0 0
        %773 = vmatprep.subr.bf16.mxu0 0
        %774 = vmatpush1.bf16.msra.mxu0 0
        %775 = vmatprep.subr.bf16.mxu0 0
        %776 = vmatpush1.bf16.msra.mxu0 0
        %777 = vmatprep.subr.bf16.mxu0 0
        %778 = vmatpush1.bf16.msra.mxu0 0
        %779 = vmatprep.subr.bf16.mxu0 0
        %780 = vmatpush1.bf16.msra.mxu0 0
        %781 = vmatprep.subr.bf16.mxu0 0
        %782 = vmatpush1.bf16.msra.mxu0 0
        %783 = vmatprep.subr.bf16.mxu0 0
        %784 = vmatpush1.bf16.msra.mxu0 0
        %785 = vmatprep.subr.bf16.mxu0 0
        %786 = vmatpush1.bf16.msra.mxu0 0
        %787 = vmatprep.subr.bf16.mxu0 0
        %788 = vmatpush1.bf16.msra.mxu0 0
        %789 = vmatprep.subr.bf16.mxu0 0
        %790 = vmatpush1.bf16.msra.mxu0 0
        %791 = vmatprep.mubr.bf16.mxu0 0
        %792 = vmatmul.mubr.bf16.gmra.mrb[0].mxu0 %v753
        %v793 = vpop.f32.mrb[0].mxu0
        %v794 = vadd.f32 0.0, %v793
        %v795 = vpop.f32.mrb[0].mxu0
        %v796 = vpop.f32.mrb[0].mxu0
        %v797 = vpop.f32.mrb[0].mxu0
        %798 = vdwg.mxu0
        %v799 = vpack.c.bf16 %v794, %v794
        %801 = vrot.lane.b32.xlu0 %v681, 120
        %v802 = vpop.permute.xlu0 %801
        %803 = vrot.lane.b32.xlu0 %v682, 120
        %v804 = vpop.permute.xlu0 %803
        %v806 = vsel %vm683, %v802, 0
        %v809 = vsel %vm683, %v804, 0
        %811 = vmatprep.subr.bf16.mxu0 0
        %812 = vmatpush1.bf16.xpose.msra.mxu0 %v809
        %813 = vmatprep.subr.bf16.mxu0 0
        %814 = vmatpush1.bf16.xpose.msra.mxu0 0
        %815 = vmatprep.subr.bf16.mxu0 0
        %816 = vmatpush1.bf16.xpose.msra.mxu0 0
        %817 = vmatprep.subr.bf16.mxu0 0
        %818 = vmatpush1.bf16.xpose.msra.mxu0 0
        %819 = vmatprep.subr.bf16.mxu0 0
        %820 = vmatpush1.bf16.xpose.msra.mxu0 0
        %821 = vmatprep.subr.bf16.mxu0 0
        %822 = vmatpush1.bf16.xpose.msra.mxu0 0
        %823 = vmatprep.subr.bf16.mxu0 0
        %824 = vmatpush1.bf16.xpose.msra.mxu0 0
        %825 = vmatprep.subr.bf16.mxu0 0
        %826 = vmatpush1.bf16.xpose.msra.mxu0 0
        %827 = vmatprep.subr.bf16.mxu0 0
        %828 = vmatpush1.bf16.xpose.msra.mxu0 0
        %829 = vmatprep.subr.bf16.mxu0 0
        %830 = vmatpush1.bf16.xpose.msra.mxu0 0
        %831 = vmatprep.subr.bf16.mxu0 0
        %832 = vmatpush1.bf16.xpose.msra.mxu0 0
        %833 = vmatprep.subr.bf16.mxu0 0
        %834 = vmatpush1.bf16.xpose.msra.mxu0 0
        %835 = vmatprep.subr.bf16.mxu0 0
        %836 = vmatpush1.bf16.xpose.msra.mxu0 0
        %837 = vmatprep.subr.bf16.mxu0 0
        %838 = vmatpush1.bf16.xpose.msra.mxu0 0
        %839 = vmatprep.subr.bf16.mxu0 0
        %840 = vmatpush1.bf16.xpose.msra.mxu0 0
        %841 = vmatprep.subr.bf16.mxu0 0
        %842 = vmatpush1.bf16.xpose.msra.mxu0 0
        %843 = vmatprep.mubr.bf16.mxu0 0
        %844 = vmatmul.mubr.bf16.gmra.mrb[0].mxu0 %v806
        %v845 = vpop.f32.mrb[0].mxu0
        %v846 = vadd.f32 0.0, %v845
        %v847 = vpop.f32.mrb[0].mxu0
        %v848 = vpop.f32.mrb[0].mxu0
        %v849 = vpop.f32.mrb[0].mxu0
        %850 = vdwg.mxu0
        %v851 = vsel %vm735, -1e+09, %v846
        %v852 = vsel %vm683, %v851, -inf
        %853 = vmax.xlane.f32.xlu0 %v852
        %v854 = vpop.xlane.xlu0 %853
        %v855 = vsub.f32 %v851, %v854
        %v856 = vmul.f32 %v855, 1.442695
        %v857 = vpow.pop %v856
        %v858 = vsel %vm683, %v857, 0.0
        %859 = vadd.xlane.f32.xlu0 %v858
        %v860 = vpop.xlane.xlu0 %859
        %v861 = vrcp.pop %v860
        %v862 = vmul.f32 %v857, %v861
        %v863 = vpack.c.bf16 %v862, %v862
        %864 = vrot.lane.b32.xlu0 %v682, 88
        %v865 = vpop.permute.xlu0 %864
        %v867 = vsel %vm683, %v863, 0
        %v870 = vsel %vm755, %v865, 0
        %872 = vmatprep.subr.bf16.mxu0 0
        %873 = vmatpush1.bf16.msra.mxu0 %v870
        %874 = vmatprep.subr.bf16.mxu0 0
        %875 = vmatpush1.bf16.msra.mxu0 0
        %876 = vmatprep.subr.bf16.mxu0 0
        %877 = vmatpush1.bf16.msra.mxu0 0
        %878 = vmatprep.subr.bf16.mxu0 0
        %879 = vmatpush1.bf16.msra.mxu0 0
        %880 = vmatprep.subr.bf16.mxu0 0
        %881 = vmatpush1.bf16.msra.mxu0 0
        %882 = vmatprep.subr.bf16.mxu0 0
        %883 = vmatpush1.bf16.msra.mxu0 0
        %884 = vmatprep.subr.bf16.mxu0 0
        %885 = vmatpush1.bf16.msra.mxu0 0
        %886 = vmatprep.subr.bf16.mxu0 0
        %887 = vmatpush1.bf16.msra.mxu0 0
        %888 = vmatprep.subr.bf16.mxu0 0
        %889 = vmatpush1.bf16.msra.mxu0 0
        %890 = vmatprep.subr.bf16.mxu0 0
        %891 = vmatpush1.bf16.msra.mxu0 0
        %892 = vmatprep.subr.bf16.mxu0 0
        %893 = vmatpush1.bf16.msra.mxu0 0
        %894 = vmatprep.subr.bf16.mxu0 0
        %895 = vmatpush1.bf16.msra.mxu0 0
        %896 = vmatprep.subr.bf16.mxu0 0
        %897 = vmatpush1.bf16.msra.mxu0 0
        %898 = vmatprep.subr.bf16.mxu0 0
        %899 = vmatpush1.bf16.msra.mxu0 0
        %900 = vmatprep.subr.bf16.mxu0 0
        %901 = vmatpush1.bf16.msra.mxu0 0
        %902 = vmatprep.subr.bf16.mxu0 0
        %903 = vmatpush1.bf16.msra.mxu0 0
        %904 = vmatprep.mubr.bf16.mxu0 0
        %905 = vmatmul.mubr.bf16.gmra.mrb[0].mxu0 %v867
        %v906 = vpop.f32.mrb[0].mxu0
        %v907 = vadd.f32 0.0, %v906
        %v908 = vpop.f32.mrb[0].mxu0
        %v909 = vpop.f32.mrb[0].mxu0
        %v910 = vpop.f32.mrb[0].mxu0
        %911 = vdwg.mxu0
        %v912 = vpack.c.bf16 %v907, %v907
        %v914 = vsel %vm683, %v912, 0
        %v917 = vsel %vm755, %v678, 0
        %919 = vmatprep.subr.bf16.mxu0 0
        %920 = vmatpush1.bf16.msra.mxu0 %v917
        %921 = vmatprep.subr.bf16.mxu0 0
        %922 = vmatpush1.bf16.msra.mxu0 0
        %923 = vmatprep.subr.bf16.mxu0 0
        %924 = vmatpush1.bf16.msra.mxu0 0
        %925 = vmatprep.subr.bf16.mxu0 0
        %926 = vmatpush1.bf16.msra.mxu0 0
        %927 = vmatprep.subr.bf16.mxu0 0
        %928 = vmatpush1.bf16.msra.mxu0 0
        %929 = vmatprep.subr.bf16.mxu0 0
        %930 = vmatpush1.bf16.msra.mxu0 0
        %931 = vmatprep.subr.bf16.mxu0 0
        %932 = vmatpush1.bf16.msra.mxu0 0
        %933 = vmatprep.subr.bf16.mxu0 0
        %934 = vmatpush1.bf16.msra.mxu0 0
        %935 = vmatprep.subr.bf16.mxu0 0
        %936 = vmatpush1.bf16.msra.mxu0 0
        %937 = vmatprep.subr.bf16.mxu0 0
        %938 = vmatpush1.bf16.msra.mxu0 0
        %939 = vmatprep.subr.bf16.mxu0 0
        %940 = vmatpush1.bf16.msra.mxu0 0
        %941 = vmatprep.subr.bf16.mxu0 0
        %942 = vmatpush1.bf16.msra.mxu0 0
        %943 = vmatprep.subr.bf16.mxu0 0
        %944 = vmatpush1.bf16.msra.mxu0 0
        %945 = vmatprep.subr.bf16.mxu0 0
        %946 = vmatpush1.bf16.msra.mxu0 0
        %947 = vmatprep.subr.bf16.mxu0 0
        %948 = vmatpush1.bf16.msra.mxu0 0
        %949 = vmatprep.subr.bf16.mxu0 0
        %950 = vmatpush1.bf16.msra.mxu0 0
        %951 = vmatprep.mubr.bf16.mxu0 0
        %952 = vmatmul.mubr.bf16.gmra.mrb[0].mxu0 %v914
        %v953 = vpop.f32.mrb[0].mxu0
        %v954 = vadd.f32 0.0, %v953
        %v955 = vpop.f32.mrb[0].mxu0
        %v956 = vpop.f32.mrb[0].mxu0
        %v957 = vpop.f32.mrb[0].mxu0
        %958 = vdwg.mxu0
        %v960 = vsel %vm683, %v799, 0
        %v963 = vsel %vm755, %v677, 0
        %965 = vmatprep.subr.bf16.mxu0 0
        %966 = vmatpush1.bf16.msra.mxu0 %v963
        %967 = vmatprep.subr.bf16.mxu0 0
        %968 = vmatpush1.bf16.msra.mxu0 0
        %969 = vmatprep.subr.bf16.mxu0 0
        %970 = vmatpush1.bf16.msra.mxu0 0
        %971 = vmatprep.subr.bf16.mxu0 0
        %972 = vmatpush1.bf16.msra.mxu0 0
        %973 = vmatprep.subr.bf16.mxu0 0
        %974 = vmatpush1.bf16.msra.mxu0 0
        %975 = vmatprep.subr.bf16.mxu0 0
        %976 = vmatpush1.bf16.msra.mxu0 0
        %977 = vmatprep.subr.bf16.mxu0 0
        %978 = vmatpush1.bf16.msra.mxu0 0
        %979 = vmatprep.subr.bf16.mxu0 0
        %980 = vmatpush1.bf16.msra.mxu0 0
        %981 = vmatprep.subr.bf16.mxu0 0
        %982 = vmatpush1.bf16.msra.mxu0 0
        %983 = vmatprep.subr.bf16.mxu0 0
        %984 = vmatpush1.bf16.msra.mxu0 0
        %985 = vmatprep.subr.bf16.mxu0 0
        %986 = vmatpush1.bf16.msra.mxu0 0
        %987 = vmatprep.subr.bf16.mxu0 0
        %988 = vmatpush1.bf16.msra.mxu0 0
        %989 = vmatprep.subr.bf16.mxu0 0
        %990 = vmatpush1.bf16.msra.mxu0 0
        %991 = vmatprep.subr.bf16.mxu0 0
        %992 = vmatpush1.bf16.msra.mxu0 0
        %993 = vmatprep.subr.bf16.mxu0 0
        %994 = vmatpush1.bf16.msra.mxu0 0
        %995 = vmatprep.subr.bf16.mxu0 0
        %996 = vmatpush1.bf16.msra.mxu0 0
        %997 = vmatprep.mubr.bf16.mxu0 0
        %998 = vmatmul.mubr.bf16.gmra.mrb[0].mxu0 %v960
        %v999 = vpop.f32.mrb[0].mxu0
        %v1000 = vadd.f32 %v954, %v999
        %v1001 = vpop.f32.mrb[0].mxu0
        %v1002 = vpop.f32.mrb[0].mxu0
        %v1003 = vpop.f32.mrb[0].mxu0
        %1004 = vdwg.mxu0
        %1005 = vrot.lane.b32.xlu0 %v681, 112
        %v1006 = vpop.permute.xlu0 %1005
        %1007 = vrot.lane.b32.xlu0 %v682, 112
        %v1008 = vpop.permute.xlu0 %1007
        %v1010 = vsel %vm683, %v1006, 0
        %v1013 = vsel %vm683, %v1008, 0
        %1015 = vmatprep.subr.bf16.mxu0 0
        %1016 = vmatpush1.bf16.xpose.msra.mxu0 %v1013
        %1017 = vmatprep.subr.bf16.mxu0 0
        %1018 = vmatpush1.bf16.xpose.msra.mxu0 0
        %1019 = vmatprep.subr.bf16.mxu0 0
        %1020 = vmatpush1.bf16.xpose.msra.mxu0 0
        %1021 = vmatprep.subr.bf16.mxu0 0
        %1022 = vmatpush1.bf16.xpose.msra.mxu0 0
        %1023 = vmatprep.subr.bf16.mxu0 0
        %1024 = vmatpush1.bf16.xpose.msra.mxu0 0
        %1025 = vmatprep.subr.bf16.mxu0 0
        %1026 = vmatpush1.bf16.xpose.msra.mxu0 0
        %1027 = vmatprep.subr.bf16.mxu0 0
        %1028 = vmatpush1.bf16.xpose.msra.mxu0 0
        %1029 = vmatprep.subr.bf16.mxu0 0
        %1030 = vmatpush1.bf16.xpose.msra.mxu0 0
        %1031 = vmatprep.subr.bf16.mxu0 0
        %1032 = vmatpush1.bf16.xpose.msra.mxu0 0
        %1033 = vmatprep.subr.bf16.mxu0 0
        %1034 = vmatpush1.bf16.xpose.msra.mxu0 0
        %1035 = vmatprep.subr.bf16.mxu0 0
        %1036 = vmatpush1.bf16.xpose.msra.mxu0 0
        %1037 = vmatprep.subr.bf16.mxu0 0
        %1038 = vmatpush1.bf16.xpose.msra.mxu0 0
        %1039 = vmatprep.subr.bf16.mxu0 0
        %1040 = vmatpush1.bf16.xpose.msra.mxu0 0
        %1041 = vmatprep.subr.bf16.mxu0 0
        %1042 = vmatpush1.bf16.xpose.msra.mxu0 0
        %1043 = vmatprep.subr.bf16.mxu0 0
        %1044 = vmatpush1.bf16.xpose.msra.mxu0 0
        %1045 = vmatprep.subr.bf16.mxu0 0
        %1046 = vmatpush1.bf16.xpose.msra.mxu0 0
        %1047 = vmatprep.mubr.bf16.mxu0 0
        %1048 = vmatmul.mubr.bf16.gmra.mrb[0].mxu0 %v1010
        %v1049 = vpop.f32.mrb[0].mxu0
        %v1050 = vadd.f32 0.0, %v1049
        %v1051 = vpop.f32.mrb[0].mxu0
        %v1052 = vpop.f32.mrb[0].mxu0
        %v1053 = vpop.f32.mrb[0].mxu0
        %1054 = vdwg.mxu0
        %v1055 = vsel %vm735, -1e+09, %v1050
        %v1056 = vsel %vm683, %v1055, -inf
        %1057 = vmax.xlane.f32.xlu0 %v1056
        %v1058 = vpop.xlane.xlu0 %1057
        %v1059 = vsub.f32 %v1055, %v1058
        %v1060 = vmul.f32 %v1059, 1.442695
        %v1061 = vpow.pop %v1060
        %v1062 = vsel %vm683, %v1061, 0.0
        %1063 = vadd.xlane.f32.xlu0 %v1062
        %v1064 = vpop.xlane.xlu0 %1063
        %v1065 = vrcp.pop %v1064
        %v1066 = vmul.f32 %v1061, %v1065
        %v1067 = vpack.c.bf16 %v1066, %v1066
        %1068 = vrot.lane.b32.xlu0 %v682, 80
        %v1069 = vpop.permute.xlu0 %1068
        %v1071 = vsel %vm683, %v1067, 0
        %v1074 = vsel %vm755, %v1069, 0
        %1076 = vmatprep.subr.bf16.mxu0 0
        %1077 = vmatpush1.bf16.msra.mxu0 %v1074
        %1078 = vmatprep.subr.bf16.mxu0 0
        %1079 = vmatpush1.bf16.msra.mxu0 0
        %1080 = vmatprep.subr.bf16.mxu0 0
        %1081 = vmatpush1.bf16.msra.mxu0 0
        %1082 = vmatprep.subr.bf16.mxu0 0
        %1083 = vmatpush1.bf16.msra.mxu0 0
        %1084 = vmatprep.subr.bf16.mxu0 0
        %1085 = vmatpush1.bf16.msra.mxu0 0
        %1086 = vmatprep.subr.bf16.mxu0 0
        %1087 = vmatpush1.bf16.msra.mxu0 0
        %1088 = vmatprep.subr.bf16.mxu0 0
        %1089 = vmatpush1.bf16.msra.mxu0 0
        %1090 = vmatprep.subr.bf16.mxu0 0
        %1091 = vmatpush1.bf16.msra.mxu0 0
        %1092 = vmatprep.subr.bf16.mxu0 0
        %1093 = vmatpush1.bf16.msra.mxu0 0
        %1094 = vmatprep.subr.bf16.mxu0 0
        %1095 = vmatpush1.bf16.msra.mxu0 0
        %1096 = vmatprep.subr.bf16.mxu0 0
        %1097 = vmatpush1.bf16.msra.mxu0 0
        %1098 = vmatprep.subr.bf16.mxu0 0
        %1099 = vmatpush1.bf16.msra.mxu0 0
        %1100 = vmatprep.subr.bf16.mxu0 0
        %1101 = vmatpush1.bf16.msra.mxu0 0
        %1102 = vmatprep.subr.bf16.mxu0 0
        %1103 = vmatpush1.bf16.msra.mxu0 0
        %1104 = vmatprep.subr.bf16.mxu0 0
        %1105 = vmatpush1.bf16.msra.mxu0 0
        %1106 = vmatprep.subr.bf16.mxu0 0
        %1107 = vmatpush1.bf16.msra.mxu0 0
        %1108 = vmatprep.mubr.bf16.mxu0 0
        %1109 = vmatmul.mubr.bf16.gmra.mrb[0].mxu0 %v1071
        %v1110 = vpop.f32.mrb[0].mxu0
        %v1111 = vadd.f32 0.0, %v1110
        %v1112 = vpop.f32.mrb[0].mxu0
        %v1113 = vpop.f32.mrb[0].mxu0
        %v1114 = vpop.f32.mrb[0].mxu0
        %1115 = vdwg.mxu0
        %v1116 = vpack.c.bf16 %v1111, %v1111
        %v1118 = vsel %vm683, %v1116, 0
        %v1121 = vsel %vm755, %v679, 0
        %1123 = vmatprep.subr.bf16.mxu0 0
        %1124 = vmatpush1.bf16.msra.mxu0 %v1121
        %1125 = vmatprep.subr.bf16.mxu0 0
        %1126 = vmatpush1.bf16.msra.mxu0 0
        %1127 = vmatprep.subr.bf16.mxu0 0
        %1128 = vmatpush1.bf16.msra.mxu0 0
        %1129 = vmatprep.subr.bf16.mxu0 0
        %1130 = vmatpush1.bf16.msra.mxu0 0
        %1131 = vmatprep.subr.bf16.mxu0 0
        %1132 = vmatpush1.bf16.msra.mxu0 0
        %1133 = vmatprep.subr.bf16.mxu0 0
        %1134 = vmatpush1.bf16.msra.mxu0 0
        %1135 = vmatprep.subr.bf16.mxu0 0
        %1136 = vmatpush1.bf16.msra.mxu0 0
        %1137 = vmatprep.subr.bf16.mxu0 0
        %1138 = vmatpush1.bf16.msra.mxu0 0
        %1139 = vmatprep.subr.bf16.mxu0 0
        %1140 = vmatpush1.bf16.msra.mxu0 0
        %1141 = vmatprep.subr.bf16.mxu0 0
        %1142 = vmatpush1.bf16.msra.mxu0 0
        %1143 = vmatprep.subr.bf16.mxu0 0
        %1144 = vmatpush1.bf16.msra.mxu0 0
        %1145 = vmatprep.subr.bf16.mxu0 0
        %1146 = vmatpush1.bf16.msra.mxu0 0
        %1147 = vmatprep.subr.bf16.mxu0 0
        %1148 = vmatpush1.bf16.msra.mxu0 0
        %1149 = vmatprep.subr.bf16.mxu0 0
        %1150 = vmatpush1.bf16.msra.mxu0 0
        %1151 = vmatprep.subr.bf16.mxu0 0
        %1152 = vmatpush1.bf16.msra.mxu0 0
        %1153 = vmatprep.subr.bf16.mxu0 0
        %1154 = vmatpush1.bf16.msra.mxu0 0
        %1155 = vmatprep.mubr.bf16.mxu0 0
        %1156 = vmatmul.mubr.bf16.gmra.mrb[0].mxu0 %v1118
        %v1157 = vpop.f32.mrb[0].mxu0
        %v1158 = vadd.f32 0.0, %v1157
        %v1159 = vpop.f32.mrb[0].mxu0
        %v1160 = vpop.f32.mrb[0].mxu0
        %v1161 = vpop.f32.mrb[0].mxu0
        %1162 = vdwg.mxu0
        %v1163 = vadd.f32 %v1000, %v1158
        %1164 = vrot.lane.b32.xlu0 %v681, 104
        %v1165 = vpop.permute.xlu0 %1164
        %1166 = vrot.lane.b32.xlu0 %v682, 104
        %v1167 = vpop.permute.xlu0 %1166
        %v1169 = vsel %vm683, %v1165, 0
        %v1172 = vsel %vm683, %v1167, 0
        %1174 = vmatprep.subr.bf16.mxu0 0
        %1175 = vmatpush1.bf16.xpose.msra.mxu0 %v1172
        %1176 = vmatprep.subr.bf16.mxu0 0
        %1177 = vmatpush1.bf16.xpose.msra.mxu0 0
        %1178 = vmatprep.subr.bf16.mxu0 0
        %1179 = vmatpush1.bf16.xpose.msra.mxu0 0
        %1180 = vmatprep.subr.bf16.mxu0 0
        %1181 = vmatpush1.bf16.xpose.msra.mxu0 0
        %1182 = vmatprep.subr.bf16.mxu0 0
        %1183 = vmatpush1.bf16.xpose.msra.mxu0 0
        %1184 = vmatprep.subr.bf16.mxu0 0
        %1185 = vmatpush1.bf16.xpose.msra.mxu0 0
        %1186 = vmatprep.subr.bf16.mxu0 0
        %1187 = vmatpush1.bf16.xpose.msra.mxu0 0
        %1188 = vmatprep.subr.bf16.mxu0 0
        %1189 = vmatpush1.bf16.xpose.msra.mxu0 0
        %1190 = vmatprep.subr.bf16.mxu0 0
        %1191 = vmatpush1.bf16.xpose.msra.mxu0 0
        %1192 = vmatprep.subr.bf16.mxu0 0
        %1193 = vmatpush1.bf16.xpose.msra.mxu0 0
        %1194 = vmatprep.subr.bf16.mxu0 0
        %1195 = vmatpush1.bf16.xpose.msra.mxu0 0
        %1196 = vmatprep.subr.bf16.mxu0 0
        %1197 = vmatpush1.bf16.xpose.msra.mxu0 0
        %1198 = vmatprep.subr.bf16.mxu0 0
        %1199 = vmatpush1.bf16.xpose.msra.mxu0 0
        %1200 = vmatprep.subr.bf16.mxu0 0
        %1201 = vmatpush1.bf16.xpose.msra.mxu0 0
        %1202 = vmatprep.subr.bf16.mxu0 0
        %1203 = vmatpush1.bf16.xpose.msra.mxu0 0
        %1204 = vmatprep.subr.bf16.mxu0 0
        %1205 = vmatpush1.bf16.xpose.msra.mxu0 0
        %1206 = vmatprep.mubr.bf16.mxu0 0
        %1207 = vmatmul.mubr.bf16.gmra.mrb[0].mxu0 %v1169
        %v1208 = vpop.f32.mrb[0].mxu0
        %v1209 = vadd.f32 0.0, %v1208
        %v1210 = vpop.f32.mrb[0].mxu0
        %v1211 = vpop.f32.mrb[0].mxu0
        %v1212 = vpop.f32.mrb[0].mxu0
        %1213 = vdwg.mxu0
        %v1214 = vsel %vm735, -1e+09, %v1209
        %v1215 = vsel %vm683, %v1214, -inf
        %1216 = vmax.xlane.f32.xlu0 %v1215
        %v1217 = vpop.xlane.xlu0 %1216
        %v1218 = vsub.f32 %v1214, %v1217
        %v1219 = vmul.f32 %v1218, 1.442695
        %v1220 = vpow.pop %v1219
        %v1221 = vsel %vm683, %v1220, 0.0
        %1222 = vadd.xlane.f32.xlu0 %v1221
        %v1223 = vpop.xlane.xlu0 %1222
        %v1224 = vrcp.pop %v1223
        %v1225 = vmul.f32 %v1220, %v1224
        %v1226 = vpack.c.bf16 %v1225, %v1225
        %1227 = vrot.lane.b32.xlu0 %v682, 72
        %v1228 = vpop.permute.xlu0 %1227
        %v1230 = vsel %vm683, %v1226, 0
        %v1233 = vsel %vm755, %v1228, 0
        %1235 = vmatprep.subr.bf16.mxu0 0
        %1236 = vmatpush1.bf16.msra.mxu0 %v1233
        %1237 = vmatprep.subr.bf16.mxu0 0
        %1238 = vmatpush1.bf16.msra.mxu0 0
        %1239 = vmatprep.subr.bf16.mxu0 0
        %1240 = vmatpush1.bf16.msra.mxu0 0
        %1241 = vmatprep.subr.bf16.mxu0 0
        %1242 = vmatpush1.bf16.msra.mxu0 0
        %1243 = vmatprep.subr.bf16.mxu0 0
        %1244 = vmatpush1.bf16.msra.mxu0 0
        %1245 = vmatprep.subr.bf16.mxu0 0
        %1246 = vmatpush1.bf16.msra.mxu0 0
        %1247 = vmatprep.subr.bf16.mxu0 0
        %1248 = vmatpush1.bf16.msra.mxu0 0
        %1249 = vmatprep.subr.bf16.mxu0 0
        %1250 = vmatpush1.bf16.msra.mxu0 0
        %1251 = vmatprep.subr.bf16.mxu0 0
        %1252 = vmatpush1.bf16.msra.mxu0 0
        %1253 = vmatprep.subr.bf16.mxu0 0
        %1254 = vmatpush1.bf16.msra.mxu0 0
        %1255 = vmatprep.subr.bf16.mxu0 0
        %1256 = vmatpush1.bf16.msra.mxu0 0
        %1257 = vmatprep.subr.bf16.mxu0 0
        %1258 = vmatpush1.bf16.msra.mxu0 0
        %1259 = vmatprep.subr.bf16.mxu0 0
        %1260 = vmatpush1.bf16.msra.mxu0 0
        %1261 = vmatprep.subr.bf16.mxu0 0
        %1262 = vmatpush1.bf16.msra.mxu0 0
        %1263 = vmatprep.subr.bf16.mxu0 0
        %1264 = vmatpush1.bf16.msra.mxu0 0
        %1265 = vmatprep.subr.bf16.mxu0 0
        %1266 = vmatpush1.bf16.msra.mxu0 0
        %1267 = vmatprep.mubr.bf16.mxu0 0
        %1268 = vmatmul.mubr.bf16.gmra.mrb[0].mxu0 %v1230
        %v1269 = vpop.f32.mrb[0].mxu0
        %v1270 = vadd.f32 0.0, %v1269
        %v1271 = vpop.f32.mrb[0].mxu0
        %v1272 = vpop.f32.mrb[0].mxu0
        %v1273 = vpop.f32.mrb[0].mxu0
        %1274 = vdwg.mxu0
        %v1275 = vpack.c.bf16 %v1270, %v1270
        %v1277 = vsel %vm683, %v1275, 0
        %v1280 = vsel %vm755, %v680, 0
        %1282 = vmatprep.subr.bf16.mxu0 0
        %1283 = vmatpush1.bf16.msra.mxu0 %v1280
        %1284 = vmatprep.subr.bf16.mxu0 0
        %1285 = vmatpush1.bf16.msra.mxu0 0
        %1286 = vmatprep.subr.bf16.mxu0 0
        %1287 = vmatpush1.bf16.msra.mxu0 0
        %1288 = vmatprep.subr.bf16.mxu0 0
        %1289 = vmatpush1.bf16.msra.mxu0 0
        %1290 = vmatprep.subr.bf16.mxu0 0
        %1291 = vmatpush1.bf16.msra.mxu0 0
        %1292 = vmatprep.subr.bf16.mxu0 0
        %1293 = vmatpush1.bf16.msra.mxu0 0
        %1294 = vmatprep.subr.bf16.mxu0 0
        %1295 = vmatpush1.bf16.msra.mxu0 0
        %1296 = vmatprep.subr.bf16.mxu0 0
        %1297 = vmatpush1.bf16.msra.mxu0 0
        %1298 = vmatprep.subr.bf16.mxu0 0
        %1299 = vmatpush1.bf16.msra.mxu0 0
        %1300 = vmatprep.subr.bf16.mxu0 0
        %1301 = vmatpush1.bf16.msra.mxu0 0
        %1302 = vmatprep.subr.bf16.mxu0 0
        %1303 = vmatpush1.bf16.msra.mxu0 0
        %1304 = vmatprep.subr.bf16.mxu0 0
        %1305 = vmatpush1.bf16.msra.mxu0 0
        %1306 = vmatprep.subr.bf16.mxu0 0
        %1307 = vmatpush1.bf16.msra.mxu0 0
        %1308 = vmatprep.subr.bf16.mxu0 0
        %1309 = vmatpush1.bf16.msra.mxu0 0
        %1310 = vmatprep.subr.bf16.mxu0 0
        %1311 = vmatpush1.bf16.msra.mxu0 0
        %1312 = vmatprep.subr.bf16.mxu0 0
        %1313 = vmatpush1.bf16.msra.mxu0 0
        %1314 = vmatprep.mubr.bf16.mxu0 0
        %1315 = vmatmul.mubr.bf16.gmra.mrb[0].mxu0 %v1277
        %v1316 = vpop.f32.mrb[0].mxu0
        %v1317 = vadd.f32 0.0, %v1316
        %v1318 = vpop.f32.mrb[0].mxu0
        %v1319 = vpop.f32.mrb[0].mxu0
        %v1320 = vpop.f32.mrb[0].mxu0
        %1321 = vdwg.mxu0
        %v1322 = vadd.f32 %v1163, %v1317
        %v1323 = vld [vmem:[#allocation16] sm:$0x1]
        %v1325 = vlaneseq
        %v1326 = vshrl.u32 %v1325, 7
        %v1327 = vsub.s32 0, %v1326
        %v1328 = vrot.slane %v1323, %v1327
        %v1330 = vadd.f32 %v1322, %v1328
        %v1331 = vadd.f32 %v1330, %v513
        %1332 = vst.msk [vmem:[%s511] sm:$0xff] %vm516, %v1331
        %s1333 = sand.u32 %s260, 1
        %s1334 = scalar_lea.sflag [#allocation4], %s1333
        %s1335 = sand.u32 %s260, 1
        %s1336 = smul.addr %s1335, 8
        %s1337 = scalar_lea.vmem [#allocation17], %s1336
        // Predicated region
        $region93: #{decoder_forward.7} parent=55 // pred_check
          %p1338 = pneg %p270
        $region94: #{decoder_forward.7} parent=55 // pred_check_branch
          %1340 = sbr.rel (%p1338) target = $region96
        $region95: #{decoder_forward.7} parent=55 // pred_region
          %s1342 = ssub.s32 128, 128
          %1343 = vsyncadd %s1334, %s1342
          %s1344 = sadd.s32 %s37, %s36
          %s1345 = smul.addr %s1344, 128
          %s1346 = scalar_lea.hbm %s9, %s1345
          %s1348 = sshll.u32 %s1337, 4
          %s1349 = int_to_ptr.vmem [resolvable:$true] %s1348
          %1351 = dma.vmem_to_hbm [thread:$0]  %s1349, 128, %s1346, %s1334
        $region96: #{decoder_forward.7} parent=55 // pred_fallthru
          _
      $region56: #{decoder_forward.7} parent=5 // pred_fallthru
        _
      %p1352 = scmp.le.s32.totalorder 2, %s27
      // Predicated region
      $region97: #{decoder_forward.7} parent=5 // pred_check
        %p1353 = pneg %p1352
      $region98: #{decoder_forward.7} parent=5 // pred_check_branch
        %1355 = sbr.rel (%p1353) target = $region100
      $region99: #{decoder_forward.7} parent=5 // pred_region
        %s1356 = ssub.s32 %s27, 2
        // Predicated region
        $region101: #{decoder_forward.7} parent=99 // pred_check
          %p1357 = pneg %p276
        $region102: #{decoder_forward.7} parent=99 // pred_check_branch
          %1359 = sbr.rel (%p1357) target = $region104
        $region103: #{decoder_forward.7} parent=99 // pred_region
          %s1360 = sand.u32 %s261, 1
          %s1361 = scalar_lea.sflag [#allocation4], %s1360
          %s1362 = sand.u32 %s261, 1
          %s1363 = smul.addr %s1362, 8
          %s1364 = scalar_lea.vmem [#allocation17], %s1363
          %1365 = dma.done %s1361, 128
        $region104: #{decoder_forward.7} parent=99 // pred_fallthru
          _
      $region100: #{decoder_forward.7} parent=5 // pred_fallthru
        _
    $region6: #{decoder_forward.7} parent=1 // loop_footer
      %s31 = sadd.s32 1, %s27
    $region7: #{decoder_forward.7} parent=1 // loop_footer_branch
      %26 = sbr.rel target = $region3
    $region8: #{decoder_forward.7} parent=1 // loop_exit
      _
    %1366 = vsyncpa [#allocation3], 1
    %s1367 = scalar_lea.sflag [#allocation3], 1
    %1368 = vsyncpa %s1367, 1
    %1369 = vsyncpa [#allocation6], 1
    %s1370 = scalar_lea.sflag [#allocation6], 1
    %1371 = vsyncpa %s1370, 1
    %1372 = vsyncpa [#allocation9], 1
    %1373 = vsyncpa [#allocation12], 1
    %1374 = vsyncpa [#allocation15], 1
    %1375 = vsyncpa [#allocation4], 1
    %s1376 = scalar_lea.sflag [#allocation4], 1
    %1377 = vsyncpa %s1376, 1

</llo_original>
